<compile_context>
chip_gen: v6e
topology: v6e:2x2x1
jax: 0.10.0
libtpu: 0.0.40
codegen_flags: <defaults>
</compile_context>

<pallas_src>
import functools

import jax
import jax.numpy as jnp
from jax.experimental import pallas as pl
from jax.experimental.pallas import tpu as pltpu


# ----------------------------- in-kernel helpers ----------------------------

def _layer_norm(x, gamma, beta, eps):
    # x: [rows, D] f32 ; gamma/beta: [1, D] f32 (statistics kept in f32)
    mean = jnp.mean(x, axis=-1, keepdims=True)
    var = jnp.mean(jnp.square(x - mean), axis=-1, keepdims=True)
    return (x - mean) * jax.lax.rsqrt(var + eps) * gamma + beta


# ----------------------------- Pallas kernels -------------------------------

def _embed_kernel(patches_ref, pw_ref, poscls_ref, g_ref, b_ref, o_ref, *, eps):
    # One batch element per grid step.
    # patches_ref: [1, S, C*P*P] (row 0 is a zero row standing in for the CLS
    # slot), pw_ref: [C*P*P, H], poscls_ref: [S, H] = pos_emb with class_emb
    # pre-added to row 0.  Fuses conv-as-matmul + class/pos embed + pre-LN.
    emb = jnp.dot(patches_ref[0], pw_ref[...],
                  preferred_element_type=jnp.float32)          # [S, H]
    hidden = emb + poscls_ref[...]
    o_ref[0] = _layer_norm(hidden, g_ref[...], b_ref[...], eps)


def _encoder_layer_kernel(x_ref,
                          ln1_g_ref, ln1_b_ref,
                          qkv_w_ref, qkv_b_ref,
                          qA_ref, qB_ref, vA_ref, vB_ref,
                          ow_ref, ob_ref,
                          ln2_g_ref, ln2_b_ref,
                          fc1_w_ref, fc1_b_ref,
                          fc2_w_ref, fc2_b_ref,
                          o_ref,
                          *, num_heads, head_dim, scale, lora_scaling, eps):
    """Full CLIP encoder layer for one batch element, entirely in VMEM."""
    hidden = num_heads * head_dim
    x = x_ref[0]                                               # [S, H] f32
    S = x.shape[0]

    # ---- self-attention block: LN1 + fused QKV (+LoRA) ----
    h = _layer_norm(x, ln1_g_ref[...], ln1_b_ref[...], eps)
    qkv = (jnp.dot(h, qkv_w_ref[...], preferred_element_type=jnp.float32)
           + qkv_b_ref[...])                                   # [S, 3H]
    # PEFT LoRA on q/v projections:  + scaling * (x @ A^T) @ B^T
    q_delta = jnp.dot(jnp.dot(h, qA_ref[...], preferred_element_type=jnp.float32),
                      qB_ref[...], preferred_element_type=jnp.float32)
    v_delta = jnp.dot(jnp.dot(h, vA_ref[...], preferred_element_type=jnp.float32),
                      vB_ref[...], preferred_element_type=jnp.float32)
    q = qkv[:, 0:hidden] + lora_scaling * q_delta
    k = qkv[:, hidden:2 * hidden]
    v = qkv[:, 2 * hidden:3 * hidden] + lora_scaling * v_delta

    # ---- multi-head attention, heads handled in-kernel ----
    # The output projection is folded into the per-head loop:
    #   attn @ Wo = sum_h out_h @ Wo[h*Dh:(h+1)*Dh, :]
    # which keeps every store lane-dense ([S, H]) and avoids lane concat.
    attn_proj = jnp.zeros((S, hidden), jnp.float32)
    for hh in range(num_heads):
        sl = slice(hh * head_dim, (hh + 1) * head_dim)
        qh = q[:, sl] * scale
        kh = k[:, sl]
        vh = v[:, sl]
        s = jax.lax.dot_general(qh, kh, (((1,), (1,)), ((), ())),
                                preferred_element_type=jnp.float32)   # [S, S]
        s = s - jnp.max(s, axis=-1, keepdims=True)
        p = jnp.exp(s)
        p = p * pl.reciprocal(jnp.sum(p, axis=-1, keepdims=True), approx=True)
        out_h = jnp.dot(p, vh, preferred_element_type=jnp.float32)    # [S, Dh]
        attn_proj = attn_proj + jnp.dot(out_h, ow_ref[sl, :],
                                        preferred_element_type=jnp.float32)
    # residual add fused here
    x = x + attn_proj + ob_ref[...]

    # ---- MLP block: LN2 + fc1 + quick_gelu + fc2 + residual ----
    h = _layer_norm(x, ln2_g_ref[...], ln2_b_ref[...], eps)
    h = jnp.dot(h, fc1_w_ref[...], preferred_element_type=jnp.float32) + fc1_b_ref[...]
    h = h * jax.nn.sigmoid(1.702 * h)                          # CLIP quick_gelu
    x = x + jnp.dot(h, fc2_w_ref[...], preferred_element_type=jnp.float32) + fc2_b_ref[...]

    o_ref[0] = x


def _head_kernel(x_ref, g_ref, b_ref, w_ref, o_ref, *, eps):
    # post_layernorm(CLS token) @ visual_projection^T   (projection has no bias)
    pooled = _layer_norm(x_ref[...], g_ref[...], b_ref[...], eps)   # [B, H]
    o_ref[...] = jnp.dot(pooled, w_ref[...], preferred_element_type=jnp.float32)


# ----------------------------- kernel wrappers -------------------------------

def embed(patches, prep, cfg):
    B, S, CPP = patches.shape
    H = cfg["hidden_size"]
    w2 = lambda shape: pl.BlockSpec(shape, lambda b: (0, 0))
    return pl.pallas_call(
        functools.partial(_embed_kernel, eps=cfg["layer_norm_eps"]),
        grid=(B,),
        in_specs=[
            pl.BlockSpec((1, S, CPP), lambda b: (b, 0, 0)),
            w2((CPP, H)), w2((S, H)), w2((1, H)), w2((1, H)),
        ],
        out_specs=pl.BlockSpec((1, S, H), lambda b: (b, 0, 0)),
        out_shape=jax.ShapeDtypeStruct((B, S, H), jnp.float32),
        compiler_params=pltpu.CompilerParams(dimension_semantics=("parallel",)),
    )(patches, prep["patch_w_t"], prep["pos_cls"], prep["pre_ln_g"], prep["pre_ln_b"])


def encoder_layer(x, lw, cfg):
    B, S, H = x.shape
    nH = cfg["num_heads"]
    Dh = H // nH
    I = cfg["intermediate_size"]
    R = cfg["lora_r"]
    w2 = lambda shape: pl.BlockSpec(shape, lambda b: (0, 0))
    kern = functools.partial(
        _encoder_layer_kernel,
        num_heads=nH, head_dim=Dh, scale=Dh ** -0.5,
        lora_scaling=cfg["lora_alpha"] / cfg["lora_r"],
        eps=cfg["layer_norm_eps"])
    return pl.pallas_call(
        kern,
        grid=(B,),
        in_specs=[
            pl.BlockSpec((1, S, H), lambda b: (b, 0, 0)),
            w2((1, H)), w2((1, H)),                 # ln1
            w2((H, 3 * H)), w2((1, 3 * H)),         # fused qkv
            w2((H, R)), w2((R, H)),                 # q lora A^T, B^T
            w2((H, R)), w2((R, H)),                 # v lora A^T, B^T
            w2((H, H)), w2((1, H)),                 # out proj
            w2((1, H)), w2((1, H)),                 # ln2
            w2((H, I)), w2((1, I)),                 # fc1
            w2((I, H)), w2((1, H)),                 # fc2
        ],
        out_specs=pl.BlockSpec((1, S, H), lambda b: (b, 0, 0)),
        out_shape=jax.ShapeDtypeStruct((B, S, H), jnp.float32),
        compiler_params=pltpu.CompilerParams(dimension_semantics=("parallel",)),
    )(x,
      lw["ln1_g"], lw["ln1_b"],
      lw["qkv_w_t"], lw["qkv_b"],
      lw["q_lora_A_t"], lw["q_lora_B_t"], lw["v_lora_A_t"], lw["v_lora_B_t"],
      lw["o_w_t"], lw["o_b"],
      lw["ln2_g"], lw["ln2_b"],
      lw["fc1_w_t"], lw["fc1_b"], lw["fc2_w_t"], lw["fc2_b"])


def projection_head(pooled, prep, cfg):
    B, _ = pooled.shape
    PD = cfg["projection_dim"]
    return pl.pallas_call(
        functools.partial(_head_kernel, eps=cfg["layer_norm_eps"]),
        out_shape=jax.ShapeDtypeStruct((B, PD), jnp.float32),
    )(pooled, prep["post_ln_g"], prep["post_ln_b"], prep["proj_w_t"])


# ----------------------------- model definition ------------------------------

CFG = dict(
    image_size=16, patch_size=8, num_channels=3,
    hidden_size=32, num_heads=4, intermediate_size=64,
    num_layers=2, projection_dim=16,
    lora_r=4, lora_alpha=8, layer_norm_eps=1e-5,
)


def init_params(key, cfg):
    """Parameters in PyTorch layout (nn.Linear: [out, in]; Conv2d: [out,in,kH,kW])."""
    H, C, P = cfg["hidden_size"], cfg["num_channels"], cfg["patch_size"]
    I, L, R, PD = (cfg["intermediate_size"], cfg["num_layers"],
                   cfg["lora_r"], cfg["projection_dim"])
    n_pos = (cfg["image_size"] // P) ** 2 + 1
    keys = iter(jax.random.split(key, 64))
    nrm = lambda shape: (0.02 * jax.random.normal(next(keys), shape)).astype(jnp.float32)

    params = {
        "patch_w": nrm((H, C, P, P)),              # Conv2d weight (bias=False)
        "class_emb": nrm((H,)),
        "pos_emb": nrm((n_pos, H)),
        "pre_ln_g": jnp.ones((H,), jnp.float32), "pre_ln_b": jnp.zeros((H,), jnp.float32),
        "post_ln_g": jnp.ones((H,), jnp.float32), "post_ln_b": jnp.zeros((H,), jnp.float32),
        "proj_w": nrm((PD, H)),                    # visual_projection (bias=False)
        "layers": [],
    }
    for _ in range(L):
        params["layers"].append({
            "ln1_g": jnp.ones((H,), jnp.float32), "ln1_b": jnp.zeros((H,), jnp.float32),
            "ln2_g": jnp.ones((H,), jnp.float32), "ln2_b": jnp.zeros((H,), jnp.float32),
            "q_w": nrm((H, H)), "q_b": jnp.zeros((H,), jnp.float32),
            "k_w": nrm((H, H)), "k_b": jnp.zeros((H,), jnp.float32),
            "v_w": nrm((H, H)), "v_b": jnp.zeros((H,), jnp.float32),
            "o_w": nrm((H, H)), "o_b": jnp.zeros((H,), jnp.float32),
            # LoRA adapters on q_proj / v_proj (nonzero B so the path is exercised)
            "q_lora_A": nrm((R, H)), "q_lora_B": nrm((H, R)),
            "v_lora_A": nrm((R, H)), "v_lora_B": nrm((H, R)),
            "fc1_w": nrm((I, H)), "fc1_b": jnp.zeros((I,), jnp.float32),
            "fc2_w": nrm((H, I)), "fc2_b": jnp.zeros((H,), jnp.float32),
        })
    return params


def prepare_params(params, cfg):
    """One-time relayout into kernel-friendly form: weights pre-transposed to
    [K, N], q/k/v concatenated, biases as [1, N], class+pos embeddings folded."""
    H, C, P = cfg["hidden_size"], cfg["num_channels"], cfg["patch_size"]
    prep = {
        "patch_w_t": params["patch_w"].reshape(H, C * P * P).T,       # [C*P*P, H]
        # pos_emb with the class embedding folded into row 0 (row 0 of the
        # padded patch slab contributes zero from the matmul).
        "pos_cls": params["pos_emb"].at[0].add(params["class_emb"]),  # [S, H]
        "pre_ln_g": params["pre_ln_g"].reshape(1, H),
        "pre_ln_b": params["pre_ln_b"].reshape(1, H),
        "post_ln_g": params["post_ln_g"].reshape(1, H),
        "post_ln_b": params["post_ln_b"].reshape(1, H),
        "proj_w_t": params["proj_w"].T,                               # [H, PD]
        "layers": [],
    }
    for lp in params["layers"]:
        I = lp["fc1_w"].shape[0]
        prep["layers"].append({
            "ln1_g": lp["ln1_g"].reshape(1, H), "ln1_b": lp["ln1_b"].reshape(1, H),
            "ln2_g": lp["ln2_g"].reshape(1, H), "ln2_b": lp["ln2_b"].reshape(1, H),
            "qkv_w_t": jnp.concatenate([lp["q_w"], lp["k_w"], lp["v_w"]], axis=0).T,
            "qkv_b": jnp.concatenate([lp["q_b"], lp["k_b"], lp["v_b"]]).reshape(1, 3 * H),
            "q_lora_A_t": lp["q_lora_A"].T, "q_lora_B_t": lp["q_lora_B"].T,
            "v_lora_A_t": lp["v_lora_A"].T, "v_lora_B_t": lp["v_lora_B"].T,
            "o_w_t": lp["o_w"].T, "o_b": lp["o_b"].reshape(1, H),
            "fc1_w_t": lp["fc1_w"].T, "fc1_b": lp["fc1_b"].reshape(1, I),
            "fc2_w_t": lp["fc2_w"].T, "fc2_b": lp["fc2_b"].reshape(1, H),
        })
    return prep


def forward(prep, pixel_values, cfg):
    B, C, Himg, Wimg = pixel_values.shape
    P = cfg["patch_size"]
    Hp, Wp = Himg // P, Wimg // P
    Np = Hp * Wp

    # Conv2d(kernel=stride=P, bias=False) as an unfold; the matmul itself,
    # class/positional embeddings and pre_layrnorm live in the embed kernel.
    patches = pixel_values.reshape(B, C, Hp, P, Wp, P)
    patches = patches.transpose(0, 2, 4, 1, 3, 5).reshape(B, Np, C * P * P)
    # Zero row 0 stands in for the CLS slot (its embedding is folded into
    # pos_cls), so the kernel produces the full [S, H] sequence in one matmul.
    patches = jnp.concatenate(
        [jnp.zeros((B, 1, C * P * P), patches.dtype), patches], axis=1)

    x = embed(patches, prep, cfg)                      # [B, S, H], pre-LN applied
    for lw in prep["layers"]:
        x = encoder_layer(x, lw, cfg)                  # one fused kernel per layer

    pooled = x[:, 0, :]                                # CLS token
    return projection_head(pooled, prep, cfg)          # post-LN + visual projection


# --------------------------------- main --------------------------------------

if __name__ == "__main__":
    key = jax.random.PRNGKey(0)
    pkey, xkey = jax.random.split(key)
    params = init_params(pkey, CFG)
    prep = prepare_params(params, CFG)

    # pixel_values in NCHW, like the PyTorch module's processor output
    x = jax.random.normal(
        xkey, (2, CFG["num_channels"], CFG["image_size"], CFG["image_size"]),
        dtype=jnp.float32)

    out = jax.jit(lambda p, xx: forward(p, xx, CFG))(prep, x)
    out = jax.block_until_ready(out)
    assert out.shape == (2, CFG["projection_dim"]) and out.dtype == jnp.float32
    assert bool(jnp.all(jnp.isfinite(out)))
    print("KERNEL_OK")
</pallas_src>

<mosaic_0001>
module attributes {stable_mosaic.version = 11 : i64} {
  func.func @_embed_kernel(%arg0: i32, %arg1: memref<1x5x192xf32, #tpu.memory_space<vmem>>, %arg2: memref<192x32xf32, #tpu.memory_space<vmem>>, %arg3: memref<5x32xf32, #tpu.memory_space<vmem>>, %arg4: memref<1x32xf32, #tpu.memory_space<vmem>>, %arg5: memref<1x32xf32, #tpu.memory_space<vmem>>, %arg6: memref<1x5x32xf32, #tpu.memory_space<vmem>>) attributes {dimension_semantics = [#tpu.dimension_semantics<parallel>], iteration_bounds = array<i64: 2>, scalar_prefetch = 0 : i64, scratch_operands = 0 : i64, tpu.core_type = #tpu.core_type<tc>, window_params = [{transform_indices = @transform_0, window_bounds = array<i64: 1, 5, 192>}, {pipeline_mode = #tpu.pipeline_mode<synchronous>, transform_indices = @transform_1, window_bounds = array<i64: 192, 32>}, {pipeline_mode = #tpu.pipeline_mode<synchronous>, transform_indices = @transform_2, window_bounds = array<i64: 5, 32>}, {pipeline_mode = #tpu.pipeline_mode<synchronous>, transform_indices = @transform_3, window_bounds = array<i64: 1, 32>}, {pipeline_mode = #tpu.pipeline_mode<synchronous>, transform_indices = @transform_4, window_bounds = array<i64: 1, 32>}, {transform_indices = @transform_5, window_bounds = array<i64: 1, 5, 32>}]} {
    %c0 = arith.constant 0 : index
    %c0_0 = arith.constant 0 : index
    %c0_1 = arith.constant 0 : index
    %0 = vector.load %arg1[%c0, %c0_0, %c0_1] : memref<1x5x192xf32, #tpu.memory_space<vmem>>, vector<1x5x192xf32>
    %1 = vector.shape_cast %0 : vector<1x5x192xf32> to vector<5x192xf32>
    %c0_2 = arith.constant 0 : index
    %c0_3 = arith.constant 0 : index
    %2 = vector.load %arg2[%c0_2, %c0_3] : memref<192x32xf32, #tpu.memory_space<vmem>>, vector<192x32xf32>
    %cst = arith.constant dense<0.000000e+00> : vector<5x32xf32>
    %3 = tpu.matmul %1, %2, %cst {dimension_numbers = #tpu.dot_dimension_numbers<[1], [0], [0], [1], [0, 0, 1, 1], [], []>} : vector<5x192xf32>, vector<192x32xf32>, vector<5x32xf32> -> vector<5x32xf32>
    %c0_4 = arith.constant 0 : index
    %c0_5 = arith.constant 0 : index
    %4 = vector.load %arg3[%c0_4, %c0_5] : memref<5x32xf32, #tpu.memory_space<vmem>>, vector<5x32xf32>
    %5 = arith.addf %3, %4 : vector<5x32xf32>
    %c0_6 = arith.constant 0 : index
    %c0_7 = arith.constant 0 : index
    %6 = vector.load %arg4[%c0_6, %c0_7] : memref<1x32xf32, #tpu.memory_space<vmem>>, vector<1x32xf32>
    %c0_8 = arith.constant 0 : index
    %c0_9 = arith.constant 0 : index
    %7 = vector.load %arg5[%c0_8, %c0_9] : memref<1x32xf32, #tpu.memory_space<vmem>>, vector<1x32xf32>
    %cst_10 = arith.constant dense<0.000000e+00> : vector<5xf32>
    %8 = vector.multi_reduction <add>, %5, %cst_10 [1] : vector<5x32xf32> to vector<5xf32>
    %9 = vector.shape_cast %8 : vector<5xf32> to vector<5x1xf32>
    %cst_11 = arith.constant 3.200000e+01 : f32
    %10 = vector.broadcast %cst_11 : f32 to vector<5x1xf32>
    %11 = arith.divf %9, %10 : vector<5x1xf32>
    %12 = vector.broadcast %11 : vector<5x1xf32> to vector<5x32xf32>
    %13 = arith.subf %5, %12 : vector<5x32xf32>
    %14 = arith.mulf %13, %13 : vector<5x32xf32>
    %cst_12 = arith.constant dense<0.000000e+00> : vector<5xf32>
    %15 = vector.multi_reduction <add>, %14, %cst_12 [1] : vector<5x32xf32> to vector<5xf32>
    %16 = vector.shape_cast %15 : vector<5xf32> to vector<5x1xf32>
    %cst_13 = arith.constant 3.200000e+01 : f32
    %17 = vector.broadcast %cst_13 : f32 to vector<5x1xf32>
    %18 = arith.divf %16, %17 : vector<5x1xf32>
    %19 = vector.broadcast %11 : vector<5x1xf32> to vector<5x32xf32>
    %20 = arith.subf %5, %19 : vector<5x32xf32>
    %cst_14 = arith.constant 9.99999974E-6 : f32
    %21 = vector.broadcast %cst_14 : f32 to vector<5x1xf32>
    %22 = arith.addf %18, %21 : vector<5x1xf32>
    %23 = math.rsqrt %22 : vector<5x1xf32>
    %24 = vector.broadcast %23 : vector<5x1xf32> to vector<5x32xf32>
    %25 = arith.mulf %20, %24 : vector<5x32xf32>
    %26 = vector.broadcast %6 : vector<1x32xf32> to vector<5x32xf32>
    %27 = arith.mulf %25, %26 : vector<5x32xf32>
    %28 = vector.broadcast %7 : vector<1x32xf32> to vector<5x32xf32>
    %29 = arith.addf %27, %28 : vector<5x32xf32>
    %c0_15 = arith.constant 0 : index
    %c0_16 = arith.constant 0 : index
    %c0_17 = arith.constant 0 : index
    %30 = vector.load %arg6[%c0_15, %c0_16, %c0_17] : memref<1x5x32xf32, #tpu.memory_space<vmem>>, vector<1x5x32xf32>
    %31 = vector.shape_cast %30 : vector<1x5x32xf32> to vector<5x32xf32>
    %32 = vector.shape_cast %29 : vector<5x32xf32> to vector<1x5x32xf32>
    tpu.vector_store %arg6[%c0_15, %c0_16, %c0_17], %32 {strides = array<i32>} : memref<1x5x32xf32, #tpu.memory_space<vmem>>, vector<1x5x32xf32>,
    return
  }
  func.func @transform_0(%arg0: i32) -> (i32, i32, i32) {
    %c0_i32 = arith.constant 0 : i32
    %c0_i32_0 = arith.constant 0 : i32
    %c0_i32_1 = arith.constant 0 : i32
    return %arg0, %c0_i32, %c0_i32_0 : i32, i32, i32
  }
  func.func @transform_1(%arg0: i32) -> (i32, i32) {
    %c0_i32 = arith.constant 0 : i32
    %c0_i32_0 = arith.constant 0 : i32
    %c0_i32_1 = arith.constant 0 : i32
    return %c0_i32, %c0_i32_0 : i32, i32
  }
  func.func @transform_2(%arg0: i32) -> (i32, i32) {
    %c0_i32 = arith.constant 0 : i32
    %c0_i32_0 = arith.constant 0 : i32
    %c0_i32_1 = arith.constant 0 : i32
    return %c0_i32, %c0_i32_0 : i32, i32
  }
  func.func @transform_3(%arg0: i32) -> (i32, i32) {
    %c0_i32 = arith.constant 0 : i32
    %c0_i32_0 = arith.constant 0 : i32
    %c0_i32_1 = arith.constant 0 : i32
    return %c0_i32, %c0_i32_0 : i32, i32
  }
  func.func @transform_4(%arg0: i32) -> (i32, i32) {
    %c0_i32 = arith.constant 0 : i32
    %c0_i32_0 = arith.constant 0 : i32
    %c0_i32_1 = arith.constant 0 : i32
    return %c0_i32, %c0_i32_0 : i32, i32
  }
  func.func @transform_5(%arg0: i32) -> (i32, i32, i32) {
    %c0_i32 = arith.constant 0 : i32
    %c0_i32_0 = arith.constant 0 : i32
    %c0_i32_1 = arith.constant 0 : i32
    return %arg0, %c0_i32, %c0_i32_0 : i32, i32, i32
  }
}

module attributes {stable_mosaic.version = 11 : i64} {
  func.func @_head_kernel(%arg0: memref<2x32xf32, #tpu.memory_space<vmem>>, %arg1: memref<1x32xf32, #tpu.memory_space<vmem>>, %arg2: memref<1x32xf32, #tpu.memory_space<vmem>>, %arg3: memref<32x16xf32, #tpu.memory_space<vmem>>, %arg4: memref<2x16xf32, #tpu.memory_space<vmem>>) attributes {dimension_semantics = [], scalar_prefetch = 0 : i64, scratch_operands = 0 : i64, tpu.core_type = #tpu.core_type<tc>} {
    %c0 = arith.constant 0 : index
    %c0_0 = arith.constant 0 : index
    %0 = vector.load %arg0[%c0, %c0_0] : memref<2x32xf32, #tpu.memory_space<vmem>>, vector<2x32xf32>
    %c0_1 = arith.constant 0 : index
    %c0_2 = arith.constant 0 : index
    %1 = vector.load %arg1[%c0_1, %c0_2] : memref<1x32xf32, #tpu.memory_space<vmem>>, vector<1x32xf32>
    %c0_3 = arith.constant 0 : index
    %c0_4 = arith.constant 0 : index
    %2 = vector.load %arg2[%c0_3, %c0_4] : memref<1x32xf32, #tpu.memory_space<vmem>>, vector<1x32xf32>
    %cst = arith.constant dense<0.000000e+00> : vector<2xf32>
    %3 = vector.multi_reduction <add>, %0, %cst [1] : vector<2x32xf32> to vector<2xf32>
    %4 = vector.shape_cast %3 : vector<2xf32> to vector<2x1xf32>
    %cst_5 = arith.constant 3.200000e+01 : f32
    %5 = vector.broadcast %cst_5 : f32 to vector<2x1xf32>
    %6 = arith.divf %4, %5 : vector<2x1xf32>
    %7 = vector.broadcast %6 : vector<2x1xf32> to vector<2x32xf32>
    %8 = arith.subf %0, %7 : vector<2x32xf32>
    %9 = arith.mulf %8, %8 : vector<2x32xf32>
    %cst_6 = arith.constant dense<0.000000e+00> : vector<2xf32>
    %10 = vector.multi_reduction <add>, %9, %cst_6 [1] : vector<2x32xf32> to vector<2xf32>
    %11 = vector.shape_cast %10 : vector<2xf32> to vector<2x1xf32>
    %cst_7 = arith.constant 3.200000e+01 : f32
    %12 = vector.broadcast %cst_7 : f32 to vector<2x1xf32>
    %13 = arith.divf %11, %12 : vector<2x1xf32>
    %14 = vector.broadcast %6 : vector<2x1xf32> to vector<2x32xf32>
    %15 = arith.subf %0, %14 : vector<2x32xf32>
    %cst_8 = arith.constant 9.99999974E-6 : f32
    %16 = vector.broadcast %cst_8 : f32 to vector<2x1xf32>
    %17 = arith.addf %13, %16 : vector<2x1xf32>
    %18 = math.rsqrt %17 : vector<2x1xf32>
    %19 = vector.broadcast %18 : vector<2x1xf32> to vector<2x32xf32>
    %20 = arith.mulf %15, %19 : vector<2x32xf32>
    %21 = vector.broadcast %1 : vector<1x32xf32> to vector<2x32xf32>
    %22 = arith.mulf %20, %21 : vector<2x32xf32>
    %23 = vector.broadcast %2 : vector<1x32xf32> to vector<2x32xf32>
    %24 = arith.addf %22, %23 : vector<2x32xf32>
    %c0_9 = arith.constant 0 : index
    %c0_10 = arith.constant 0 : index
    %25 = vector.load %arg3[%c0_9, %c0_10] : memref<32x16xf32, #tpu.memory_space<vmem>>, vector<32x16xf32>
    %cst_11 = arith.constant dense<0.000000e+00> : vector<2x16xf32>
    %26 = tpu.matmul %24, %25, %cst_11 {dimension_numbers = #tpu.dot_dimension_numbers<[1], [0], [0], [1], [0, 0, 1, 1], [], []>} : vector<2x32xf32>, vector<32x16xf32>, vector<2x16xf32> -> vector<2x16xf32>
    %c0_12 = arith.constant 0 : index
    %c0_13 = arith.constant 0 : index
    %27 = vector.load %arg4[%c0_12, %c0_13] : memref<2x16xf32, #tpu.memory_space<vmem>>, vector<2x16xf32>
    tpu.vector_store %arg4[%c0_12, %c0_13], %26 {strides = array<i32>} : memref<2x16xf32, #tpu.memory_space<vmem>>, vector<2x16xf32>,
    return
  }
}

module attributes {stable_mosaic.version = 11 : i64} {
  func.func @_encoder_layer_kernel(%arg0: i32, %arg1: memref<1x5x32xf32, #tpu.memory_space<vmem>>, %arg2: memref<1x32xf32, #tpu.memory_space<vmem>>, %arg3: memref<1x32xf32, #tpu.memory_space<vmem>>, %arg4: memref<32x96xf32, #tpu.memory_space<vmem>>, %arg5: memref<1x96xf32, #tpu.memory_space<vmem>>, %arg6: memref<32x4xf32, #tpu.memory_space<vmem>>, %arg7: memref<4x32xf32, #tpu.memory_space<vmem>>, %arg8: memref<32x4xf32, #tpu.memory_space<vmem>>, %arg9: memref<4x32xf32, #tpu.memory_space<vmem>>, %arg10: memref<32x32xf32, #tpu.memory_space<vmem>>, %arg11: memref<1x32xf32, #tpu.memory_space<vmem>>, %arg12: memref<1x32xf32, #tpu.memory_space<vmem>>, %arg13: memref<1x32xf32, #tpu.memory_space<vmem>>, %arg14: memref<32x64xf32, #tpu.memory_space<vmem>>, %arg15: memref<1x64xf32, #tpu.memory_space<vmem>>, %arg16: memref<64x32xf32, #tpu.memory_space<vmem>>, %arg17: memref<1x32xf32, #tpu.memory_space<vmem>>, %arg18: memref<1x5x32xf32, #tpu.memory_space<vmem>>) attributes {dimension_semantics = [#tpu.dimension_semantics<parallel>], iteration_bounds = array<i64: 2>, scalar_prefetch = 0 : i64, scratch_operands = 0 : i64, tpu.core_type = #tpu.core_type<tc>, window_params = [{transform_indices = @transform_0, window_bounds = array<i64: 1, 5, 32>}, {pipeline_mode = #tpu.pipeline_mode<synchronous>, transform_indices = @transform_1, window_bounds = array<i64: 1, 32>}, {pipeline_mode = #tpu.pipeline_mode<synchronous>, transform_indices = @transform_2, window_bounds = array<i64: 1, 32>}, {pipeline_mode = #tpu.pipeline_mode<synchronous>, transform_indices = @transform_3, window_bounds = array<i64: 32, 96>}, {pipeline_mode = #tpu.pipeline_mode<synchronous>, transform_indices = @transform_4, window_bounds = array<i64: 1, 96>}, {pipeline_mode = #tpu.pipeline_mode<synchronous>, transform_indices = @transform_5, window_bounds = array<i64: 32, 4>}, {pipeline_mode = #tpu.pipeline_mode<synchronous>, transform_indices = @transform_6, window_bounds = array<i64: 4, 32>}, {pipeline_mode = #tpu.pipeline_mode<synchronous>, transform_indices = @transform_7, window_bounds = array<i64: 32, 4>}, {pipeline_mode = #tpu.pipeline_mode<synchronous>, transform_indices = @transform_8, window_bounds = array<i64: 4, 32>}, {pipeline_mode = #tpu.pipeline_mode<synchronous>, transform_indices = @transform_9, window_bounds = array<i64: 32, 32>}, {pipeline_mode = #tpu.pipeline_mode<synchronous>, transform_indices = @transform_10, window_bounds = array<i64: 1, 32>}, {pipeline_mode = #tpu.pipeline_mode<synchronous>, transform_indices = @transform_11, window_bounds = array<i64: 1, 32>}, {pipeline_mode = #tpu.pipeline_mode<synchronous>, transform_indices = @transform_12, window_bounds = array<i64: 1, 32>}, {pipeline_mode = #tpu.pipeline_mode<synchronous>, transform_indices = @transform_13, window_bounds = array<i64: 32, 64>}, {pipeline_mode = #tpu.pipeline_mode<synchronous>, transform_indices = @transform_14, window_bounds = array<i64: 1, 64>}, {pipeline_mode = #tpu.pipeline_mode<synchronous>, transform_indices = @transform_15, window_bounds = array<i64: 64, 32>}, {pipeline_mode = #tpu.pipeline_mode<synchronous>, transform_indices = @transform_16, window_bounds = array<i64: 1, 32>}, {transform_indices = @transform_17, window_bounds = array<i64: 1, 5, 32>}]} {
    %c0 = arith.constant 0 : index
    %c0_0 = arith.constant 0 : index
    %c0_1 = arith.constant 0 : index
    %0 = vector.load %arg1[%c0, %c0_0, %c0_1] : memref<1x5x32xf32, #tpu.memory_space<vmem>>, vector<1x5x32xf32>
    %1 = vector.shape_cast %0 : vector<1x5x32xf32> to vector<5x32xf32>
    %c0_2 = arith.constant 0 : index
    %c0_3 = arith.constant 0 : index
    %2 = vector.load %arg2[%c0_2, %c0_3] : memref<1x32xf32, #tpu.memory_space<vmem>>, vector<1x32xf32>
    %c0_4 = arith.constant 0 : index
    %c0_5 = arith.constant 0 : index
    %3 = vector.load %arg3[%c0_4, %c0_5] : memref<1x32xf32, #tpu.memory_space<vmem>>, vector<1x32xf32>
    %cst = arith.constant dense<0.000000e+00> : vector<5xf32>
    %4 = vector.multi_reduction <add>, %1, %cst [1] : vector<5x32xf32> to vector<5xf32>
    %5 = vector.shape_cast %4 : vector<5xf32> to vector<5x1xf32>
    %cst_6 = arith.constant 3.200000e+01 : f32
    %6 = vector.broadcast %cst_6 : f32 to vector<5x1xf32>
    %7 = arith.divf %5, %6 : vector<5x1xf32>
    %8 = vector.broadcast %7 : vector<5x1xf32> to vector<5x32xf32>
    %9 = arith.subf %1, %8 : vector<5x32xf32>
    %10 = arith.mulf %9, %9 : vector<5x32xf32>
    %cst_7 = arith.constant dense<0.000000e+00> : vector<5xf32>
    %11 = vector.multi_reduction <add>, %10, %cst_7 [1] : vector<5x32xf32> to vector<5xf32>
    %12 = vector.shape_cast %11 : vector<5xf32> to vector<5x1xf32>
    %cst_8 = arith.constant 3.200000e+01 : f32
    %13 = vector.broadcast %cst_8 : f32 to vector<5x1xf32>
    %14 = arith.divf %12, %13 : vector<5x1xf32>
    %15 = vector.broadcast %7 : vector<5x1xf32> to vector<5x32xf32>
    %16 = arith.subf %1, %15 : vector<5x32xf32>
    %cst_9 = arith.constant 9.99999974E-6 : f32
    %17 = vector.broadcast %cst_9 : f32 to vector<5x1xf32>
    %18 = arith.addf %14, %17 : vector<5x1xf32>
    %19 = math.rsqrt %18 : vector<5x1xf32>
    %20 = vector.broadcast %19 : vector<5x1xf32> to vector<5x32xf32>
    %21 = arith.mulf %16, %20 : vector<5x32xf32>
    %22 = vector.broadcast %2 : vector<1x32xf32> to vector<5x32xf32>
    %23 = arith.mulf %21, %22 : vector<5x32xf32>
    %24 = vector.broadcast %3 : vector<1x32xf32> to vector<5x32xf32>
    %25 = arith.addf %23, %24 : vector<5x32xf32>
    %c0_10 = arith.constant 0 : index
    %c0_11 = arith.constant 0 : index
    %26 = vector.load %arg4[%c0_10, %c0_11] : memref<32x96xf32, #tpu.memory_space<vmem>>, vector<32x96xf32>
    %cst_12 = arith.constant dense<0.000000e+00> : vector<5x96xf32>
    %27 = tpu.matmul %25, %26, %cst_12 {dimension_numbers = #tpu.dot_dimension_numbers<[1], [0], [0], [1], [0, 0, 1, 1], [], []>} : vector<5x32xf32>, vector<32x96xf32>, vector<5x96xf32> -> vector<5x96xf32>
    %c0_13 = arith.constant 0 : index
    %c0_14 = arith.constant 0 : index
    %28 = vector.load %arg5[%c0_13, %c0_14] : memref<1x96xf32, #tpu.memory_space<vmem>>, vector<1x96xf32>
    %29 = vector.broadcast %28 : vector<1x96xf32> to vector<5x96xf32>
    %30 = arith.addf %27, %29 : vector<5x96xf32>
    %c0_15 = arith.constant 0 : index
    %c0_16 = arith.constant 0 : index
    %31 = vector.load %arg6[%c0_15, %c0_16] : memref<32x4xf32, #tpu.memory_space<vmem>>, vector<32x4xf32>
    %cst_17 = arith.constant dense<0.000000e+00> : vector<5x4xf32>
    %32 = tpu.matmul %25, %31, %cst_17 {dimension_numbers = #tpu.dot_dimension_numbers<[1], [0], [0], [1], [0, 0, 1, 1], [], []>} : vector<5x32xf32>, vector<32x4xf32>, vector<5x4xf32> -> vector<5x4xf32>
    %c0_18 = arith.constant 0 : index
    %c0_19 = arith.constant 0 : index
    %33 = vector.load %arg7[%c0_18, %c0_19] : memref<4x32xf32, #tpu.memory_space<vmem>>, vector<4x32xf32>
    %cst_20 = arith.constant dense<0.000000e+00> : vector<5x32xf32>
    %34 = tpu.matmul %32, %33, %cst_20 {dimension_numbers = #tpu.dot_dimension_numbers<[1], [0], [0], [1], [0, 0, 1, 1], [], []>} : vector<5x4xf32>, vector<4x32xf32>, vector<5x32xf32> -> vector<5x32xf32>
    %c0_21 = arith.constant 0 : index
    %c0_22 = arith.constant 0 : index
    %35 = vector.load %arg8[%c0_21, %c0_22] : memref<32x4xf32, #tpu.memory_space<vmem>>, vector<32x4xf32>
    %cst_23 = arith.constant dense<0.000000e+00> : vector<5x4xf32>
    %36 = tpu.matmul %25, %35, %cst_23 {dimension_numbers = #tpu.dot_dimension_numbers<[1], [0], [0], [1], [0, 0, 1, 1], [], []>} : vector<5x32xf32>, vector<32x4xf32>, vector<5x4xf32> -> vector<5x4xf32>
    %c0_24 = arith.constant 0 : index
    %c0_25 = arith.constant 0 : index
    %37 = vector.load %arg9[%c0_24, %c0_25] : memref<4x32xf32, #tpu.memory_space<vmem>>, vector<4x32xf32>
    %cst_26 = arith.constant dense<0.000000e+00> : vector<5x32xf32>
    %38 = tpu.matmul %36, %37, %cst_26 {dimension_numbers = #tpu.dot_dimension_numbers<[1], [0], [0], [1], [0, 0, 1, 1], [], []>} : vector<5x4xf32>, vector<4x32xf32>, vector<5x32xf32> -> vector<5x32xf32>
    %39 = vector.extract_strided_slice %30 {offsets = [0, 0], sizes = [5, 32], strides = [1, 1]} : vector<5x96xf32> to vector<5x32xf32>
    %cst_27 = arith.constant 2.000000e+00 : f32
    %40 = vector.broadcast %cst_27 : f32 to vector<5x32xf32>
    %41 = arith.mulf %40, %34 : vector<5x32xf32>
    %42 = arith.addf %39, %41 : vector<5x32xf32>
    %43 = vector.extract_strided_slice %30 {offsets = [0, 32], sizes = [5, 32], strides = [1, 1]} : vector<5x96xf32> to vector<5x32xf32>
    %44 = vector.extract_strided_slice %30 {offsets = [0, 64], sizes = [5, 32], strides = [1, 1]} : vector<5x96xf32> to vector<5x32xf32>
    %cst_28 = arith.constant 2.000000e+00 : f32
    %45 = vector.broadcast %cst_28 : f32 to vector<5x32xf32>
    %46 = arith.mulf %45, %38 : vector<5x32xf32>
    %47 = arith.addf %44, %46 : vector<5x32xf32>
    %cst_29 = arith.constant 0.000000e+00 : f32
    %48 = vector.broadcast %cst_29 : f32 to vector<5x32xf32>
    %49 = vector.extract_strided_slice %42 {offsets = [0, 0], sizes = [5, 8], strides = [1, 1]} : vector<5x32xf32> to vector<5x8xf32>
    %cst_30 = arith.constant 0.353553385 : f32
    %50 = vector.broadcast %cst_30 : f32 to vector<5x8xf32>
    %51 = arith.mulf %49, %50 : vector<5x8xf32>
    %52 = vector.extract_strided_slice %43 {offsets = [0, 0], sizes = [5, 8], strides = [1, 1]} : vector<5x32xf32> to vector<5x8xf32>
    %53 = vector.extract_strided_slice %47 {offsets = [0, 0], sizes = [5, 8], strides = [1, 1]} : vector<5x32xf32> to vector<5x8xf32>
    %cst_31 = arith.constant dense<0.000000e+00> : vector<5x5xf32>
    %54 = tpu.matmul %51, %52, %cst_31 {dimension_numbers = #tpu.dot_dimension_numbers<[1], [1], [0], [0], [0, 0, 1, 0], [], []>} : vector<5x8xf32>, vector<5x8xf32>, vector<5x5xf32> -> vector<5x5xf32>
    %cst_32 = arith.constant dense<0xFF800000> : vector<5xf32>
    %55 = vector.multi_reduction <maximumf>, %54, %cst_32 [1] : vector<5x5xf32> to vector<5xf32>
    %56 = vector.shape_cast %55 : vector<5xf32> to vector<5x1xf32>
    %57 = vector.broadcast %56 : vector<5x1xf32> to vector<5x5xf32>
    %58 = arith.subf %54, %57 : vector<5x5xf32>
    %59 = math.exp %58 : vector<5x5xf32>
    %cst_33 = arith.constant dense<0.000000e+00> : vector<5xf32>
    %60 = vector.multi_reduction <add>, %59, %cst_33 [1] : vector<5x5xf32> to vector<5xf32>
    %61 = vector.shape_cast %60 : vector<5xf32> to vector<5x1xf32>
    %62 = tpu.reciprocal %61 {approx = true} : vector<5x1xf32> -> vector<5x1xf32>
    %63 = vector.broadcast %62 : vector<5x1xf32> to vector<5x5xf32>
    %64 = arith.mulf %59, %63 : vector<5x5xf32>
    %cst_34 = arith.constant dense<0.000000e+00> : vector<5x8xf32>
    %65 = tpu.matmul %64, %53, %cst_34 {dimension_numbers = #tpu.dot_dimension_numbers<[1], [0], [0], [1], [0, 0, 1, 1], [], []>} : vector<5x5xf32>, vector<5x8xf32>, vector<5x8xf32> -> vector<5x8xf32>
    %c0_35 = arith.constant 0 : index
    %c0_36 = arith.constant 0 : index
    %66 = vector.load %arg10[%c0_35, %c0_36] : memref<32x32xf32, #tpu.memory_space<vmem>>, vector<8x32xf32>
    %cst_37 = arith.constant dense<0.000000e+00> : vector<5x32xf32>
    %67 = tpu.matmul %65, %66, %cst_37 {dimension_numbers = #tpu.dot_dimension_numbers<[1], [0], [0], [1], [0, 0, 1, 1], [], []>} : vector<5x8xf32>, vector<8x32xf32>, vector<5x32xf32> -> vector<5x32xf32>
    %68 = arith.addf %48, %67 : vector<5x32xf32>
    %69 = vector.extract_strided_slice %42 {offsets = [0, 8], sizes = [5, 8], strides = [1, 1]} : vector<5x32xf32> to vector<5x8xf32>
    %cst_38 = arith.constant 0.353553385 : f32
    %70 = vector.broadcast %cst_38 : f32 to vector<5x8xf32>
    %71 = arith.mulf %69, %70 : vector<5x8xf32>
    %72 = vector.extract_strided_slice %43 {offsets = [0, 8], sizes = [5, 8], strides = [1, 1]} : vector<5x32xf32> to vector<5x8xf32>
    %73 = vector.extract_strided_slice %47 {offsets = [0, 8], sizes = [5, 8], strides = [1, 1]} : vector<5x32xf32> to vector<5x8xf32>
    %cst_39 = arith.constant dense<0.000000e+00> : vector<5x5xf32>
    %74 = tpu.matmul %71, %72, %cst_39 {dimension_numbers = #tpu.dot_dimension_numbers<[1], [1], [0], [0], [0, 0, 1, 0], [], []>} : vector<5x8xf32>, vector<5x8xf32>, vector<5x5xf32> -> vector<5x5xf32>
    %cst_40 = arith.constant dense<0xFF800000> : vector<5xf32>
    %75 = vector.multi_reduction <maximumf>, %74, %cst_40 [1] : vector<5x5xf32> to vector<5xf32>
    %76 = vector.shape_cast %75 : vector<5xf32> to vector<5x1xf32>
    %77 = vector.broadcast %76 : vector<5x1xf32> to vector<5x5xf32>
    %78 = arith.subf %74, %77 : vector<5x5xf32>
    %79 = math.exp %78 : vector<5x5xf32>
    %cst_41 = arith.constant dense<0.000000e+00> : vector<5xf32>
    %80 = vector.multi_reduction <add>, %79, %cst_41 [1] : vector<5x5xf32> to vector<5xf32>
    %81 = vector.shape_cast %80 : vector<5xf32> to vector<5x1xf32>
    %82 = tpu.reciprocal %81 {approx = true} : vector<5x1xf32> -> vector<5x1xf32>
    %83 = vector.broadcast %82 : vector<5x1xf32> to vector<5x5xf32>
    %84 = arith.mulf %79, %83 : vector<5x5xf32>
    %cst_42 = arith.constant dense<0.000000e+00> : vector<5x8xf32>
    %85 = tpu.matmul %84, %73, %cst_42 {dimension_numbers = #tpu.dot_dimension_numbers<[1], [0], [0], [1], [0, 0, 1, 1], [], []>} : vector<5x5xf32>, vector<5x8xf32>, vector<5x8xf32> -> vector<5x8xf32>
    %c8 = arith.constant 8 : index
    %c0_43 = arith.constant 0 : index
    %86 = vector.load %arg10[%c8, %c0_43] : memref<32x32xf32, #tpu.memory_space<vmem>>, vector<8x32xf32>
    %cst_44 = arith.constant dense<0.000000e+00> : vector<5x32xf32>
    %87 = tpu.matmul %85, %86, %cst_44 {dimension_numbers = #tpu.dot_dimension_numbers<[1], [0], [0], [1], [0, 0, 1, 1], [], []>} : vector<5x8xf32>, vector<8x32xf32>, vector<5x32xf32> -> vector<5x32xf32>
    %88 = arith.addf %68, %87 : vector<5x32xf32>
    %89 = vector.extract_strided_slice %42 {offsets = [0, 16], sizes = [5, 8], strides = [1, 1]} : vector<5x32xf32> to vector<5x8xf32>
    %cst_45 = arith.constant 0.353553385 : f32
    %90 = vector.broadcast %cst_45 : f32 to vector<5x8xf32>
    %91 = arith.mulf %89, %90 : vector<5x8xf32>
    %92 = vector.extract_strided_slice %43 {offsets = [0, 16], sizes = [5, 8], strides = [1, 1]} : vector<5x32xf32> to vector<5x8xf32>
    %93 = vector.extract_strided_slice %47 {offsets = [0, 16], sizes = [5, 8], strides = [1, 1]} : vector<5x32xf32> to vector<5x8xf32>
    %cst_46 = arith.constant dense<0.000000e+00> : vector<5x5xf32>
    %94 = tpu.matmul %91, %92, %cst_46 {dimension_numbers = #tpu.dot_dimension_numbers<[1], [1], [0], [0], [0, 0, 1, 0], [], []>} : vector<5x8xf32>, vector<5x8xf32>, vector<5x5xf32> -> vector<5x5xf32>
    %cst_47 = arith.constant dense<0xFF800000> : vector<5xf32>
    %95 = vector.multi_reduction <maximumf>, %94, %cst_47 [1] : vector<5x5xf32> to vector<5xf32>
    %96 = vector.shape_cast %95 : vector<5xf32> to vector<5x1xf32>
    %97 = vector.broadcast %96 : vector<5x1xf32> to vector<5x5xf32>
    %98 = arith.subf %94, %97 : vector<5x5xf32>
    %99 = math.exp %98 : vector<5x5xf32>
    %cst_48 = arith.constant dense<0.000000e+00> : vector<5xf32>
    %100 = vector.multi_reduction <add>, %99, %cst_48 [1] : vector<5x5xf32> to vector<5xf32>
    %101 = vector.shape_cast %100 : vector<5xf32> to vector<5x1xf32>
    %102 = tpu.reciprocal %101 {approx = true} : vector<5x1xf32> -> vector<5x1xf32>
    %103 = vector.broadcast %102 : vector<5x1xf32> to vector<5x5xf32>
    %104 = arith.mulf %99, %103 : vector<5x5xf32>
    %cst_49 = arith.constant dense<0.000000e+00> : vector<5x8xf32>
    %105 = tpu.matmul %104, %93, %cst_49 {dimension_numbers = #tpu.dot_dimension_numbers<[1], [0], [0], [1], [0, 0, 1, 1], [], []>} : vector<5x5xf32>, vector<5x8xf32>, vector<5x8xf32> -> vector<5x8xf32>
    %c16 = arith.constant 16 : index
    %c0_50 = arith.constant 0 : index
    %106 = vector.load %arg10[%c16, %c0_50] : memref<32x32xf32, #tpu.memory_space<vmem>>, vector<8x32xf32>
    %cst_51 = arith.constant dense<0.000000e+00> : vector<5x32xf32>
    %107 = tpu.matmul %105, %106, %cst_51 {dimension_numbers = #tpu.dot_dimension_numbers<[1], [0], [0], [1], [0, 0, 1, 1], [], []>} : vector<5x8xf32>, vector<8x32xf32>, vector<5x32xf32> -> vector<5x32xf32>
    %108 = arith.addf %88, %107 : vector<5x32xf32>
    %109 = vector.extract_strided_slice %42 {offsets = [0, 24], sizes = [5, 8], strides = [1, 1]} : vector<5x32xf32> to vector<5x8xf32>
    %cst_52 = arith.constant 0.353553385 : f32
    %110 = vector.broadcast %cst_52 : f32 to vector<5x8xf32>
    %111 = arith.mulf %109, %110 : vector<5x8xf32>
    %112 = vector.extract_strided_slice %43 {offsets = [0, 24], sizes = [5, 8], strides = [1, 1]} : vector<5x32xf32> to vector<5x8xf32>
    %113 = vector.extract_strided_slice %47 {offsets = [0, 24], sizes = [5, 8], strides = [1, 1]} : vector<5x32xf32> to vector<5x8xf32>
    %cst_53 = arith.constant dense<0.000000e+00> : vector<5x5xf32>
    %114 = tpu.matmul %111, %112, %cst_53 {dimension_numbers = #tpu.dot_dimension_numbers<[1], [1], [0], [0], [0, 0, 1, 0], [], []>} : vector<5x8xf32>, vector<5x8xf32>, vector<5x5xf32> -> vector<5x5xf32>
    %cst_54 = arith.constant dense<0xFF800000> : vector<5xf32>
    %115 = vector.multi_reduction <maximumf>, %114, %cst_54 [1] : vector<5x5xf32> to vector<5xf32>
    %116 = vector.shape_cast %115 : vector<5xf32> to vector<5x1xf32>
    %117 = vector.broadcast %116 : vector<5x1xf32> to vector<5x5xf32>
    %118 = arith.subf %114, %117 : vector<5x5xf32>
    %119 = math.exp %118 : vector<5x5xf32>
    %cst_55 = arith.constant dense<0.000000e+00> : vector<5xf32>
    %120 = vector.multi_reduction <add>, %119, %cst_55 [1] : vector<5x5xf32> to vector<5xf32>
    %121 = vector.shape_cast %120 : vector<5xf32> to vector<5x1xf32>
    %122 = tpu.reciprocal %121 {approx = true} : vector<5x1xf32> -> vector<5x1xf32>
    %123 = vector.broadcast %122 : vector<5x1xf32> to vector<5x5xf32>
    %124 = arith.mulf %119, %123 : vector<5x5xf32>
    %cst_56 = arith.constant dense<0.000000e+00> : vector<5x8xf32>
    %125 = tpu.matmul %124, %113, %cst_56 {dimension_numbers = #tpu.dot_dimension_numbers<[1], [0], [0], [1], [0, 0, 1, 1], [], []>} : vector<5x5xf32>, vector<5x8xf32>, vector<5x8xf32> -> vector<5x8xf32>
    %c24 = arith.constant 24 : index
    %c0_57 = arith.constant 0 : index
    %126 = vector.load %arg10[%c24, %c0_57] : memref<32x32xf32, #tpu.memory_space<vmem>>, vector<8x32xf32>
    %cst_58 = arith.constant dense<0.000000e+00> : vector<5x32xf32>
    %127 = tpu.matmul %125, %126, %cst_58 {dimension_numbers = #tpu.dot_dimension_numbers<[1], [0], [0], [1], [0, 0, 1, 1], [], []>} : vector<5x8xf32>, vector<8x32xf32>, vector<5x32xf32> -> vector<5x32xf32>
    %128 = arith.addf %108, %127 : vector<5x32xf32>
    %129 = arith.addf %1, %128 : vector<5x32xf32>
    %c0_59 = arith.constant 0 : index
    %c0_60 = arith.constant 0 : index
    %130 = vector.load %arg11[%c0_59, %c0_60] : memref<1x32xf32, #tpu.memory_space<vmem>>, vector<1x32xf32>
    %131 = vector.broadcast %130 : vector<1x32xf32> to vector<5x32xf32>
    %132 = arith.addf %129, %131 : vector<5x32xf32>
    %c0_61 = arith.constant 0 : index
    %c0_62 = arith.constant 0 : index
    %133 = vector.load %arg12[%c0_61, %c0_62] : memref<1x32xf32, #tpu.memory_space<vmem>>, vector<1x32xf32>
    %c0_63 = arith.constant 0 : index
    %c0_64 = arith.constant 0 : index
    %134 = vector.load %arg13[%c0_63, %c0_64] : memref<1x32xf32, #tpu.memory_space<vmem>>, vector<1x32xf32>
    %cst_65 = arith.constant dense<0.000000e+00> : vector<5xf32>
    %135 = vector.multi_reduction <add>, %132, %cst_65 [1] : vector<5x32xf32> to vector<5xf32>
    %136 = vector.shape_cast %135 : vector<5xf32> to vector<5x1xf32>
    %cst_66 = arith.constant 3.200000e+01 : f32
    %137 = vector.broadcast %cst_66 : f32 to vector<5x1xf32>
    %138 = arith.divf %136, %137 : vector<5x1xf32>
    %139 = vector.broadcast %138 : vector<5x1xf32> to vector<5x32xf32>
    %140 = arith.subf %132, %139 : vector<5x32xf32>
    %141 = arith.mulf %140, %140 : vector<5x32xf32>
    %cst_67 = arith.constant dense<0.000000e+00> : vector<5xf32>
    %142 = vector.multi_reduction <add>, %141, %cst_67 [1] : vector<5x32xf32> to vector<5xf32>
    %143 = vector.shape_cast %142 : vector<5xf32> to vector<5x1xf32>
    %cst_68 = arith.constant 3.200000e+01 : f32
    %144 = vector.broadcast %cst_68 : f32 to vector<5x1xf32>
    %145 = arith.divf %143, %144 : vector<5x1xf32>
    %146 = vector.broadcast %138 : vector<5x1xf32> to vector<5x32xf32>
    %147 = arith.subf %132, %146 : vector<5x32xf32>
    %cst_69 = arith.constant 9.99999974E-6 : f32
    %148 = vector.broadcast %cst_69 : f32 to vector<5x1xf32>
    %149 = arith.addf %145, %148 : vector<5x1xf32>
    %150 = math.rsqrt %149 : vector<5x1xf32>
    %151 = vector.broadcast %150 : vector<5x1xf32> to vector<5x32xf32>
    %152 = arith.mulf %147, %151 : vector<5x32xf32>
    %153 = vector.broadcast %133 : vector<1x32xf32> to vector<5x32xf32>
    %154 = arith.mulf %152, %153 : vector<5x32xf32>
    %155 = vector.broadcast %134 : vector<1x32xf32> to vector<5x32xf32>
    %156 = arith.addf %154, %155 : vector<5x32xf32>
    %c0_70 = arith.constant 0 : index
    %c0_71 = arith.constant 0 : index
    %157 = vector.load %arg14[%c0_70, %c0_71] : memref<32x64xf32, #tpu.memory_space<vmem>>, vector<32x64xf32>
    %cst_72 = arith.constant dense<0.000000e+00> : vector<5x64xf32>
    %158 = tpu.matmul %156, %157, %cst_72 {dimension_numbers = #tpu.dot_dimension_numbers<[1], [0], [0], [1], [0, 0, 1, 1], [], []>} : vector<5x32xf32>, vector<32x64xf32>, vector<5x64xf32> -> vector<5x64xf32>
    %c0_73 = arith.constant 0 : index
    %c0_74 = arith.constant 0 : index
    %159 = vector.load %arg15[%c0_73, %c0_74] : memref<1x64xf32, #tpu.memory_space<vmem>>, vector<1x64xf32>
    %160 = vector.broadcast %159 : vector<1x64xf32> to vector<5x64xf32>
    %161 = arith.addf %158, %160 : vector<5x64xf32>
    %cst_75 = arith.constant 1.702000e+00 : f32
    %162 = vector.broadcast %cst_75 : f32 to vector<5x64xf32>
    %163 = arith.mulf %162, %161 : vector<5x64xf32>
    %164 = arith.negf %163 : vector<5x64xf32>
    %165 = math.exp %164 : vector<5x64xf32>
    %cst_76 = arith.constant 1.000000e+00 : f32
    %166 = vector.broadcast %cst_76 : f32 to vector<5x64xf32>
    %167 = arith.addf %166, %165 : vector<5x64xf32>
    %168 = arith.divf %166, %167 : vector<5x64xf32>
    %169 = arith.mulf %161, %168 : vector<5x64xf32>
    %c0_77 = arith.constant 0 : index
    %c0_78 = arith.constant 0 : index
    %170 = vector.load %arg16[%c0_77, %c0_78] : memref<64x32xf32, #tpu.memory_space<vmem>>, vector<64x32xf32>
    %cst_79 = arith.constant dense<0.000000e+00> : vector<5x32xf32>
    %171 = tpu.matmul %169, %170, %cst_79 {dimension_numbers = #tpu.dot_dimension_numbers<[1], [0], [0], [1], [0, 0, 1, 1], [], []>} : vector<5x64xf32>, vector<64x32xf32>, vector<5x32xf32> -> vector<5x32xf32>
    %172 = arith.addf %132, %171 : vector<5x32xf32>
    %c0_80 = arith.constant 0 : index
    %c0_81 = arith.constant 0 : index
    %173 = vector.load %arg17[%c0_80, %c0_81] : memref<1x32xf32, #tpu.memory_space<vmem>>, vector<1x32xf32>
    %174 = vector.broadcast %173 : vector<1x32xf32> to vector<5x32xf32>
    %175 = arith.addf %172, %174 : vector<5x32xf32>
    %c0_82 = arith.constant 0 : index
    %c0_83 = arith.constant 0 : index
    %c0_84 = arith.constant 0 : index
    %176 = vector.load %arg18[%c0_82, %c0_83, %c0_84] : memref<1x5x32xf32, #tpu.memory_space<vmem>>, vector<1x5x32xf32>
    %177 = vector.shape_cast %176 : vector<1x5x32xf32> to vector<5x32xf32>
    %178 = vector.shape_cast %175 : vector<5x32xf32> to vector<1x5x32xf32>
    tpu.vector_store %arg18[%c0_82, %c0_83, %c0_84], %178 {strides = array<i32>} : memref<1x5x32xf32, #tpu.memory_space<vmem>>, vector<1x5x32xf32>,
    return
  }
  func.func @transform_0(%arg0: i32) -> (i32, i32, i32) {
    %c0_i32 = arith.constant 0 : i32
    %c0_i32_0 = arith.constant 0 : i32
    %c0_i32_1 = arith.constant 0 : i32
    return %arg0, %c0_i32, %c0_i32_0 : i32, i32, i32
  }
  func.func @transform_1(%arg0: i32) -> (i32, i32) {
    %c0_i32 = arith.constant 0 : i32
    %c0_i32_0 = arith.constant 0 : i32
    %c0_i32_1 = arith.constant 0 : i32
    return %c0_i32, %c0_i32_0 : i32, i32
  }
  func.func @transform_2(%arg0: i32) -> (i32, i32) {
    %c0_i32 = arith.constant 0 : i32
    %c0_i32_0 = arith.constant 0 : i32
    %c0_i32_1 = arith.constant 0 : i32
    return %c0_i32, %c0_i32_0 : i32, i32
  }
  func.func @transform_3(%arg0: i32) -> (i32, i32) {
    %c0_i32 = arith.constant 0 : i32
    %c0_i32_0 = arith.constant 0 : i32
    %c0_i32_1 = arith.constant 0 : i32
    return %c0_i32, %c0_i32_0 : i32, i32
  }
  func.func @transform_4(%arg0: i32) -> (i32, i32) {
    %c0_i32 = arith.constant 0 : i32
    %c0_i32_0 = arith.constant 0 : i32
    %c0_i32_1 = arith.constant 0 : i32
    return %c0_i32, %c0_i32_0 : i32, i32
  }
  func.func @transform_5(%arg0: i32) -> (i32, i32) {
    %c0_i32 = arith.constant 0 : i32
    %c0_i32_0 = arith.constant 0 : i32
    %c0_i32_1 = arith.constant 0 : i32
    return %c0_i32, %c0_i32_0 : i32, i32
  }
  func.func @transform_6(%arg0: i32) -> (i32, i32) {
    %c0_i32 = arith.constant 0 : i32
    %c0_i32_0 = arith.constant 0 : i32
    %c0_i32_1 = arith.constant 0 : i32
    return %c0_i32, %c0_i32_0 : i32, i32
  }
  func.func @transform_7(%arg0: i32) -> (i32, i32) {
    %c0_i32 = arith.constant 0 : i32
    %c0_i32_0 = arith.constant 0 : i32
    %c0_i32_1 = arith.constant 0 : i32
    return %c0_i32, %c0_i32_0 : i32, i32
  }
  func.func @transform_8(%arg0: i32) -> (i32, i32) {
    %c0_i32 = arith.constant 0 : i32
    %c0_i32_0 = arith.constant 0 : i32
    %c0_i32_1 = arith.constant 0 : i32
    return %c0_i32, %c0_i32_0 : i32, i32
  }
  func.func @transform_9(%arg0: i32) -> (i32, i32) {
    %c0_i32 = arith.constant 0 : i32
    %c0_i32_0 = arith.constant 0 : i32
    %c0_i32_1 = arith.constant 0 : i32
    return %c0_i32, %c0_i32_0 : i32, i32
  }
  func.func @transform_10(%arg0: i32) -> (i32, i32) {
    %c0_i32 = arith.constant 0 : i32
    %c0_i32_0 = arith.constant 0 : i32
    %c0_i32_1 = arith.constant 0 : i32
    return %c0_i32, %c0_i32_0 : i32, i32
  }
  func.func @transform_11(%arg0: i32) -> (i32, i32) {
    %c0_i32 = arith.constant 0 : i32
    %c0_i32_0 = arith.constant 0 : i32
    %c0_i32_1 = arith.constant 0 : i32
    return %c0_i32, %c0_i32_0 : i32, i32
  }
  func.func @transform_12(%arg0: i32) -> (i32, i32) {
    %c0_i32 = arith.constant 0 : i32
    %c0_i32_0 = arith.constant 0 : i32
    %c0_i32_1 = arith.constant 0 : i32
    return %c0_i32, %c0_i32_0 : i32, i32
  }
  func.func @transform_13(%arg0: i32) -> (i32, i32) {
    %c0_i32 = arith.constant 0 : i32
    %c0_i32_0 = arith.constant 0 : i32
    %c0_i32_1 = arith.constant 0 : i32
    return %c0_i32, %c0_i32_0 : i32, i32
  }
  func.func @transform_14(%arg0: i32) -> (i32, i32) {
    %c0_i32 = arith.constant 0 : i32
    %c0_i32_0 = arith.constant 0 : i32
    %c0_i32_1 = arith.constant 0 : i32
    return %c0_i32, %c0_i32_0 : i32, i32
  }
  func.func @transform_15(%arg0: i32) -> (i32, i32) {
    %c0_i32 = arith.constant 0 : i32
    %c0_i32_0 = arith.constant 0 : i32
    %c0_i32_1 = arith.constant 0 : i32
    return %c0_i32, %c0_i32_0 : i32, i32
  }
  func.func @transform_16(%arg0: i32) -> (i32, i32) {
    %c0_i32 = arith.constant 0 : i32
    %c0_i32_0 = arith.constant 0 : i32
    %c0_i32_1 = arith.constant 0 : i32
    return %c0_i32, %c0_i32_0 : i32, i32
  }
  func.func @transform_17(%arg0: i32) -> (i32, i32, i32) {
    %c0_i32 = arith.constant 0 : i32
    %c0_i32_0 = arith.constant 0 : i32
    %c0_i32_1 = arith.constant 0 : i32
    return %arg0, %c0_i32, %c0_i32_0 : i32, i32, i32
  }
}

</mosaic_0001>

<llo_original>
// kernel: _lambda_.4
$region0: #{_lambda_.4}
  #allocation0 [shape = 'u32[]', space=smem, size = 0x4, offset = 0x4, fixed_abs, tag = 'smem constant byte address 0x4 - core index']
  #allocation1 [shape = 'u32[144,128]{1,0:T(1,128)}', space=vmem, size = 0x12000, scoped, tag = 'internal scratch']
  %s0 = inlined_call_operand.vmem [shape: f32[2,5,192], index: 0, kind: input, shape index: {}]
  %s1 = inlined_call_operand.vmem [shape: f32[192,32], index: 1, kind: input, shape index: {}]
  %s2 = inlined_call_operand.vmem [shape: f32[5,32], index: 2, kind: input, shape index: {}]
  %s3 = inlined_call_operand.vmem [shape: f32[1,32], index: 3, kind: input, shape index: {}]
  %s4 = inlined_call_operand.vmem [shape: f32[1,32], index: 4, kind: input, shape index: {}]
  %s5 = inlined_call_operand.vmem [shape: f32[2,5,32], index: 5, kind: output, shape index: {}]
  %s6 = sld [smem:[#allocation0]]
  $region53: #{_lambda_.4} parent=0
    _
  %s8 = ssub.s32 1, %s6
  %s9 = scalar_select 0, %s8, %s6
  loop: start=0, step=1, limit=4
  $region2: #{_lambda_.4} parent=0 // loop_pre_header
    _
  $region3: #{_lambda_.4} parent=0 // loop_header
    %s11 = sphi 0, %s15
    %p12 = scmp.ge.s32.totalorder %s11, 4
    %s21 = sphi 0, %s23
    %s24 = sphi 0, %s21
    %s25 = sphi 0, %s24
    %s41 = sphi 0, %s25
    %s45 = sphi 0, %s45
    %s47 = sphi 0, %s45
    %s48 = sphi 0, %s47
    %s62 = sphi 0, %s48
    %s66 = sphi 0, %s66
    %s68 = sphi 0, %s66
    %s69 = sphi 0, %s68
    %s83 = sphi 0, %s69
    %s87 = sphi 0, %s87
    %s89 = sphi 0, %s87
    %s90 = sphi 0, %s89
    %s104 = sphi 0, %s90
    %s108 = sphi 0, %s108
    %s110 = sphi 0, %s108
    %s111 = sphi 0, %s110
    %s125 = sphi 0, %s111
    %s131 = sphi 0, %s133
    %s134 = sphi 0, %s131
    %s135 = sphi 0, %s134
    %s151 = sphi 0, %s135
  $region4: #{_lambda_.4} parent=0 // loop_header_branch
    %14 = sbr.rel (%p12) target = $region8
  $region5: #{_lambda_.4} parent=0 // loop_body
    %s16 = ssub.s32 %s11, 1
    %s17 = ssub.s32 %s11, 2
    %s18 = sadd.s32 %s11, 1
    %s19 = ssub.s32 %s11, %s18
    %p20 = scmp.eq.s32.totalorder %s19, 0
    %s22 = sadd.s32 %s21, 1
    %s23 = scalar_select %p20, %s21, %s22
    %p26 = pneg %p20
    %p27 = scmp.eq.s32.totalorder %s11, 1
    %p28 = por %p26, %p27
    %p29 = scmp.ne.s32.totalorder %s21, %s24
    %p30 = scmp.eq.s32.totalorder %s11, 0
    %p31 = por %p29, %p30
    %p32 = scmp.ne.s32.totalorder %s21, %s24
    %p33 = scmp.eq.s32.totalorder %s16, 1
    %p34 = por %p32, %p33
    %p35 = scmp.ne.s32.totalorder %s24, %s25
    %p36 = scmp.eq.s32.totalorder %s16, 0
    %p37 = por %p35, %p36
    %p38 = scmp.ne.s32.totalorder %s24, %s25
    %p39 = scmp.eq.s32.totalorder %s17, 1
    %p40 = por %p38, %p39
    %p42 = scmp.ne.s32.totalorder %s25, %s41
    %p43 = scmp.eq.s32.totalorder %s17, 0
    %p44 = por %p42, %p43
    %s46 = sadd.s32 %s45, 1
    %p49 = scmp.eq.s32.totalorder %s11, 1
    %p50 = scmp.ne.s32.totalorder %s45, %s47
    %p51 = scmp.eq.s32.totalorder %s11, 0
    %p52 = por %p50, %p51
    %p53 = scmp.ne.s32.totalorder %s45, %s47
    %p54 = scmp.eq.s32.totalorder %s16, 1
    %p55 = por %p53, %p54
    %p56 = scmp.ne.s32.totalorder %s47, %s48
    %p57 = scmp.eq.s32.totalorder %s16, 0
    %p58 = por %p56, %p57
    %p59 = scmp.ne.s32.totalorder %s47, %s48
    %p60 = scmp.eq.s32.totalorder %s17, 1
    %p61 = por %p59, %p60
    %p63 = scmp.ne.s32.totalorder %s48, %s62
    %p64 = scmp.eq.s32.totalorder %s17, 0
    %p65 = por %p63, %p64
    %s67 = sadd.s32 %s66, 1
    %p70 = scmp.eq.s32.totalorder %s11, 1
    %p71 = scmp.ne.s32.totalorder %s66, %s68
    %p72 = scmp.eq.s32.totalorder %s11, 0
    %p73 = por %p71, %p72
    %p74 = scmp.ne.s32.totalorder %s66, %s68
    %p75 = scmp.eq.s32.totalorder %s16, 1
    %p76 = por %p74, %p75
    %p77 = scmp.ne.s32.totalorder %s68, %s69
    %p78 = scmp.eq.s32.totalorder %s16, 0
    %p79 = por %p77, %p78
    %p80 = scmp.ne.s32.totalorder %s68, %s69
    %p81 = scmp.eq.s32.totalorder %s17, 1
    %p82 = por %p80, %p81
    %p84 = scmp.ne.s32.totalorder %s69, %s83
    %p85 = scmp.eq.s32.totalorder %s17, 0
    %p86 = por %p84, %p85
    %s88 = sadd.s32 %s87, 1
    %p91 = scmp.eq.s32.totalorder %s11, 1
    %p92 = scmp.ne.s32.totalorder %s87, %s89
    %p93 = scmp.eq.s32.totalorder %s11, 0
    %p94 = por %p92, %p93
    %p95 = scmp.ne.s32.totalorder %s87, %s89
    %p96 = scmp.eq.s32.totalorder %s16, 1
    %p97 = por %p95, %p96
    %p98 = scmp.ne.s32.totalorder %s89, %s90
    %p99 = scmp.eq.s32.totalorder %s16, 0
    %p100 = por %p98, %p99
    %p101 = scmp.ne.s32.totalorder %s89, %s90
    %p102 = scmp.eq.s32.totalorder %s17, 1
    %p103 = por %p101, %p102
    %p105 = scmp.ne.s32.totalorder %s90, %s104
    %p106 = scmp.eq.s32.totalorder %s17, 0
    %p107 = por %p105, %p106
    %s109 = sadd.s32 %s108, 1
    %p112 = scmp.eq.s32.totalorder %s11, 1
    %p113 = scmp.ne.s32.totalorder %s108, %s110
    %p114 = scmp.eq.s32.totalorder %s11, 0
    %p115 = por %p113, %p114
    %p116 = scmp.ne.s32.totalorder %s108, %s110
    %p117 = scmp.eq.s32.totalorder %s16, 1
    %p118 = por %p116, %p117
    %p119 = scmp.ne.s32.totalorder %s110, %s111
    %p120 = scmp.eq.s32.totalorder %s16, 0
    %p121 = por %p119, %p120
    %p122 = scmp.ne.s32.totalorder %s110, %s111
    %p123 = scmp.eq.s32.totalorder %s17, 1
    %p124 = por %p122, %p123
    %p126 = scmp.ne.s32.totalorder %s111, %s125
    %p127 = scmp.eq.s32.totalorder %s17, 0
    %p128 = por %p126, %p127
    %s129 = ssub.s32 %s11, %s18
    %p130 = scmp.eq.s32.totalorder %s129, 0
    %s132 = sadd.s32 %s131, 1
    %s133 = scalar_select %p130, %s131, %s132
    %p136 = pneg %p130
    %p137 = scmp.eq.s32.totalorder %s11, 1
    %p138 = por %p136, %p137
    %p139 = scmp.ne.s32.totalorder %s131, %s134
    %p140 = scmp.eq.s32.totalorder %s11, 0
    %p141 = por %p139, %p140
    %p142 = scmp.ne.s32.totalorder %s131, %s134
    %p143 = scmp.eq.s32.totalorder %s16, 1
    %p144 = por %p142, %p143
    %p145 = scmp.ne.s32.totalorder %s134, %s135
    %p146 = scmp.eq.s32.totalorder %s16, 0
    %p147 = por %p145, %p146
    %p148 = scmp.ne.s32.totalorder %s134, %s135
    %p149 = scmp.eq.s32.totalorder %s17, 1
    %p150 = por %p148, %p149
    %p152 = scmp.ne.s32.totalorder %s135, %s151
    %p153 = scmp.eq.s32.totalorder %s17, 0
    %p154 = por %p152, %p153
    %p155 = scmp.le.s32.totalorder 1, %s11
    %p156 = scmp.lt.s32.totalorder %s11, 3
    %p157 = pnand %p155, %p156
    %p158 = pneg %p157
    // Predicated region
    $region9: #{_lambda_.4} parent=5 // pred_check
      _
    $region10: #{_lambda_.4} parent=5 // pred_check_branch
      %160 = sbr.rel (%p157) target = $region12
    $region11: #{_lambda_.4} parent=5 // pred_region
      %s161 = ssub.s32 %s11, 1
      // Predicated region
      $region13: #{_lambda_.4} parent=11 // pred_check
        %p162 = pneg %p58
      $region14: #{_lambda_.4} parent=11 // pred_check_branch
        %164 = sbr.rel (%p162) target = $region16
      $region15: #{_lambda_.4} parent=11 // pred_region
        _
      $region16: #{_lambda_.4} parent=11 // pred_fallthru
        _
      // Predicated region
      $region17: #{_lambda_.4} parent=11 // pred_check
        %p165 = pneg %p79
      $region18: #{_lambda_.4} parent=11 // pred_check_branch
        %167 = sbr.rel (%p165) target = $region20
      $region19: #{_lambda_.4} parent=11 // pred_region
        _
      $region20: #{_lambda_.4} parent=11 // pred_fallthru
        _
      // Predicated region
      $region21: #{_lambda_.4} parent=11 // pred_check
        %p168 = pneg %p100
      $region22: #{_lambda_.4} parent=11 // pred_check_branch
        %170 = sbr.rel (%p168) target = $region24
      $region23: #{_lambda_.4} parent=11 // pred_region
        _
      $region24: #{_lambda_.4} parent=11 // pred_fallthru
        _
      // Predicated region
      $region25: #{_lambda_.4} parent=11 // pred_check
        %p171 = pneg %p121
      $region26: #{_lambda_.4} parent=11 // pred_check_branch
        %173 = sbr.rel (%p171) target = $region28
      $region27: #{_lambda_.4} parent=11 // pred_region
        _
      $region28: #{_lambda_.4} parent=11 // pred_fallthru
        _
    $region12: #{_lambda_.4} parent=5 // pred_fallthru
      _
    %p174 = scmp.lt.s32.totalorder %s11, 2
    // Predicated region
    $region29: #{_lambda_.4} parent=5 // pred_check
      %p175 = pneg %p174
    $region30: #{_lambda_.4} parent=5 // pred_check_branch
      %177 = sbr.rel (%p175) target = $region32
    $region31: #{_lambda_.4} parent=5 // pred_region
      // Predicated region
      $region33: #{_lambda_.4} parent=31 // pred_check
        %p178 = pneg %p31
      $region34: #{_lambda_.4} parent=31 // pred_check_branch
        %180 = sbr.rel (%p178) target = $region36
      $region35: #{_lambda_.4} parent=31 // pred_region
        %p181 = scmp.lt.s32.totalorder %s11, 1
        %s182 = scalar_select %p181, %s11, 1
        %s183 = smul.addr %s182, 2
        %s184 = smul.addr %s183, 8
        %s185 = scalar_lea.vmem %s0, %s184
      $region36: #{_lambda_.4} parent=31 // pred_fallthru
        _
    $region32: #{_lambda_.4} parent=5 // pred_fallthru
      _
    %p186 = scmp.le.s32.totalorder 1, %s11
    %p187 = scmp.lt.s32.totalorder %s11, 3
    %p188 = pnand %p186, %p187
    %p189 = pneg %p188
    // Predicated region
    $region37: #{_lambda_.4} parent=5 // pred_check
      _
    $region38: #{_lambda_.4} parent=5 // pred_check_branch
      %191 = sbr.rel (%p188) target = $region40
    $region39: #{_lambda_.4} parent=5 // pred_region
      %s192 = ssub.s32 %s11, 1
      %p193 = scmp.lt.s32.totalorder %s16, 1
      %s194 = scalar_select %p193, %s16, 1
      %s195 = smul.addr %s194, 2
      %s196 = smul.addr %s195, 8
      %s197 = scalar_lea.vmem %s0, %s196
      %p198 = pneg %p37
      %p199 = pneg %p34
      %p200 = pneg %p58
      %p201 = pneg %p55
      %p202 = pneg %p79
      %p203 = pneg %p76
      %p204 = pneg %p100
      %p205 = pneg %p97
      %p206 = pneg %p121
      %p207 = pneg %p118
      %p208 = pneg %p147
      %p209 = pneg %p144
      %p210 = scmp.lt.s32.totalorder %s16, 1
      %s211 = scalar_select %p210, %s16, 1
      %s212 = smul.addr %s211, 8
      %s213 = scalar_lea.vmem %s5, %s212
      %p214 = scmp.lt.s32.totalorder %s16, 1
      %s215 = scalar_select %p214, %s16, 1
      %s216 = smul.addr %s215, 2
      %s217 = smul.addr %s216, 8
      %s218 = scalar_lea.vmem %s0, %s217
      %p219 = scmp.lt.s32.totalorder %s16, 1
      %s220 = scalar_select %p219, %s16, 1
      %s221 = smul.addr %s220, 8
      %s222 = scalar_lea.vmem %s5, %s221
      %v223 = vld [vmem:[%s218] sm:$0x1f]
      %v224 = vld [vmem:[%s218 + $0x8] sm:$0x1f]
      %v225 = vld [vmem:[%s1] sm:$0xff]
      %v226 = vld [vmem:[%s1 + $0x8] sm:$0xff]
      %v227 = vld [vmem:[%s1 + $0x10] sm:$0xff]
      %v228 = vld [vmem:[%s1 + $0x18] sm:$0xff]
      %v229 = vld [vmem:[%s1 + $0x20] sm:$0xff]
      %v230 = vld [vmem:[%s1 + $0x28] sm:$0xff]
      %v231 = vld [vmem:[%s1 + $0x30] sm:$0xff]
      %v232 = vld [vmem:[%s1 + $0x38] sm:$0xff]
      %v233 = vld [vmem:[%s1 + $0x40] sm:$0xff]
      %v234 = vld [vmem:[%s1 + $0x48] sm:$0xff]
      %v235 = vld [vmem:[%s1 + $0x50] sm:$0xff]
      %v236 = vld [vmem:[%s1 + $0x58] sm:$0xff]
      %v237 = vld [vmem:[%s1 + $0x60] sm:$0xff]
      %v238 = vld [vmem:[%s1 + $0x68] sm:$0xff]
      %v239 = vld [vmem:[%s1 + $0x70] sm:$0xff]
      %v240 = vld [vmem:[%s1 + $0x78] sm:$0xff]
      %v241 = vld [vmem:[%s1 + $0x80] sm:$0xff]
      %v242 = vld [vmem:[%s1 + $0x88] sm:$0xff]
      %v243 = vld [vmem:[%s1 + $0x90] sm:$0xff]
      %v244 = vld [vmem:[%s1 + $0x98] sm:$0xff]
      %v245 = vld [vmem:[%s1 + $0xa0] sm:$0xff]
      %v246 = vld [vmem:[%s1 + $0xa8] sm:$0xff]
      %v247 = vld [vmem:[%s1 + $0xb0] sm:$0xff]
      %v248 = vld [vmem:[%s1 + $0xb8] sm:$0xff]
      %v249 = vld [vmem:[%s2] sm:$0x1f]
      %vm250 = vcmask 523264
      %v252 = vsel %vm250, %v224, 0
      %254 = vmatprep.subr.mxu0 0.0
      %255 = vmatpush1.msra.mxu0 %v240
      %256 = vmatprep.subr.mxu0 0.0
      %257 = vmatpush1.msra.mxu0 %v239
      %258 = vmatprep.subr.mxu0 0.0
      %259 = vmatpush1.msra.mxu0 %v238
      %260 = vmatprep.subr.mxu0 0.0
      %261 = vmatpush1.msra.mxu0 %v237
      %262 = vmatprep.subr.mxu0 0.0
      %263 = vmatpush1.msra.mxu0 %v236
      %264 = vmatprep.subr.mxu0 0.0
      %265 = vmatpush1.msra.mxu0 %v235
      %266 = vmatprep.subr.mxu0 0.0
      %267 = vmatpush1.msra.mxu0 %v234
      %268 = vmatprep.subr.mxu0 0.0
      %269 = vmatpush1.msra.mxu0 %v233
      %270 = vmatprep.subr.mxu0 0.0
      %271 = vmatpush1.msra.mxu0 %v232
      %272 = vmatprep.subr.mxu0 0.0
      %273 = vmatpush1.msra.mxu0 %v231
      %274 = vmatprep.subr.mxu0 0.0
      %275 = vmatpush1.msra.mxu0 %v230
      %276 = vmatprep.subr.mxu0 0.0
      %277 = vmatpush1.msra.mxu0 %v229
      %278 = vmatprep.subr.mxu0 0.0
      %279 = vmatpush1.msra.mxu0 %v228
      %280 = vmatprep.subr.mxu0 0.0
      %281 = vmatpush1.msra.mxu0 %v227
      %282 = vmatprep.subr.mxu0 0.0
      %283 = vmatpush1.msra.mxu0 %v226
      %284 = vmatprep.subr.mxu0 0.0
      %285 = vmatpush1.msra.mxu0 %v225
      %286 = vmatprep.subr.mxu0 0.0
      %287 = vmatpush2.msra.mxu0 0.0
      %288 = vmatprep.subr.mxu0 0.0
      %289 = vmatpush2.msra.mxu0 0.0
      %290 = vmatprep.subr.mxu0 0.0
      %291 = vmatpush2.msra.mxu0 0.0
      %292 = vmatprep.subr.mxu0 0.0
      %293 = vmatpush2.msra.mxu0 0.0
      %294 = vmatprep.subr.mxu0 0.0
      %295 = vmatpush2.msra.mxu0 0.0
      %296 = vmatprep.subr.mxu0 0.0
      %297 = vmatpush2.msra.mxu0 0.0
      %298 = vmatprep.subr.mxu0 0.0
      %299 = vmatpush2.msra.mxu0 0.0
      %300 = vmatprep.subr.mxu0 0.0
      %301 = vmatpush2.msra.mxu0 0.0
      %302 = vmatprep.subr.mxu0 0.0
      %303 = vmatpush2.msra.mxu0 %v248
      %304 = vmatprep.subr.mxu0 0.0
      %305 = vmatpush2.msra.mxu0 %v247
      %306 = vmatprep.subr.mxu0 0.0
      %307 = vmatpush2.msra.mxu0 %v246
      %308 = vmatprep.subr.mxu0 0.0
      %309 = vmatpush2.msra.mxu0 %v245
      %310 = vmatprep.subr.mxu0 0.0
      %311 = vmatpush2.msra.mxu0 %v244
      %312 = vmatprep.subr.mxu0 0.0
      %313 = vmatpush2.msra.mxu0 %v243
      %314 = vmatprep.subr.mxu0 0.0
      %315 = vmatpush2.msra.mxu0 %v242
      %316 = vmatprep.subr.mxu0 0.0
      %317 = vmatpush2.msra.mxu0 %v241
      %318 = vmatprep.mubr.f32.mxu0 %v252
      %319 = vmatmul.mubr.f32.gmra.mxu0 %v223
      %v320 = vpop.f32.mrf.mxu0
      %v321 = vadd.f32 %v249, %v320
      %v322 = vpop.f32.mrf.mxu0
      %323 = vdwg.mxu0
      %v324 = vld [vmem:[%s3] sm:$0x1]
      %v325 = vld [vmem:[%s4] sm:$0x1]
      %vm326 = vcmask 258048
      %v327 = vsel %vm326, %v321, 0.0
      %328 = vadd.xlane.f32.xlu0 %v327
      %v329 = vpop.xlane.xlu0 %328
      %v330 = vrcp.pop 32.0
      %v331 = vmul.f32 %v329, %v330
      %v332 = vsub.f32 %v321, %v331
      %v333 = vmul.f32 %v332, %v332
      %v334 = vsel %vm326, %v333, 0.0
      %335 = vadd.xlane.f32.xlu0 %v334
      %v336 = vpop.xlane.xlu0 %335
      %v337 = vmul.f32 %v336, %v330
      %v338 = vadd.f32 %v337, 1e-05
      %v339 = vrsqrt.pop %v338
      %v340 = vmul.f32 %v332, %v339
      %v342 = vlaneseq
      %v343 = vshrl.u32 %v342, 7
      %v344 = vsub.s32 0, %v343
      %v345 = vrot.slane %v324, %v344
      %v347 = vmul.f32 %v340, %v345
      %v349 = vlaneseq
      %v350 = vshrl.u32 %v349, 7
      %v351 = vsub.s32 0, %v350
      %v352 = vrot.slane %v325, %v351
      %v354 = vadd.f32 %v347, %v352
      %355 = vst.msk [vmem:[%s222] sm:$0x1f] %vm326, %v354
      %p356 = scmp.lt.s32.totalorder %s16, 1
      %s357 = scalar_select %p356, %s16, 1
      %s358 = smul.addr %s357, 8
      %s359 = scalar_lea.vmem %s5, %s358
      // Predicated region
      $region41: #{_lambda_.4} parent=39 // pred_check
        %p360 = pneg %p144
      $region42: #{_lambda_.4} parent=39 // pred_check_branch
        %362 = sbr.rel (%p360) target = $region44
      $region43: #{_lambda_.4} parent=39 // pred_region
        _
      $region44: #{_lambda_.4} parent=39 // pred_fallthru
        _
    $region40: #{_lambda_.4} parent=5 // pred_fallthru
      _
    %p363 = scmp.le.s32.totalorder 2, %s11
    // Predicated region
    $region45: #{_lambda_.4} parent=5 // pred_check
      %p364 = pneg %p363
    $region46: #{_lambda_.4} parent=5 // pred_check_branch
      %366 = sbr.rel (%p364) target = $region48
    $region47: #{_lambda_.4} parent=5 // pred_region
      %s367 = ssub.s32 %s11, 2
      // Predicated region
      $region49: #{_lambda_.4} parent=47 // pred_check
        %p368 = pneg %p150
      $region50: #{_lambda_.4} parent=47 // pred_check_branch
        %370 = sbr.rel (%p368) target = $region52
      $region51: #{_lambda_.4} parent=47 // pred_region
        %p371 = scmp.lt.s32.totalorder %s17, 1
        %s372 = scalar_select %p371, %s17, 1
        %s373 = smul.addr %s372, 8
        %s374 = scalar_lea.vmem %s5, %s373
      $region52: #{_lambda_.4} parent=47 // pred_fallthru
        _
    $region48: #{_lambda_.4} parent=5 // pred_fallthru
      _
  $region6: #{_lambda_.4} parent=0 // loop_footer
    %s15 = sadd.s32 1, %s11
  $region7: #{_lambda_.4} parent=0 // loop_footer_branch
    %10 = sbr.rel target = $region3
  $region8: #{_lambda_.4} parent=0 // loop_exit
    _

// kernel: _lambda_.7
$region0: #{_lambda_.7}
  #allocation0 [shape = 'u32[]', space=smem, size = 0x4, offset = 0x4, fixed_abs, tag = 'smem constant byte address 0x4 - core index']
  #allocation1 [shape = 'u32[144,128]{1,0:T(1,128)}', space=vmem, size = 0x12000, scoped, tag = 'internal scratch']
  %s0 = inlined_call_operand.vmem [shape: f32[2,32], index: 0, kind: input, shape index: {}]
  %s1 = inlined_call_operand.vmem [shape: f32[1,32], index: 1, kind: input, shape index: {}]
  %s2 = inlined_call_operand.vmem [shape: f32[1,32], index: 2, kind: input, shape index: {}]
  %s3 = inlined_call_operand.vmem [shape: f32[32,16], index: 3, kind: input, shape index: {}]
  %s4 = inlined_call_operand.hbm [shape: f32[2,16], index: 4, kind: output, shape index: {}]
  %s5 = sld [smem:[#allocation0]]
  $region26: #{_lambda_.7} parent=0
    _
  %s7 = ssub.s32 1, %s5
  %s8 = scalar_select 0, %s7, %s5
  $region1: #{_lambda_.7} parent=0
    #allocation2 [shape = 'u8[1024]{0}', space=vmem, size = 0x400, scoped, tag = 'output window, operand 0, single buffered']
    #allocation3 [shape = 's32[1]{0}', space=sflag, size = 0x4, scoped, tag = 'scoped memory for _lambda_.7']
    %9 = vsyncpa [#allocation3], 0
    // Predicated region
    $region2: #{_lambda_.7} parent=1 // pred_check
      _
    $region3: #{_lambda_.7} parent=1 // pred_check_branch
      %11 = sbr.rel (0) target = $region5
    $region4: #{_lambda_.7} parent=1 // pred_region
      _
    $region5: #{_lambda_.7} parent=1 // pred_fallthru
      _
    // Predicated region
    $region6: #{_lambda_.7} parent=1 // pred_check
      _
    $region7: #{_lambda_.7} parent=1 // pred_check_branch
      %13 = sbr.rel (0) target = $region9
    $region8: #{_lambda_.7} parent=1 // pred_region
      _
    $region9: #{_lambda_.7} parent=1 // pred_fallthru
      _
    // Predicated region
    $region10: #{_lambda_.7} parent=1 // pred_check
      _
    $region11: #{_lambda_.7} parent=1 // pred_check_branch
      %15 = sbr.rel (0) target = $region13
    $region12: #{_lambda_.7} parent=1 // pred_region
      _
    $region13: #{_lambda_.7} parent=1 // pred_fallthru
      _
    // Predicated region
    $region14: #{_lambda_.7} parent=1 // pred_check
      _
    $region15: #{_lambda_.7} parent=1 // pred_check_branch
      %17 = sbr.rel (0) target = $region17
    $region16: #{_lambda_.7} parent=1 // pred_region
      _
    $region17: #{_lambda_.7} parent=1 // pred_fallthru
      _
    %v18 = vld [vmem:[%s0] sm:$0x3]
    %v19 = vld [vmem:[%s1] sm:$0x1]
    %v20 = vld [vmem:[%s2] sm:$0x1]
    %vm21 = vcmask 254976
    %v22 = vsel %vm21, %v18, 0.0
    %23 = vadd.xlane.f32.xlu0 %v22
    %v24 = vpop.xlane.xlu0 %23
    %v25 = vrcp.pop 32.0
    %v26 = vmul.f32 %v24, %v25
    %v27 = vsub.f32 %v18, %v26
    %v28 = vmul.f32 %v27, %v27
    %v29 = vsel %vm21, %v28, 0.0
    %30 = vadd.xlane.f32.xlu0 %v29
    %v31 = vpop.xlane.xlu0 %30
    %v32 = vmul.f32 %v31, %v25
    %v33 = vadd.f32 %v32, 1e-05
    %v34 = vrsqrt.pop %v33
    %v35 = vmul.f32 %v27, %v34
    %v37 = vlaneseq
    %v38 = vshrl.u32 %v37, 7
    %v39 = vsub.s32 0, %v38
    %v40 = vrot.slane %v19, %v39
    %v42 = vmul.f32 %v35, %v40
    %v44 = vlaneseq
    %v45 = vshrl.u32 %v44, 7
    %v46 = vsub.s32 0, %v45
    %v47 = vrot.slane %v20, %v46
    %v49 = vadd.f32 %v42, %v47
    %v50 = vld [vmem:[%s3] sm:$0xff]
    %v51 = vld [vmem:[%s3 + $0x8] sm:$0xff]
    %v52 = vld [vmem:[%s3 + $0x10] sm:$0xff]
    %v53 = vld [vmem:[%s3 + $0x18] sm:$0xff]
    %vm54 = vcmask 261120
    %v56 = vsel %vm54, %v49, 0
    %58 = vmatprep.subr.mxu0 0.0
    %59 = vmatpush1.msra.mxu0 0.0
    %60 = vmatprep.subr.mxu0 0.0
    %61 = vmatpush1.msra.mxu0 0.0
    %62 = vmatprep.subr.mxu0 0.0
    %63 = vmatpush1.msra.mxu0 0.0
    %64 = vmatprep.subr.mxu0 0.0
    %65 = vmatpush1.msra.mxu0 0.0
    %66 = vmatprep.subr.mxu0 0.0
    %67 = vmatpush1.msra.mxu0 0.0
    %68 = vmatprep.subr.mxu0 0.0
    %69 = vmatpush1.msra.mxu0 0.0
    %70 = vmatprep.subr.mxu0 0.0
    %71 = vmatpush1.msra.mxu0 0.0
    %72 = vmatprep.subr.mxu0 0.0
    %73 = vmatpush1.msra.mxu0 0.0
    %74 = vmatprep.subr.mxu0 0.0
    %75 = vmatpush1.msra.mxu0 0.0
    %76 = vmatprep.subr.mxu0 0.0
    %77 = vmatpush1.msra.mxu0 0.0
    %78 = vmatprep.subr.mxu0 0.0
    %79 = vmatpush1.msra.mxu0 0.0
    %80 = vmatprep.subr.mxu0 0.0
    %81 = vmatpush1.msra.mxu0 0.0
    %82 = vmatprep.subr.mxu0 0.0
    %83 = vmatpush1.msra.mxu0 %v53
    %84 = vmatprep.subr.mxu0 0.0
    %85 = vmatpush1.msra.mxu0 %v52
    %86 = vmatprep.subr.mxu0 0.0
    %87 = vmatpush1.msra.mxu0 %v51
    %88 = vmatprep.subr.mxu0 0.0
    %89 = vmatpush1.msra.mxu0 %v50
    %90 = vmatprep.subr.mxu0 0.0
    %91 = vmatpush2.msra.mxu0 0.0
    %92 = vmatprep.subr.mxu0 0.0
    %93 = vmatpush2.msra.mxu0 0.0
    %94 = vmatprep.subr.mxu0 0.0
    %95 = vmatpush2.msra.mxu0 0.0
    %96 = vmatprep.subr.mxu0 0.0
    %97 = vmatpush2.msra.mxu0 0.0
    %98 = vmatprep.subr.mxu0 0.0
    %99 = vmatpush2.msra.mxu0 0.0
    %100 = vmatprep.subr.mxu0 0.0
    %101 = vmatpush2.msra.mxu0 0.0
    %102 = vmatprep.subr.mxu0 0.0
    %103 = vmatpush2.msra.mxu0 0.0
    %104 = vmatprep.subr.mxu0 0.0
    %105 = vmatpush2.msra.mxu0 0.0
    %106 = vmatprep.subr.mxu0 0.0
    %107 = vmatpush2.msra.mxu0 0.0
    %108 = vmatprep.subr.mxu0 0.0
    %109 = vmatpush2.msra.mxu0 0.0
    %110 = vmatprep.subr.mxu0 0.0
    %111 = vmatpush2.msra.mxu0 0.0
    %112 = vmatprep.subr.mxu0 0.0
    %113 = vmatpush2.msra.mxu0 0.0
    %114 = vmatprep.subr.mxu0 0.0
    %115 = vmatpush2.msra.mxu0 0.0
    %116 = vmatprep.subr.mxu0 0.0
    %117 = vmatpush2.msra.mxu0 0.0
    %118 = vmatprep.subr.mxu0 0.0
    %119 = vmatpush2.msra.mxu0 0.0
    %120 = vmatprep.subr.mxu0 0.0
    %121 = vmatpush2.msra.mxu0 0.0
    %122 = vmatprep.mubr.f32.mxu0 0.0
    %123 = vmatmul.mubr.f32.gmra.mxu0 %v56
    %v124 = vpop.f32.mrf.mxu0
    %v125 = vadd.f32 0.0, %v124
    %v126 = vpop.f32.mrf.mxu0
    %127 = vdwg.mxu0
    %vm128 = vcmask 123904
    %129 = vst.msk [vmem:[#allocation2] sm:$0x3] %vm128, %v125
    // Predicated region
    $region18: #{_lambda_.7} parent=1 // pred_check
      _
    $region19: #{_lambda_.7} parent=1 // pred_check_branch
      %131 = sbr.rel (0) target = $region21
    $region20: #{_lambda_.7} parent=1 // pred_region
      %s133 = ssub.s32 32, 32
      %134 = vsyncadd [#allocation3], %s133
      %s136 = sshll.u32 [#allocation2], 4
      %s137 = int_to_ptr.vmem [resolvable:$true] %s136
      %139 = dma.vmem_to_hbm [thread:$0]  %s137, 32, %s4, [#allocation3]
    $region21: #{_lambda_.7} parent=1 // pred_fallthru
      _
    // Predicated region
    $region22: #{_lambda_.7} parent=1 // pred_check
      _
    $region23: #{_lambda_.7} parent=1 // pred_check_branch
      %141 = sbr.rel (0) target = $region25
    $region24: #{_lambda_.7} parent=1 // pred_region
      %142 = dma.done [#allocation3], 32
    $region25: #{_lambda_.7} parent=1 // pred_fallthru
      _
    %143 = vsyncpa [#allocation3], 1

// kernel: _lambda_.5
$region0: #{_lambda_.5}
  #allocation0 [shape = 'u32[]', space=smem, size = 0x4, offset = 0x4, fixed_abs, tag = 'smem constant byte address 0x4 - core index']
  #allocation1 [shape = 'u32[144,128]{1,0:T(1,128)}', space=vmem, size = 0x12000, scoped, tag = 'internal scratch']
  %s0 = inlined_call_operand.vmem [shape: f32[2,5,32], index: 0, kind: input, shape index: {}]
  %s1 = inlined_call_operand.vmem [shape: f32[1,32], index: 1, kind: input, shape index: {}]
  %s2 = inlined_call_operand.vmem [shape: f32[1,32], index: 2, kind: input, shape index: {}]
  %s3 = inlined_call_operand.vmem [shape: f32[32,96], index: 3, kind: input, shape index: {}]
  %s4 = inlined_call_operand.vmem [shape: f32[1,96], index: 4, kind: input, shape index: {}]
  %s5 = inlined_call_operand.vmem [shape: f32[32,4], index: 5, kind: input, shape index: {}]
  %s6 = inlined_call_operand.vmem [shape: f32[4,32], index: 6, kind: input, shape index: {}]
  %s7 = inlined_call_operand.vmem [shape: f32[32,4], index: 7, kind: input, shape index: {}]
  %s8 = inlined_call_operand.vmem [shape: f32[4,32], index: 8, kind: input, shape index: {}]
  %s9 = inlined_call_operand.vmem [shape: f32[32,32], index: 9, kind: input, shape index: {}]
  %s10 = inlined_call_operand.vmem [shape: f32[1,32], index: 10, kind: input, shape index: {}]
  %s11 = inlined_call_operand.vmem [shape: f32[1,32], index: 11, kind: input, shape index: {}]
  %s12 = inlined_call_operand.vmem [shape: f32[1,32], index: 12, kind: input, shape index: {}]
  %s13 = inlined_call_operand.vmem [shape: f32[32,64], index: 13, kind: input, shape index: {}]
  %s14 = inlined_call_operand.vmem [shape: f32[1,64], index: 14, kind: input, shape index: {}]
  %s15 = inlined_call_operand.vmem [shape: f32[64,32], index: 15, kind: input, shape index: {}]
  %s16 = inlined_call_operand.vmem [shape: f32[1,32], index: 16, kind: input, shape index: {}]
  %s17 = inlined_call_operand.vmem [shape: f32[2,5,32], index: 17, kind: output, shape index: {}]
  %s18 = sld [smem:[#allocation0]]
  $region101: #{_lambda_.5} parent=0
    _
  %s20 = ssub.s32 1, %s18
  %s21 = scalar_select 0, %s20, %s18
  loop: start=0, step=1, limit=4
  $region2: #{_lambda_.5} parent=0 // loop_pre_header
    _
  $region3: #{_lambda_.5} parent=0 // loop_header
    %s23 = sphi 0, %s27
    %p24 = scmp.ge.s32.totalorder %s23, 4
    %s33 = sphi 0, %s35
    %s36 = sphi 0, %s33
    %s37 = sphi 0, %s36
    %s53 = sphi 0, %s37
    %s57 = sphi 0, %s57
    %s59 = sphi 0, %s57
    %s60 = sphi 0, %s59
    %s74 = sphi 0, %s60
    %s78 = sphi 0, %s78
    %s80 = sphi 0, %s78
    %s81 = sphi 0, %s80
    %s95 = sphi 0, %s81
    %s99 = sphi 0, %s99
    %s101 = sphi 0, %s99
    %s102 = sphi 0, %s101
    %s116 = sphi 0, %s102
    %s120 = sphi 0, %s120
    %s122 = sphi 0, %s120
    %s123 = sphi 0, %s122
    %s137 = sphi 0, %s123
    %s141 = sphi 0, %s141
    %s143 = sphi 0, %s141
    %s144 = sphi 0, %s143
    %s158 = sphi 0, %s144
    %s162 = sphi 0, %s162
    %s164 = sphi 0, %s162
    %s165 = sphi 0, %s164
    %s179 = sphi 0, %s165
    %s183 = sphi 0, %s183
    %s185 = sphi 0, %s183
    %s186 = sphi 0, %s185
    %s200 = sphi 0, %s186
    %s204 = sphi 0, %s204
    %s206 = sphi 0, %s204
    %s207 = sphi 0, %s206
    %s221 = sphi 0, %s207
    %s225 = sphi 0, %s225
    %s227 = sphi 0, %s225
    %s228 = sphi 0, %s227
    %s242 = sphi 0, %s228
    %s246 = sphi 0, %s246
    %s248 = sphi 0, %s246
    %s249 = sphi 0, %s248
    %s263 = sphi 0, %s249
    %s267 = sphi 0, %s267
    %s269 = sphi 0, %s267
    %s270 = sphi 0, %s269
    %s284 = sphi 0, %s270
    %s288 = sphi 0, %s288
    %s290 = sphi 0, %s288
    %s291 = sphi 0, %s290
    %s305 = sphi 0, %s291
    %s309 = sphi 0, %s309
    %s311 = sphi 0, %s309
    %s312 = sphi 0, %s311
    %s326 = sphi 0, %s312
    %s330 = sphi 0, %s330
    %s332 = sphi 0, %s330
    %s333 = sphi 0, %s332
    %s347 = sphi 0, %s333
    %s351 = sphi 0, %s351
    %s353 = sphi 0, %s351
    %s354 = sphi 0, %s353
    %s368 = sphi 0, %s354
    %s372 = sphi 0, %s372
    %s374 = sphi 0, %s372
    %s375 = sphi 0, %s374
    %s389 = sphi 0, %s375
    %s395 = sphi 0, %s397
    %s398 = sphi 0, %s395
    %s399 = sphi 0, %s398
    %s415 = sphi 0, %s399
  $region4: #{_lambda_.5} parent=0 // loop_header_branch
    %26 = sbr.rel (%p24) target = $region8
  $region5: #{_lambda_.5} parent=0 // loop_body
    %s28 = ssub.s32 %s23, 1
    %s29 = ssub.s32 %s23, 2
    %s30 = sadd.s32 %s23, 1
    %s31 = ssub.s32 %s23, %s30
    %p32 = scmp.eq.s32.totalorder %s31, 0
    %s34 = sadd.s32 %s33, 1
    %s35 = scalar_select %p32, %s33, %s34
    %p38 = pneg %p32
    %p39 = scmp.eq.s32.totalorder %s23, 1
    %p40 = por %p38, %p39
    %p41 = scmp.ne.s32.totalorder %s33, %s36
    %p42 = scmp.eq.s32.totalorder %s23, 0
    %p43 = por %p41, %p42
    %p44 = scmp.ne.s32.totalorder %s33, %s36
    %p45 = scmp.eq.s32.totalorder %s28, 1
    %p46 = por %p44, %p45
    %p47 = scmp.ne.s32.totalorder %s36, %s37
    %p48 = scmp.eq.s32.totalorder %s28, 0
    %p49 = por %p47, %p48
    %p50 = scmp.ne.s32.totalorder %s36, %s37
    %p51 = scmp.eq.s32.totalorder %s29, 1
    %p52 = por %p50, %p51
    %p54 = scmp.ne.s32.totalorder %s37, %s53
    %p55 = scmp.eq.s32.totalorder %s29, 0
    %p56 = por %p54, %p55
    %s58 = sadd.s32 %s57, 1
    %p61 = scmp.eq.s32.totalorder %s23, 1
    %p62 = scmp.ne.s32.totalorder %s57, %s59
    %p63 = scmp.eq.s32.totalorder %s23, 0
    %p64 = por %p62, %p63
    %p65 = scmp.ne.s32.totalorder %s57, %s59
    %p66 = scmp.eq.s32.totalorder %s28, 1
    %p67 = por %p65, %p66
    %p68 = scmp.ne.s32.totalorder %s59, %s60
    %p69 = scmp.eq.s32.totalorder %s28, 0
    %p70 = por %p68, %p69
    %p71 = scmp.ne.s32.totalorder %s59, %s60
    %p72 = scmp.eq.s32.totalorder %s29, 1
    %p73 = por %p71, %p72
    %p75 = scmp.ne.s32.totalorder %s60, %s74
    %p76 = scmp.eq.s32.totalorder %s29, 0
    %p77 = por %p75, %p76
    %s79 = sadd.s32 %s78, 1
    %p82 = scmp.eq.s32.totalorder %s23, 1
    %p83 = scmp.ne.s32.totalorder %s78, %s80
    %p84 = scmp.eq.s32.totalorder %s23, 0
    %p85 = por %p83, %p84
    %p86 = scmp.ne.s32.totalorder %s78, %s80
    %p87 = scmp.eq.s32.totalorder %s28, 1
    %p88 = por %p86, %p87
    %p89 = scmp.ne.s32.totalorder %s80, %s81
    %p90 = scmp.eq.s32.totalorder %s28, 0
    %p91 = por %p89, %p90
    %p92 = scmp.ne.s32.totalorder %s80, %s81
    %p93 = scmp.eq.s32.totalorder %s29, 1
    %p94 = por %p92, %p93
    %p96 = scmp.ne.s32.totalorder %s81, %s95
    %p97 = scmp.eq.s32.totalorder %s29, 0
    %p98 = por %p96, %p97
    %s100 = sadd.s32 %s99, 1
    %p103 = scmp.eq.s32.totalorder %s23, 1
    %p104 = scmp.ne.s32.totalorder %s99, %s101
    %p105 = scmp.eq.s32.totalorder %s23, 0
    %p106 = por %p104, %p105
    %p107 = scmp.ne.s32.totalorder %s99, %s101
    %p108 = scmp.eq.s32.totalorder %s28, 1
    %p109 = por %p107, %p108
    %p110 = scmp.ne.s32.totalorder %s101, %s102
    %p111 = scmp.eq.s32.totalorder %s28, 0
    %p112 = por %p110, %p111
    %p113 = scmp.ne.s32.totalorder %s101, %s102
    %p114 = scmp.eq.s32.totalorder %s29, 1
    %p115 = por %p113, %p114
    %p117 = scmp.ne.s32.totalorder %s102, %s116
    %p118 = scmp.eq.s32.totalorder %s29, 0
    %p119 = por %p117, %p118
    %s121 = sadd.s32 %s120, 1
    %p124 = scmp.eq.s32.totalorder %s23, 1
    %p125 = scmp.ne.s32.totalorder %s120, %s122
    %p126 = scmp.eq.s32.totalorder %s23, 0
    %p127 = por %p125, %p126
    %p128 = scmp.ne.s32.totalorder %s120, %s122
    %p129 = scmp.eq.s32.totalorder %s28, 1
    %p130 = por %p128, %p129
    %p131 = scmp.ne.s32.totalorder %s122, %s123
    %p132 = scmp.eq.s32.totalorder %s28, 0
    %p133 = por %p131, %p132
    %p134 = scmp.ne.s32.totalorder %s122, %s123
    %p135 = scmp.eq.s32.totalorder %s29, 1
    %p136 = por %p134, %p135
    %p138 = scmp.ne.s32.totalorder %s123, %s137
    %p139 = scmp.eq.s32.totalorder %s29, 0
    %p140 = por %p138, %p139
    %s142 = sadd.s32 %s141, 1
    %p145 = scmp.eq.s32.totalorder %s23, 1
    %p146 = scmp.ne.s32.totalorder %s141, %s143
    %p147 = scmp.eq.s32.totalorder %s23, 0
    %p148 = por %p146, %p147
    %p149 = scmp.ne.s32.totalorder %s141, %s143
    %p150 = scmp.eq.s32.totalorder %s28, 1
    %p151 = por %p149, %p150
    %p152 = scmp.ne.s32.totalorder %s143, %s144
    %p153 = scmp.eq.s32.totalorder %s28, 0
    %p154 = por %p152, %p153
    %p155 = scmp.ne.s32.totalorder %s143, %s144
    %p156 = scmp.eq.s32.totalorder %s29, 1
    %p157 = por %p155, %p156
    %p159 = scmp.ne.s32.totalorder %s144, %s158
    %p160 = scmp.eq.s32.totalorder %s29, 0
    %p161 = por %p159, %p160
    %s163 = sadd.s32 %s162, 1
    %p166 = scmp.eq.s32.totalorder %s23, 1
    %p167 = scmp.ne.s32.totalorder %s162, %s164
    %p168 = scmp.eq.s32.totalorder %s23, 0
    %p169 = por %p167, %p168
    %p170 = scmp.ne.s32.totalorder %s162, %s164
    %p171 = scmp.eq.s32.totalorder %s28, 1
    %p172 = por %p170, %p171
    %p173 = scmp.ne.s32.totalorder %s164, %s165
    %p174 = scmp.eq.s32.totalorder %s28, 0
    %p175 = por %p173, %p174
    %p176 = scmp.ne.s32.totalorder %s164, %s165
    %p177 = scmp.eq.s32.totalorder %s29, 1
    %p178 = por %p176, %p177
    %p180 = scmp.ne.s32.totalorder %s165, %s179
    %p181 = scmp.eq.s32.totalorder %s29, 0
    %p182 = por %p180, %p181
    %s184 = sadd.s32 %s183, 1
    %p187 = scmp.eq.s32.totalorder %s23, 1
    %p188 = scmp.ne.s32.totalorder %s183, %s185
    %p189 = scmp.eq.s32.totalorder %s23, 0
    %p190 = por %p188, %p189
    %p191 = scmp.ne.s32.totalorder %s183, %s185
    %p192 = scmp.eq.s32.totalorder %s28, 1
    %p193 = por %p191, %p192
    %p194 = scmp.ne.s32.totalorder %s185, %s186
    %p195 = scmp.eq.s32.totalorder %s28, 0
    %p196 = por %p194, %p195
    %p197 = scmp.ne.s32.totalorder %s185, %s186
    %p198 = scmp.eq.s32.totalorder %s29, 1
    %p199 = por %p197, %p198
    %p201 = scmp.ne.s32.totalorder %s186, %s200
    %p202 = scmp.eq.s32.totalorder %s29, 0
    %p203 = por %p201, %p202
    %s205 = sadd.s32 %s204, 1
    %p208 = scmp.eq.s32.totalorder %s23, 1
    %p209 = scmp.ne.s32.totalorder %s204, %s206
    %p210 = scmp.eq.s32.totalorder %s23, 0
    %p211 = por %p209, %p210
    %p212 = scmp.ne.s32.totalorder %s204, %s206
    %p213 = scmp.eq.s32.totalorder %s28, 1
    %p214 = por %p212, %p213
    %p215 = scmp.ne.s32.totalorder %s206, %s207
    %p216 = scmp.eq.s32.totalorder %s28, 0
    %p217 = por %p215, %p216
    %p218 = scmp.ne.s32.totalorder %s206, %s207
    %p219 = scmp.eq.s32.totalorder %s29, 1
    %p220 = por %p218, %p219
    %p222 = scmp.ne.s32.totalorder %s207, %s221
    %p223 = scmp.eq.s32.totalorder %s29, 0
    %p224 = por %p222, %p223
    %s226 = sadd.s32 %s225, 1
    %p229 = scmp.eq.s32.totalorder %s23, 1
    %p230 = scmp.ne.s32.totalorder %s225, %s227
    %p231 = scmp.eq.s32.totalorder %s23, 0
    %p232 = por %p230, %p231
    %p233 = scmp.ne.s32.totalorder %s225, %s227
    %p234 = scmp.eq.s32.totalorder %s28, 1
    %p235 = por %p233, %p234
    %p236 = scmp.ne.s32.totalorder %s227, %s228
    %p237 = scmp.eq.s32.totalorder %s28, 0
    %p238 = por %p236, %p237
    %p239 = scmp.ne.s32.totalorder %s227, %s228
    %p240 = scmp.eq.s32.totalorder %s29, 1
    %p241 = por %p239, %p240
    %p243 = scmp.ne.s32.totalorder %s228, %s242
    %p244 = scmp.eq.s32.totalorder %s29, 0
    %p245 = por %p243, %p244
    %s247 = sadd.s32 %s246, 1
    %p250 = scmp.eq.s32.totalorder %s23, 1
    %p251 = scmp.ne.s32.totalorder %s246, %s248
    %p252 = scmp.eq.s32.totalorder %s23, 0
    %p253 = por %p251, %p252
    %p254 = scmp.ne.s32.totalorder %s246, %s248
    %p255 = scmp.eq.s32.totalorder %s28, 1
    %p256 = por %p254, %p255
    %p257 = scmp.ne.s32.totalorder %s248, %s249
    %p258 = scmp.eq.s32.totalorder %s28, 0
    %p259 = por %p257, %p258
    %p260 = scmp.ne.s32.totalorder %s248, %s249
    %p261 = scmp.eq.s32.totalorder %s29, 1
    %p262 = por %p260, %p261
    %p264 = scmp.ne.s32.totalorder %s249, %s263
    %p265 = scmp.eq.s32.totalorder %s29, 0
    %p266 = por %p264, %p265
    %s268 = sadd.s32 %s267, 1
    %p271 = scmp.eq.s32.totalorder %s23, 1
    %p272 = scmp.ne.s32.totalorder %s267, %s269
    %p273 = scmp.eq.s32.totalorder %s23, 0
    %p274 = por %p272, %p273
    %p275 = scmp.ne.s32.totalorder %s267, %s269
    %p276 = scmp.eq.s32.totalorder %s28, 1
    %p277 = por %p275, %p276
    %p278 = scmp.ne.s32.totalorder %s269, %s270
    %p279 = scmp.eq.s32.totalorder %s28, 0
    %p280 = por %p278, %p279
    %p281 = scmp.ne.s32.totalorder %s269, %s270
    %p282 = scmp.eq.s32.totalorder %s29, 1
    %p283 = por %p281, %p282
    %p285 = scmp.ne.s32.totalorder %s270, %s284
    %p286 = scmp.eq.s32.totalorder %s29, 0
    %p287 = por %p285, %p286
    %s289 = sadd.s32 %s288, 1
    %p292 = scmp.eq.s32.totalorder %s23, 1
    %p293 = scmp.ne.s32.totalorder %s288, %s290
    %p294 = scmp.eq.s32.totalorder %s23, 0
    %p295 = por %p293, %p294
    %p296 = scmp.ne.s32.totalorder %s288, %s290
    %p297 = scmp.eq.s32.totalorder %s28, 1
    %p298 = por %p296, %p297
    %p299 = scmp.ne.s32.totalorder %s290, %s291
    %p300 = scmp.eq.s32.totalorder %s28, 0
    %p301 = por %p299, %p300
    %p302 = scmp.ne.s32.totalorder %s290, %s291
    %p303 = scmp.eq.s32.totalorder %s29, 1
    %p304 = por %p302, %p303
    %p306 = scmp.ne.s32.totalorder %s291, %s305
    %p307 = scmp.eq.s32.totalorder %s29, 0
    %p308 = por %p306, %p307
    %s310 = sadd.s32 %s309, 1
    %p313 = scmp.eq.s32.totalorder %s23, 1
    %p314 = scmp.ne.s32.totalorder %s309, %s311
    %p315 = scmp.eq.s32.totalorder %s23, 0
    %p316 = por %p314, %p315
    %p317 = scmp.ne.s32.totalorder %s309, %s311
    %p318 = scmp.eq.s32.totalorder %s28, 1
    %p319 = por %p317, %p318
    %p320 = scmp.ne.s32.totalorder %s311, %s312
    %p321 = scmp.eq.s32.totalorder %s28, 0
    %p322 = por %p320, %p321
    %p323 = scmp.ne.s32.totalorder %s311, %s312
    %p324 = scmp.eq.s32.totalorder %s29, 1
    %p325 = por %p323, %p324
    %p327 = scmp.ne.s32.totalorder %s312, %s326
    %p328 = scmp.eq.s32.totalorder %s29, 0
    %p329 = por %p327, %p328
    %s331 = sadd.s32 %s330, 1
    %p334 = scmp.eq.s32.totalorder %s23, 1
    %p335 = scmp.ne.s32.totalorder %s330, %s332
    %p336 = scmp.eq.s32.totalorder %s23, 0
    %p337 = por %p335, %p336
    %p338 = scmp.ne.s32.totalorder %s330, %s332
    %p339 = scmp.eq.s32.totalorder %s28, 1
    %p340 = por %p338, %p339
    %p341 = scmp.ne.s32.totalorder %s332, %s333
    %p342 = scmp.eq.s32.totalorder %s28, 0
    %p343 = por %p341, %p342
    %p344 = scmp.ne.s32.totalorder %s332, %s333
    %p345 = scmp.eq.s32.totalorder %s29, 1
    %p346 = por %p344, %p345
    %p348 = scmp.ne.s32.totalorder %s333, %s347
    %p349 = scmp.eq.s32.totalorder %s29, 0
    %p350 = por %p348, %p349
    %s352 = sadd.s32 %s351, 1
    %p355 = scmp.eq.s32.totalorder %s23, 1
    %p356 = scmp.ne.s32.totalorder %s351, %s353
    %p357 = scmp.eq.s32.totalorder %s23, 0
    %p358 = por %p356, %p357
    %p359 = scmp.ne.s32.totalorder %s351, %s353
    %p360 = scmp.eq.s32.totalorder %s28, 1
    %p361 = por %p359, %p360
    %p362 = scmp.ne.s32.totalorder %s353, %s354
    %p363 = scmp.eq.s32.totalorder %s28, 0
    %p364 = por %p362, %p363
    %p365 = scmp.ne.s32.totalorder %s353, %s354
    %p366 = scmp.eq.s32.totalorder %s29, 1
    %p367 = por %p365, %p366
    %p369 = scmp.ne.s32.totalorder %s354, %s368
    %p370 = scmp.eq.s32.totalorder %s29, 0
    %p371 = por %p369, %p370
    %s373 = sadd.s32 %s372, 1
    %p376 = scmp.eq.s32.totalorder %s23, 1
    %p377 = scmp.ne.s32.totalorder %s372, %s374
    %p378 = scmp.eq.s32.totalorder %s23, 0
    %p379 = por %p377, %p378
    %p380 = scmp.ne.s32.totalorder %s372, %s374
    %p381 = scmp.eq.s32.totalorder %s28, 1
    %p382 = por %p380, %p381
    %p383 = scmp.ne.s32.totalorder %s374, %s375
    %p384 = scmp.eq.s32.totalorder %s28, 0
    %p385 = por %p383, %p384
    %p386 = scmp.ne.s32.totalorder %s374, %s375
    %p387 = scmp.eq.s32.totalorder %s29, 1
    %p388 = por %p386, %p387
    %p390 = scmp.ne.s32.totalorder %s375, %s389
    %p391 = scmp.eq.s32.totalorder %s29, 0
    %p392 = por %p390, %p391
    %s393 = ssub.s32 %s23, %s30
    %p394 = scmp.eq.s32.totalorder %s393, 0
    %s396 = sadd.s32 %s395, 1
    %s397 = scalar_select %p394, %s395, %s396
    %p400 = pneg %p394
    %p401 = scmp.eq.s32.totalorder %s23, 1
    %p402 = por %p400, %p401
    %p403 = scmp.ne.s32.totalorder %s395, %s398
    %p404 = scmp.eq.s32.totalorder %s23, 0
    %p405 = por %p403, %p404
    %p406 = scmp.ne.s32.totalorder %s395, %s398
    %p407 = scmp.eq.s32.totalorder %s28, 1
    %p408 = por %p406, %p407
    %p409 = scmp.ne.s32.totalorder %s398, %s399
    %p410 = scmp.eq.s32.totalorder %s28, 0
    %p411 = por %p409, %p410
    %p412 = scmp.ne.s32.totalorder %s398, %s399
    %p413 = scmp.eq.s32.totalorder %s29, 1
    %p414 = por %p412, %p413
    %p416 = scmp.ne.s32.totalorder %s399, %s415
    %p417 = scmp.eq.s32.totalorder %s29, 0
    %p418 = por %p416, %p417
    %p419 = scmp.le.s32.totalorder 1, %s23
    %p420 = scmp.lt.s32.totalorder %s23, 3
    %p421 = pnand %p419, %p420
    %p422 = pneg %p421
    // Predicated region
    $region9: #{_lambda_.5} parent=5 // pred_check
      _
    $region10: #{_lambda_.5} parent=5 // pred_check_branch
      %424 = sbr.rel (%p421) target = $region12
    $region11: #{_lambda_.5} parent=5 // pred_region
      %s425 = ssub.s32 %s23, 1
      // Predicated region
      $region13: #{_lambda_.5} parent=11 // pred_check
        %p426 = pneg %p70
      $region14: #{_lambda_.5} parent=11 // pred_check_branch
        %428 = sbr.rel (%p426) target = $region16
      $region15: #{_lambda_.5} parent=11 // pred_region
        _
      $region16: #{_lambda_.5} parent=11 // pred_fallthru
        _
      // Predicated region
      $region17: #{_lambda_.5} parent=11 // pred_check
        %p429 = pneg %p91
      $region18: #{_lambda_.5} parent=11 // pred_check_branch
        %431 = sbr.rel (%p429) target = $region20
      $region19: #{_lambda_.5} parent=11 // pred_region
        _
      $region20: #{_lambda_.5} parent=11 // pred_fallthru
        _
      // Predicated region
      $region21: #{_lambda_.5} parent=11 // pred_check
        %p432 = pneg %p112
      $region22: #{_lambda_.5} parent=11 // pred_check_branch
        %434 = sbr.rel (%p432) target = $region24
      $region23: #{_lambda_.5} parent=11 // pred_region
        _
      $region24: #{_lambda_.5} parent=11 // pred_fallthru
        _
      // Predicated region
      $region25: #{_lambda_.5} parent=11 // pred_check
        %p435 = pneg %p133
      $region26: #{_lambda_.5} parent=11 // pred_check_branch
        %437 = sbr.rel (%p435) target = $region28
      $region27: #{_lambda_.5} parent=11 // pred_region
        _
      $region28: #{_lambda_.5} parent=11 // pred_fallthru
        _
      // Predicated region
      $region29: #{_lambda_.5} parent=11 // pred_check
        %p438 = pneg %p154
      $region30: #{_lambda_.5} parent=11 // pred_check_branch
        %440 = sbr.rel (%p438) target = $region32
      $region31: #{_lambda_.5} parent=11 // pred_region
        _
      $region32: #{_lambda_.5} parent=11 // pred_fallthru
        _
      // Predicated region
      $region33: #{_lambda_.5} parent=11 // pred_check
        %p441 = pneg %p175
      $region34: #{_lambda_.5} parent=11 // pred_check_branch
        %443 = sbr.rel (%p441) target = $region36
      $region35: #{_lambda_.5} parent=11 // pred_region
        _
      $region36: #{_lambda_.5} parent=11 // pred_fallthru
        _
      // Predicated region
      $region37: #{_lambda_.5} parent=11 // pred_check
        %p444 = pneg %p196
      $region38: #{_lambda_.5} parent=11 // pred_check_branch
        %446 = sbr.rel (%p444) target = $region40
      $region39: #{_lambda_.5} parent=11 // pred_region
        _
      $region40: #{_lambda_.5} parent=11 // pred_fallthru
        _
      // Predicated region
      $region41: #{_lambda_.5} parent=11 // pred_check
        %p447 = pneg %p217
      $region42: #{_lambda_.5} parent=11 // pred_check_branch
        %449 = sbr.rel (%p447) target = $region44
      $region43: #{_lambda_.5} parent=11 // pred_region
        _
      $region44: #{_lambda_.5} parent=11 // pred_fallthru
        _
      // Predicated region
      $region45: #{_lambda_.5} parent=11 // pred_check
        %p450 = pneg %p238
      $region46: #{_lambda_.5} parent=11 // pred_check_branch
        %452 = sbr.rel (%p450) target = $region48
      $region47: #{_lambda_.5} parent=11 // pred_region
        _
      $region48: #{_lambda_.5} parent=11 // pred_fallthru
        _
      // Predicated region
      $region49: #{_lambda_.5} parent=11 // pred_check
        %p453 = pneg %p259
      $region50: #{_lambda_.5} parent=11 // pred_check_branch
        %455 = sbr.rel (%p453) target = $region52
      $region51: #{_lambda_.5} parent=11 // pred_region
        _
      $region52: #{_lambda_.5} parent=11 // pred_fallthru
        _
      // Predicated region
      $region53: #{_lambda_.5} parent=11 // pred_check
        %p456 = pneg %p280
      $region54: #{_lambda_.5} parent=11 // pred_check_branch
        %458 = sbr.rel (%p456) target = $region56
      $region55: #{_lambda_.5} parent=11 // pred_region
        _
      $region56: #{_lambda_.5} parent=11 // pred_fallthru
        _
      // Predicated region
      $region57: #{_lambda_.5} parent=11 // pred_check
        %p459 = pneg %p301
      $region58: #{_lambda_.5} parent=11 // pred_check_branch
        %461 = sbr.rel (%p459) target = $region60
      $region59: #{_lambda_.5} parent=11 // pred_region
        _
      $region60: #{_lambda_.5} parent=11 // pred_fallthru
        _
      // Predicated region
      $region61: #{_lambda_.5} parent=11 // pred_check
        %p462 = pneg %p322
      $region62: #{_lambda_.5} parent=11 // pred_check_branch
        %464 = sbr.rel (%p462) target = $region64
      $region63: #{_lambda_.5} parent=11 // pred_region
        _
      $region64: #{_lambda_.5} parent=11 // pred_fallthru
        _
      // Predicated region
      $region65: #{_lambda_.5} parent=11 // pred_check
        %p465 = pneg %p343
      $region66: #{_lambda_.5} parent=11 // pred_check_branch
        %467 = sbr.rel (%p465) target = $region68
      $region67: #{_lambda_.5} parent=11 // pred_region
        _
      $region68: #{_lambda_.5} parent=11 // pred_fallthru
        _
      // Predicated region
      $region69: #{_lambda_.5} parent=11 // pred_check
        %p468 = pneg %p364
      $region70: #{_lambda_.5} parent=11 // pred_check_branch
        %470 = sbr.rel (%p468) target = $region72
      $region71: #{_lambda_.5} parent=11 // pred_region
        _
      $region72: #{_lambda_.5} parent=11 // pred_fallthru
        _
      // Predicated region
      $region73: #{_lambda_.5} parent=11 // pred_check
        %p471 = pneg %p385
      $region74: #{_lambda_.5} parent=11 // pred_check_branch
        %473 = sbr.rel (%p471) target = $region76
      $region75: #{_lambda_.5} parent=11 // pred_region
        _
      $region76: #{_lambda_.5} parent=11 // pred_fallthru
        _
    $region12: #{_lambda_.5} parent=5 // pred_fallthru
      _
    %p474 = scmp.lt.s32.totalorder %s23, 2
    // Predicated region
    $region77: #{_lambda_.5} parent=5 // pred_check
      %p475 = pneg %p474
    $region78: #{_lambda_.5} parent=5 // pred_check_branch
      %477 = sbr.rel (%p475) target = $region80
    $region79: #{_lambda_.5} parent=5 // pred_region
      // Predicated region
      $region81: #{_lambda_.5} parent=79 // pred_check
        %p478 = pneg %p43
      $region82: #{_lambda_.5} parent=79 // pred_check_branch
        %480 = sbr.rel (%p478) target = $region84
      $region83: #{_lambda_.5} parent=79 // pred_region
        %p481 = scmp.lt.s32.totalorder %s23, 1
        %s482 = scalar_select %p481, %s23, 1
        %s483 = smul.addr %s482, 8
        %s484 = scalar_lea.vmem %s0, %s483
      $region84: #{_lambda_.5} parent=79 // pred_fallthru
        _
    $region80: #{_lambda_.5} parent=5 // pred_fallthru
      _
    %p485 = scmp.le.s32.totalorder 1, %s23
    %p486 = scmp.lt.s32.totalorder %s23, 3
    %p487 = pnand %p485, %p486
    %p488 = pneg %p487
    // Predicated region
    $region85: #{_lambda_.5} parent=5 // pred_check
      _
    $region86: #{_lambda_.5} parent=5 // pred_check_branch
      %490 = sbr.rel (%p487) target = $region88
    $region87: #{_lambda_.5} parent=5 // pred_region
      %s491 = ssub.s32 %s23, 1
      %p492 = scmp.lt.s32.totalorder %s28, 1
      %s493 = scalar_select %p492, %s28, 1
      %s494 = smul.addr %s493, 8
      %s495 = scalar_lea.vmem %s0, %s494
      %p496 = pneg %p49
      %p497 = pneg %p46
      %p498 = pneg %p70
      %p499 = pneg %p67
      %p500 = pneg %p91
      %p501 = pneg %p88
      %p502 = pneg %p112
      %p503 = pneg %p109
      %p504 = pneg %p133
      %p505 = pneg %p130
      %p506 = pneg %p154
      %p507 = pneg %p151
      %p508 = pneg %p175
      %p509 = pneg %p172
      %p510 = pneg %p196
      %p511 = pneg %p193
      %p512 = pneg %p217
      %p513 = pneg %p214
      %p514 = pneg %p238
      %p515 = pneg %p235
      %p516 = pneg %p259
      %p517 = pneg %p256
      %p518 = pneg %p280
      %p519 = pneg %p277
      %p520 = pneg %p301
      %p521 = pneg %p298
      %p522 = pneg %p322
      %p523 = pneg %p319
      %p524 = pneg %p343
      %p525 = pneg %p340
      %p526 = pneg %p364
      %p527 = pneg %p361
      %p528 = pneg %p385
      %p529 = pneg %p382
      %p530 = pneg %p411
      %p531 = pneg %p408
      %p532 = scmp.lt.s32.totalorder %s28, 1
      %s533 = scalar_select %p532, %s28, 1
      %s534 = smul.addr %s533, 8
      %s535 = scalar_lea.vmem %s17, %s534
      %p536 = scmp.lt.s32.totalorder %s28, 1
      %s537 = scalar_select %p536, %s28, 1
      %s538 = smul.addr %s537, 8
      %s539 = scalar_lea.vmem %s0, %s538
      %p540 = scmp.lt.s32.totalorder %s28, 1
      %s541 = scalar_select %p540, %s28, 1
      %s542 = smul.addr %s541, 8
      %s543 = scalar_lea.vmem %s17, %s542
      %v544 = vld [vmem:[%s539] sm:$0x1f]
      %v545 = vld [vmem:[%s1] sm:$0x1]
      %v546 = vld [vmem:[%s2] sm:$0x1]
      %vm547 = vcmask 258048
      %v548 = vsel %vm547, %v544, 0.0
      %549 = vadd.xlane.f32.xlu0 %v548
      %v550 = vpop.xlane.xlu0 %549
      %v551 = vrcp.pop 32.0
      %v552 = vmul.f32 %v550, %v551
      %v553 = vsub.f32 %v544, %v552
      %v554 = vmul.f32 %v553, %v553
      %v555 = vsel %vm547, %v554, 0.0
      %556 = vadd.xlane.f32.xlu0 %v555
      %v557 = vpop.xlane.xlu0 %556
      %v558 = vmul.f32 %v557, %v551
      %v559 = vadd.f32 %v558, 1e-05
      %v560 = vrsqrt.pop %v559
      %v561 = vmul.f32 %v553, %v560
      %v563 = vlaneseq
      %v564 = vshrl.u32 %v563, 7
      %v565 = vsub.s32 0, %v564
      %v566 = vrot.slane %v545, %v565
      %v568 = vmul.f32 %v561, %v566
      %v570 = vlaneseq
      %v571 = vshrl.u32 %v570, 7
      %v572 = vsub.s32 0, %v571
      %v573 = vrot.slane %v546, %v572
      %v575 = vadd.f32 %v568, %v573
      %v576 = vld [vmem:[%s3] sm:$0xff]
      %v577 = vld [vmem:[%s3 + $0x8] sm:$0xff]
      %v578 = vld [vmem:[%s3 + $0x10] sm:$0xff]
      %v579 = vld [vmem:[%s3 + $0x18] sm:$0xff]
      %v580 = vld [vmem:[%s4] sm:$0x1]
      %v582 = vlaneseq
      %v583 = vshrl.u32 %v582, 7
      %v584 = vsub.s32 0, %v583
      %v585 = vrot.slane %v580, %v584
      %vm587 = vcmask 261120
      %v589 = vsel %vm587, %v575, 0
      %591 = vmatprep.subr.mxu0 0.0
      %592 = vmatpush1.msra.mxu0 0.0
      %593 = vmatprep.subr.mxu0 0.0
      %594 = vmatpush1.msra.mxu0 0.0
      %595 = vmatprep.subr.mxu0 0.0
      %596 = vmatpush1.msra.mxu0 0.0
      %597 = vmatprep.subr.mxu0 0.0
      %598 = vmatpush1.msra.mxu0 0.0
      %599 = vmatprep.subr.mxu0 0.0
      %600 = vmatpush1.msra.mxu0 0.0
      %601 = vmatprep.subr.mxu0 0.0
      %602 = vmatpush1.msra.mxu0 0.0
      %603 = vmatprep.subr.mxu0 0.0
      %604 = vmatpush1.msra.mxu0 0.0
      %605 = vmatprep.subr.mxu0 0.0
      %606 = vmatpush1.msra.mxu0 0.0
      %607 = vmatprep.subr.mxu0 0.0
      %608 = vmatpush1.msra.mxu0 0.0
      %609 = vmatprep.subr.mxu0 0.0
      %610 = vmatpush1.msra.mxu0 0.0
      %611 = vmatprep.subr.mxu0 0.0
      %612 = vmatpush1.msra.mxu0 0.0
      %613 = vmatprep.subr.mxu0 0.0
      %614 = vmatpush1.msra.mxu0 0.0
      %615 = vmatprep.subr.mxu0 0.0
      %616 = vmatpush1.msra.mxu0 %v579
      %617 = vmatprep.subr.mxu0 0.0
      %618 = vmatpush1.msra.mxu0 %v578
      %619 = vmatprep.subr.mxu0 0.0
      %620 = vmatpush1.msra.mxu0 %v577
      %621 = vmatprep.subr.mxu0 0.0
      %622 = vmatpush1.msra.mxu0 %v576
      %623 = vmatprep.subr.mxu0 0.0
      %624 = vmatpush2.msra.mxu0 0.0
      %625 = vmatprep.subr.mxu0 0.0
      %626 = vmatpush2.msra.mxu0 0.0
      %627 = vmatprep.subr.mxu0 0.0
      %628 = vmatpush2.msra.mxu0 0.0
      %629 = vmatprep.subr.mxu0 0.0
      %630 = vmatpush2.msra.mxu0 0.0
      %631 = vmatprep.subr.mxu0 0.0
      %632 = vmatpush2.msra.mxu0 0.0
      %633 = vmatprep.subr.mxu0 0.0
      %634 = vmatpush2.msra.mxu0 0.0
      %635 = vmatprep.subr.mxu0 0.0
      %636 = vmatpush2.msra.mxu0 0.0
      %637 = vmatprep.subr.mxu0 0.0
      %638 = vmatpush2.msra.mxu0 0.0
      %639 = vmatprep.subr.mxu0 0.0
      %640 = vmatpush2.msra.mxu0 0.0
      %641 = vmatprep.subr.mxu0 0.0
      %642 = vmatpush2.msra.mxu0 0.0
      %643 = vmatprep.subr.mxu0 0.0
      %644 = vmatpush2.msra.mxu0 0.0
      %645 = vmatprep.subr.mxu0 0.0
      %646 = vmatpush2.msra.mxu0 0.0
      %647 = vmatprep.subr.mxu0 0.0
      %648 = vmatpush2.msra.mxu0 0.0
      %649 = vmatprep.subr.mxu0 0.0
      %650 = vmatpush2.msra.mxu0 0.0
      %651 = vmatprep.subr.mxu0 0.0
      %652 = vmatpush2.msra.mxu0 0.0
      %653 = vmatprep.subr.mxu0 0.0
      %654 = vmatpush2.msra.mxu0 0.0
      %655 = vmatprep.mubr.f32.mxu0 0.0
      %656 = vmatmul.mubr.f32.gmra.mxu0 %v589
      %v657 = vpop.f32.mrf.mxu0
      %v658 = vadd.f32 %v585, %v657
      %v659 = vpop.f32.mrf.mxu0
      %660 = vdwg.mxu0
      %v661 = vld [vmem:[%s5] sm:$0xff]
      %v662 = vld [vmem:[%s5 + $0x8] sm:$0xff]
      %v663 = vld [vmem:[%s5 + $0x10] sm:$0xff]
      %v664 = vld [vmem:[%s5 + $0x18] sm:$0xff]
      %665 = vmatprep.subr.mxu0 0.0
      %666 = vmatpush1.msra.mxu0 0.0
      %667 = vmatprep.subr.mxu0 0.0
      %668 = vmatpush1.msra.mxu0 0.0
      %669 = vmatprep.subr.mxu0 0.0
      %670 = vmatpush1.msra.mxu0 0.0
      %671 = vmatprep.subr.mxu0 0.0
      %672 = vmatpush1.msra.mxu0 0.0
      %673 = vmatprep.subr.mxu0 0.0
      %674 = vmatpush1.msra.mxu0 0.0
      %675 = vmatprep.subr.mxu0 0.0
      %676 = vmatpush1.msra.mxu0 0.0
      %677 = vmatprep.subr.mxu0 0.0
      %678 = vmatpush1.msra.mxu0 0.0
      %679 = vmatprep.subr.mxu0 0.0
      %680 = vmatpush1.msra.mxu0 0.0
      %681 = vmatprep.subr.mxu0 0.0
      %682 = vmatpush1.msra.mxu0 0.0
      %683 = vmatprep.subr.mxu0 0.0
      %684 = vmatpush1.msra.mxu0 0.0
      %685 = vmatprep.subr.mxu0 0.0
      %686 = vmatpush1.msra.mxu0 0.0
      %687 = vmatprep.subr.mxu0 0.0
      %688 = vmatpush1.msra.mxu0 0.0
      %689 = vmatprep.subr.mxu0 0.0
      %690 = vmatpush1.msra.mxu0 %v664
      %691 = vmatprep.subr.mxu0 0.0
      %692 = vmatpush1.msra.mxu0 %v663
      %693 = vmatprep.subr.mxu0 0.0
      %694 = vmatpush1.msra.mxu0 %v662
      %695 = vmatprep.subr.mxu0 0.0
      %696 = vmatpush1.msra.mxu0 %v661
      %697 = vmatprep.subr.mxu0 0.0
      %698 = vmatpush2.msra.mxu0 0.0
      %699 = vmatprep.subr.mxu0 0.0
      %700 = vmatpush2.msra.mxu0 0.0
      %701 = vmatprep.subr.mxu0 0.0
      %702 = vmatpush2.msra.mxu0 0.0
      %703 = vmatprep.subr.mxu0 0.0
      %704 = vmatpush2.msra.mxu0 0.0
      %705 = vmatprep.subr.mxu0 0.0
      %706 = vmatpush2.msra.mxu0 0.0
      %707 = vmatprep.subr.mxu0 0.0
      %708 = vmatpush2.msra.mxu0 0.0
      %709 = vmatprep.subr.mxu0 0.0
      %710 = vmatpush2.msra.mxu0 0.0
      %711 = vmatprep.subr.mxu0 0.0
      %712 = vmatpush2.msra.mxu0 0.0
      %713 = vmatprep.subr.mxu0 0.0
      %714 = vmatpush2.msra.mxu0 0.0
      %715 = vmatprep.subr.mxu0 0.0
      %716 = vmatpush2.msra.mxu0 0.0
      %717 = vmatprep.subr.mxu0 0.0
      %718 = vmatpush2.msra.mxu0 0.0
      %719 = vmatprep.subr.mxu0 0.0
      %720 = vmatpush2.msra.mxu0 0.0
      %721 = vmatprep.subr.mxu0 0.0
      %722 = vmatpush2.msra.mxu0 0.0
      %723 = vmatprep.subr.mxu0 0.0
      %724 = vmatpush2.msra.mxu0 0.0
      %725 = vmatprep.subr.mxu0 0.0
      %726 = vmatpush2.msra.mxu0 0.0
      %727 = vmatprep.subr.mxu0 0.0
      %728 = vmatpush2.msra.mxu0 0.0
      %729 = vmatprep.mubr.f32.mxu0 0.0
      %730 = vmatmul.mubr.f32.gmra.mxu0 %v589
      %v731 = vpop.f32.mrf.mxu0
      %v732 = vadd.f32 0.0, %v731
      %v733 = vpop.f32.mrf.mxu0
      %734 = vdwg.mxu0
      %v735 = vld [vmem:[%s6] sm:$0xf]
      %vm736 = vcmask 31744
      %v738 = vsel %vm736, %v732, 0
      %vm740 = vcmask 1043456
      %v742 = vsel %vm740, %v735, 0
      %744 = vmatprep.subr.mxu0 0.0
      %745 = vmatpush1.msra.mxu0 0.0
      %746 = vmatprep.subr.mxu0 0.0
      %747 = vmatpush1.msra.mxu0 0.0
      %748 = vmatprep.subr.mxu0 0.0
      %749 = vmatpush1.msra.mxu0 0.0
      %750 = vmatprep.subr.mxu0 0.0
      %751 = vmatpush1.msra.mxu0 0.0
      %752 = vmatprep.subr.mxu0 0.0
      %753 = vmatpush1.msra.mxu0 0.0
      %754 = vmatprep.subr.mxu0 0.0
      %755 = vmatpush1.msra.mxu0 0.0
      %756 = vmatprep.subr.mxu0 0.0
      %757 = vmatpush1.msra.mxu0 0.0
      %758 = vmatprep.subr.mxu0 0.0
      %759 = vmatpush1.msra.mxu0 0.0
      %760 = vmatprep.subr.mxu0 0.0
      %761 = vmatpush1.msra.mxu0 0.0
      %762 = vmatprep.subr.mxu0 0.0
      %763 = vmatpush1.msra.mxu0 0.0
      %764 = vmatprep.subr.mxu0 0.0
      %765 = vmatpush1.msra.mxu0 0.0
      %766 = vmatprep.subr.mxu0 0.0
      %767 = vmatpush1.msra.mxu0 0.0
      %768 = vmatprep.subr.mxu0 0.0
      %769 = vmatpush1.msra.mxu0 0.0
      %770 = vmatprep.subr.mxu0 0.0
      %771 = vmatpush1.msra.mxu0 0.0
      %772 = vmatprep.subr.mxu0 0.0
      %773 = vmatpush1.msra.mxu0 0.0
      %774 = vmatprep.subr.mxu0 0.0
      %775 = vmatpush1.msra.mxu0 %v742
      %776 = vmatprep.subr.mxu0 0.0
      %777 = vmatpush2.msra.mxu0 0.0
      %778 = vmatprep.subr.mxu0 0.0
      %779 = vmatpush2.msra.mxu0 0.0
      %780 = vmatprep.subr.mxu0 0.0
      %781 = vmatpush2.msra.mxu0 0.0
      %782 = vmatprep.subr.mxu0 0.0
      %783 = vmatpush2.msra.mxu0 0.0
      %784 = vmatprep.subr.mxu0 0.0
      %785 = vmatpush2.msra.mxu0 0.0
      %786 = vmatprep.subr.mxu0 0.0
      %787 = vmatpush2.msra.mxu0 0.0
      %788 = vmatprep.subr.mxu0 0.0
      %789 = vmatpush2.msra.mxu0 0.0
      %790 = vmatprep.subr.mxu0 0.0
      %791 = vmatpush2.msra.mxu0 0.0
      %792 = vmatprep.subr.mxu0 0.0
      %793 = vmatpush2.msra.mxu0 0.0
      %794 = vmatprep.subr.mxu0 0.0
      %795 = vmatpush2.msra.mxu0 0.0
      %796 = vmatprep.subr.mxu0 0.0
      %797 = vmatpush2.msra.mxu0 0.0
      %798 = vmatprep.subr.mxu0 0.0
      %799 = vmatpush2.msra.mxu0 0.0
      %800 = vmatprep.subr.mxu0 0.0
      %801 = vmatpush2.msra.mxu0 0.0
      %802 = vmatprep.subr.mxu0 0.0
      %803 = vmatpush2.msra.mxu0 0.0
      %804 = vmatprep.subr.mxu0 0.0
      %805 = vmatpush2.msra.mxu0 0.0
      %806 = vmatprep.subr.mxu0 0.0
      %807 = vmatpush2.msra.mxu0 0.0
      %808 = vmatprep.mubr.f32.mxu0 0.0
      %809 = vmatmul.mubr.f32.gmra.mxu0 %v738
      %v810 = vpop.f32.mrf.mxu0
      %v811 = vadd.f32 0.0, %v810
      %v812 = vpop.f32.mrf.mxu0
      %813 = vdwg.mxu0
      %v814 = vld [vmem:[%s7] sm:$0xff]
      %v815 = vld [vmem:[%s7 + $0x8] sm:$0xff]
      %v816 = vld [vmem:[%s7 + $0x10] sm:$0xff]
      %v817 = vld [vmem:[%s7 + $0x18] sm:$0xff]
      %818 = vmatprep.subr.mxu0 0.0
      %819 = vmatpush1.msra.mxu0 0.0
      %820 = vmatprep.subr.mxu0 0.0
      %821 = vmatpush1.msra.mxu0 0.0
      %822 = vmatprep.subr.mxu0 0.0
      %823 = vmatpush1.msra.mxu0 0.0
      %824 = vmatprep.subr.mxu0 0.0
      %825 = vmatpush1.msra.mxu0 0.0
      %826 = vmatprep.subr.mxu0 0.0
      %827 = vmatpush1.msra.mxu0 0.0
      %828 = vmatprep.subr.mxu0 0.0
      %829 = vmatpush1.msra.mxu0 0.0
      %830 = vmatprep.subr.mxu0 0.0
      %831 = vmatpush1.msra.mxu0 0.0
      %832 = vmatprep.subr.mxu0 0.0
      %833 = vmatpush1.msra.mxu0 0.0
      %834 = vmatprep.subr.mxu0 0.0
      %835 = vmatpush1.msra.mxu0 0.0
      %836 = vmatprep.subr.mxu0 0.0
      %837 = vmatpush1.msra.mxu0 0.0
      %838 = vmatprep.subr.mxu0 0.0
      %839 = vmatpush1.msra.mxu0 0.0
      %840 = vmatprep.subr.mxu0 0.0
      %841 = vmatpush1.msra.mxu0 0.0
      %842 = vmatprep.subr.mxu0 0.0
      %843 = vmatpush1.msra.mxu0 %v817
      %844 = vmatprep.subr.mxu0 0.0
      %845 = vmatpush1.msra.mxu0 %v816
      %846 = vmatprep.subr.mxu0 0.0
      %847 = vmatpush1.msra.mxu0 %v815
      %848 = vmatprep.subr.mxu0 0.0
      %849 = vmatpush1.msra.mxu0 %v814
      %850 = vmatprep.subr.mxu0 0.0
      %851 = vmatpush2.msra.mxu0 0.0
      %852 = vmatprep.subr.mxu0 0.0
      %853 = vmatpush2.msra.mxu0 0.0
      %854 = vmatprep.subr.mxu0 0.0
      %855 = vmatpush2.msra.mxu0 0.0
      %856 = vmatprep.subr.mxu0 0.0
      %857 = vmatpush2.msra.mxu0 0.0
      %858 = vmatprep.subr.mxu0 0.0
      %859 = vmatpush2.msra.mxu0 0.0
      %860 = vmatprep.subr.mxu0 0.0
      %861 = vmatpush2.msra.mxu0 0.0
      %862 = vmatprep.subr.mxu0 0.0
      %863 = vmatpush2.msra.mxu0 0.0
      %864 = vmatprep.subr.mxu0 0.0
      %865 = vmatpush2.msra.mxu0 0.0
      %866 = vmatprep.subr.mxu0 0.0
      %867 = vmatpush2.msra.mxu0 0.0
      %868 = vmatprep.subr.mxu0 0.0
      %869 = vmatpush2.msra.mxu0 0.0
      %870 = vmatprep.subr.mxu0 0.0
      %871 = vmatpush2.msra.mxu0 0.0
      %872 = vmatprep.subr.mxu0 0.0
      %873 = vmatpush2.msra.mxu0 0.0
      %874 = vmatprep.subr.mxu0 0.0
      %875 = vmatpush2.msra.mxu0 0.0
      %876 = vmatprep.subr.mxu0 0.0
      %877 = vmatpush2.msra.mxu0 0.0
      %878 = vmatprep.subr.mxu0 0.0
      %879 = vmatpush2.msra.mxu0 0.0
      %880 = vmatprep.subr.mxu0 0.0
      %881 = vmatpush2.msra.mxu0 0.0
      %882 = vmatprep.mubr.f32.mxu0 0.0
      %883 = vmatmul.mubr.f32.gmra.mxu0 %v589
      %v884 = vpop.f32.mrf.mxu0
      %v885 = vadd.f32 0.0, %v884
      %v886 = vpop.f32.mrf.mxu0
      %887 = vdwg.mxu0
      %v888 = vld [vmem:[%s8] sm:$0xf]
      %v890 = vsel %vm736, %v885, 0
      %v893 = vsel %vm740, %v888, 0
      %895 = vmatprep.subr.mxu0 0.0
      %896 = vmatpush1.msra.mxu0 0.0
      %897 = vmatprep.subr.mxu0 0.0
      %898 = vmatpush1.msra.mxu0 0.0
      %899 = vmatprep.subr.mxu0 0.0
      %900 = vmatpush1.msra.mxu0 0.0
      %901 = vmatprep.subr.mxu0 0.0
      %902 = vmatpush1.msra.mxu0 0.0
      %903 = vmatprep.subr.mxu0 0.0
      %904 = vmatpush1.msra.mxu0 0.0
      %905 = vmatprep.subr.mxu0 0.0
      %906 = vmatpush1.msra.mxu0 0.0
      %907 = vmatprep.subr.mxu0 0.0
      %908 = vmatpush1.msra.mxu0 0.0
      %909 = vmatprep.subr.mxu0 0.0
      %910 = vmatpush1.msra.mxu0 0.0
      %911 = vmatprep.subr.mxu0 0.0
      %912 = vmatpush1.msra.mxu0 0.0
      %913 = vmatprep.subr.mxu0 0.0
      %914 = vmatpush1.msra.mxu0 0.0
      %915 = vmatprep.subr.mxu0 0.0
      %916 = vmatpush1.msra.mxu0 0.0
      %917 = vmatprep.subr.mxu0 0.0
      %918 = vmatpush1.msra.mxu0 0.0
      %919 = vmatprep.subr.mxu0 0.0
      %920 = vmatpush1.msra.mxu0 0.0
      %921 = vmatprep.subr.mxu0 0.0
      %922 = vmatpush1.msra.mxu0 0.0
      %923 = vmatprep.subr.mxu0 0.0
      %924 = vmatpush1.msra.mxu0 0.0
      %925 = vmatprep.subr.mxu0 0.0
      %926 = vmatpush1.msra.mxu0 %v893
      %927 = vmatprep.subr.mxu0 0.0
      %928 = vmatpush2.msra.mxu0 0.0
      %929 = vmatprep.subr.mxu0 0.0
      %930 = vmatpush2.msra.mxu0 0.0
      %931 = vmatprep.subr.mxu0 0.0
      %932 = vmatpush2.msra.mxu0 0.0
      %933 = vmatprep.subr.mxu0 0.0
      %934 = vmatpush2.msra.mxu0 0.0
      %935 = vmatprep.subr.mxu0 0.0
      %936 = vmatpush2.msra.mxu0 0.0
      %937 = vmatprep.subr.mxu0 0.0
      %938 = vmatpush2.msra.mxu0 0.0
      %939 = vmatprep.subr.mxu0 0.0
      %940 = vmatpush2.msra.mxu0 0.0
      %941 = vmatprep.subr.mxu0 0.0
      %942 = vmatpush2.msra.mxu0 0.0
      %943 = vmatprep.subr.mxu0 0.0
      %944 = vmatpush2.msra.mxu0 0.0
      %945 = vmatprep.subr.mxu0 0.0
      %946 = vmatpush2.msra.mxu0 0.0
      %947 = vmatprep.subr.mxu0 0.0
      %948 = vmatpush2.msra.mxu0 0.0
      %949 = vmatprep.subr.mxu0 0.0
      %950 = vmatpush2.msra.mxu0 0.0
      %951 = vmatprep.subr.mxu0 0.0
      %952 = vmatpush2.msra.mxu0 0.0
      %953 = vmatprep.subr.mxu0 0.0
      %954 = vmatpush2.msra.mxu0 0.0
      %955 = vmatprep.subr.mxu0 0.0
      %956 = vmatpush2.msra.mxu0 0.0
      %957 = vmatprep.subr.mxu0 0.0
      %958 = vmatpush2.msra.mxu0 0.0
      %959 = vmatprep.mubr.f32.mxu0 0.0
      %960 = vmatmul.mubr.f32.gmra.mxu0 %v890
      %v961 = vpop.f32.mrf.mxu0
      %v962 = vadd.f32 0.0, %v961
      %v963 = vpop.f32.mrf.mxu0
      %964 = vdwg.mxu0
      %v965 = vmul.f32 %v811, 2.0
      %v966 = vadd.f32 %v658, %v965
      %v967 = vmul.f32 %v962, 2.0
      %969 = vrot.lane.b32.xlu0 %v967, 64
      %v970 = vpop.permute.xlu0 %969
      %v972 = vadd.f32 %v658, %v970
      %v973 = vmul.f32 %v966, 0.35355338
      %975 = vrot.lane.b32.xlu0 %v658, 96
      %v976 = vpop.permute.xlu0 %975
      %vm977 = vcmask 64512
      %v979 = vsel %vm977, %v973, 0
      %v981 = vsel %vm977, %v976, 0
      %983 = vmatprep.subr.mxu0 0.0
      %984 = vmatpush1.xpose.msra.mxu0 0.0
      %985 = vmatprep.subr.mxu0 0.0
      %986 = vmatpush1.xpose.msra.mxu0 0.0
      %987 = vmatprep.subr.mxu0 0.0
      %988 = vmatpush1.xpose.msra.mxu0 0.0
      %989 = vmatprep.subr.mxu0 0.0
      %990 = vmatpush1.xpose.msra.mxu0 0.0
      %991 = vmatprep.subr.mxu0 0.0
      %992 = vmatpush1.xpose.msra.mxu0 0.0
      %993 = vmatprep.subr.mxu0 0.0
      %994 = vmatpush1.xpose.msra.mxu0 0.0
      %995 = vmatprep.subr.mxu0 0.0
      %996 = vmatpush1.xpose.msra.mxu0 0.0
      %997 = vmatprep.subr.mxu0 0.0
      %998 = vmatpush1.xpose.msra.mxu0 0.0
      %999 = vmatprep.subr.mxu0 0.0
      %1000 = vmatpush1.xpose.msra.mxu0 0.0
      %1001 = vmatprep.subr.mxu0 0.0
      %1002 = vmatpush1.xpose.msra.mxu0 0.0
      %1003 = vmatprep.subr.mxu0 0.0
      %1004 = vmatpush1.xpose.msra.mxu0 0.0
      %1005 = vmatprep.subr.mxu0 0.0
      %1006 = vmatpush1.xpose.msra.mxu0 0.0
      %1007 = vmatprep.subr.mxu0 0.0
      %1008 = vmatpush1.xpose.msra.mxu0 0.0
      %1009 = vmatprep.subr.mxu0 0.0
      %1010 = vmatpush1.xpose.msra.mxu0 0.0
      %1011 = vmatprep.subr.mxu0 0.0
      %1012 = vmatpush1.xpose.msra.mxu0 0.0
      %1013 = vmatprep.subr.mxu0 0.0
      %1014 = vmatpush1.xpose.msra.mxu0 %v981
      %1015 = vmatprep.subr.mxu0 0.0
      %1016 = vmatpush2.xpose.msra.mxu0 0.0
      %1017 = vmatprep.subr.mxu0 0.0
      %1018 = vmatpush2.xpose.msra.mxu0 0.0
      %1019 = vmatprep.subr.mxu0 0.0
      %1020 = vmatpush2.xpose.msra.mxu0 0.0
      %1021 = vmatprep.subr.mxu0 0.0
      %1022 = vmatpush2.xpose.msra.mxu0 0.0
      %1023 = vmatprep.subr.mxu0 0.0
      %1024 = vmatpush2.xpose.msra.mxu0 0.0
      %1025 = vmatprep.subr.mxu0 0.0
      %1026 = vmatpush2.xpose.msra.mxu0 0.0
      %1027 = vmatprep.subr.mxu0 0.0
      %1028 = vmatpush2.xpose.msra.mxu0 0.0
      %1029 = vmatprep.subr.mxu0 0.0
      %1030 = vmatpush2.xpose.msra.mxu0 0.0
      %1031 = vmatprep.subr.mxu0 0.0
      %1032 = vmatpush2.xpose.msra.mxu0 0.0
      %1033 = vmatprep.subr.mxu0 0.0
      %1034 = vmatpush2.xpose.msra.mxu0 0.0
      %1035 = vmatprep.subr.mxu0 0.0
      %1036 = vmatpush2.xpose.msra.mxu0 0.0
      %1037 = vmatprep.subr.mxu0 0.0
      %1038 = vmatpush2.xpose.msra.mxu0 0.0
      %1039 = vmatprep.subr.mxu0 0.0
      %1040 = vmatpush2.xpose.msra.mxu0 0.0
      %1041 = vmatprep.subr.mxu0 0.0
      %1042 = vmatpush2.xpose.msra.mxu0 0.0
      %1043 = vmatprep.subr.mxu0 0.0
      %1044 = vmatpush2.xpose.msra.mxu0 0.0
      %1045 = vmatprep.subr.mxu0 0.0
      %1046 = vmatpush2.xpose.msra.mxu0 0.0
      %1047 = vmatprep.mubr.f32.mxu0 0.0
      %1048 = vmatmul.mubr.f32.gmra.mxu0 %v979
      %v1049 = vpop.f32.mrf.mxu0
      %v1050 = vadd.f32 0.0, %v1049
      %v1051 = vpop.f32.mrf.mxu0
      %1052 = vdwg.mxu0
      %vm1053 = vcmask 36864
      %v1054 = vsel %vm1053, %v1050, -inf
      %1055 = vmax.xlane.f32.xlu0 %v1054
      %v1056 = vpop.xlane.xlu0 %1055
      %v1057 = vsub.f32 %v1050, %v1056
      %v1058 = vmul.f32 %v1057, 1.442695
      %v1059 = vpow.pop %v1058
      %v1060 = vsel %vm1053, %v1059, 0.0
      %1061 = vadd.xlane.f32.xlu0 %v1060
      %v1062 = vpop.xlane.xlu0 %1061
      %v1063 = vrcp.pop %v1062
      %v1064 = vmul.f32 %v1059, %v1063
      %1066 = vrot.lane.b32.xlu0 %v972, 64
      %v1067 = vpop.permute.xlu0 %1066
      %vm1068 = vcmask 39936
      %v1070 = vsel %vm1068, %v1064, 0
      %vm1072 = vcmask 1044480
      %v1073 = vsel %vm1072, %v1067, 0
      %1075 = vmatprep.subr.mxu0 0.0
      %1076 = vmatpush1.msra.mxu0 0.0
      %1077 = vmatprep.subr.mxu0 0.0
      %1078 = vmatpush1.msra.mxu0 0.0
      %1079 = vmatprep.subr.mxu0 0.0
      %1080 = vmatpush1.msra.mxu0 0.0
      %1081 = vmatprep.subr.mxu0 0.0
      %1082 = vmatpush1.msra.mxu0 0.0
      %1083 = vmatprep.subr.mxu0 0.0
      %1084 = vmatpush1.msra.mxu0 0.0
      %1085 = vmatprep.subr.mxu0 0.0
      %1086 = vmatpush1.msra.mxu0 0.0
      %1087 = vmatprep.subr.mxu0 0.0
      %1088 = vmatpush1.msra.mxu0 0.0
      %1089 = vmatprep.subr.mxu0 0.0
      %1090 = vmatpush1.msra.mxu0 0.0
      %1091 = vmatprep.subr.mxu0 0.0
      %1092 = vmatpush1.msra.mxu0 0.0
      %1093 = vmatprep.subr.mxu0 0.0
      %1094 = vmatpush1.msra.mxu0 0.0
      %1095 = vmatprep.subr.mxu0 0.0
      %1096 = vmatpush1.msra.mxu0 0.0
      %1097 = vmatprep.subr.mxu0 0.0
      %1098 = vmatpush1.msra.mxu0 0.0
      %1099 = vmatprep.subr.mxu0 0.0
      %1100 = vmatpush1.msra.mxu0 0.0
      %1101 = vmatprep.subr.mxu0 0.0
      %1102 = vmatpush1.msra.mxu0 0.0
      %1103 = vmatprep.subr.mxu0 0.0
      %1104 = vmatpush1.msra.mxu0 0.0
      %1105 = vmatprep.subr.mxu0 0.0
      %1106 = vmatpush1.msra.mxu0 %v1073
      %1107 = vmatprep.subr.mxu0 0.0
      %1108 = vmatpush2.msra.mxu0 0.0
      %1109 = vmatprep.subr.mxu0 0.0
      %1110 = vmatpush2.msra.mxu0 0.0
      %1111 = vmatprep.subr.mxu0 0.0
      %1112 = vmatpush2.msra.mxu0 0.0
      %1113 = vmatprep.subr.mxu0 0.0
      %1114 = vmatpush2.msra.mxu0 0.0
      %1115 = vmatprep.subr.mxu0 0.0
      %1116 = vmatpush2.msra.mxu0 0.0
      %1117 = vmatprep.subr.mxu0 0.0
      %1118 = vmatpush2.msra.mxu0 0.0
      %1119 = vmatprep.subr.mxu0 0.0
      %1120 = vmatpush2.msra.mxu0 0.0
      %1121 = vmatprep.subr.mxu0 0.0
      %1122 = vmatpush2.msra.mxu0 0.0
      %1123 = vmatprep.subr.mxu0 0.0
      %1124 = vmatpush2.msra.mxu0 0.0
      %1125 = vmatprep.subr.mxu0 0.0
      %1126 = vmatpush2.msra.mxu0 0.0
      %1127 = vmatprep.subr.mxu0 0.0
      %1128 = vmatpush2.msra.mxu0 0.0
      %1129 = vmatprep.subr.mxu0 0.0
      %1130 = vmatpush2.msra.mxu0 0.0
      %1131 = vmatprep.subr.mxu0 0.0
      %1132 = vmatpush2.msra.mxu0 0.0
      %1133 = vmatprep.subr.mxu0 0.0
      %1134 = vmatpush2.msra.mxu0 0.0
      %1135 = vmatprep.subr.mxu0 0.0
      %1136 = vmatpush2.msra.mxu0 0.0
      %1137 = vmatprep.subr.mxu0 0.0
      %1138 = vmatpush2.msra.mxu0 0.0
      %1139 = vmatprep.mubr.f32.mxu0 0.0
      %1140 = vmatmul.mubr.f32.gmra.mxu0 %v1070
      %v1141 = vpop.f32.mrf.mxu0
      %v1142 = vadd.f32 0.0, %v1141
      %v1143 = vpop.f32.mrf.mxu0
      %1144 = vdwg.mxu0
      %v1145 = vld [vmem:[%s9] sm:$0xff]
      %1146 = vrot.lane.b32.xlu0 %v973, 120
      %v1147 = vpop.permute.xlu0 %1146
      %1148 = vrot.lane.b32.xlu0 %v658, 88
      %v1149 = vpop.permute.xlu0 %1148
      %v1150 = vsel %vm977, %v1147, 0
      %v1152 = vsel %vm977, %v1149, 0
      %1154 = vmatprep.subr.mxu0 0.0
      %1155 = vmatpush1.xpose.msra.mxu0 0.0
      %1156 = vmatprep.subr.mxu0 0.0
      %1157 = vmatpush1.xpose.msra.mxu0 0.0
      %1158 = vmatprep.subr.mxu0 0.0
      %1159 = vmatpush1.xpose.msra.mxu0 0.0
      %1160 = vmatprep.subr.mxu0 0.0
      %1161 = vmatpush1.xpose.msra.mxu0 0.0
      %1162 = vmatprep.subr.mxu0 0.0
      %1163 = vmatpush1.xpose.msra.mxu0 0.0
      %1164 = vmatprep.subr.mxu0 0.0
      %1165 = vmatpush1.xpose.msra.mxu0 0.0
      %1166 = vmatprep.subr.mxu0 0.0
      %1167 = vmatpush1.xpose.msra.mxu0 0.0
      %1168 = vmatprep.subr.mxu0 0.0
      %1169 = vmatpush1.xpose.msra.mxu0 0.0
      %1170 = vmatprep.subr.mxu0 0.0
      %1171 = vmatpush1.xpose.msra.mxu0 0.0
      %1172 = vmatprep.subr.mxu0 0.0
      %1173 = vmatpush1.xpose.msra.mxu0 0.0
      %1174 = vmatprep.subr.mxu0 0.0
      %1175 = vmatpush1.xpose.msra.mxu0 0.0
      %1176 = vmatprep.subr.mxu0 0.0
      %1177 = vmatpush1.xpose.msra.mxu0 0.0
      %1178 = vmatprep.subr.mxu0 0.0
      %1179 = vmatpush1.xpose.msra.mxu0 0.0
      %1180 = vmatprep.subr.mxu0 0.0
      %1181 = vmatpush1.xpose.msra.mxu0 0.0
      %1182 = vmatprep.subr.mxu0 0.0
      %1183 = vmatpush1.xpose.msra.mxu0 0.0
      %1184 = vmatprep.subr.mxu0 0.0
      %1185 = vmatpush1.xpose.msra.mxu0 %v1152
      %1186 = vmatprep.subr.mxu0 0.0
      %1187 = vmatpush2.xpose.msra.mxu0 0.0
      %1188 = vmatprep.subr.mxu0 0.0
      %1189 = vmatpush2.xpose.msra.mxu0 0.0
      %1190 = vmatprep.subr.mxu0 0.0
      %1191 = vmatpush2.xpose.msra.mxu0 0.0
      %1192 = vmatprep.subr.mxu0 0.0
      %1193 = vmatpush2.xpose.msra.mxu0 0.0
      %1194 = vmatprep.subr.mxu0 0.0
      %1195 = vmatpush2.xpose.msra.mxu0 0.0
      %1196 = vmatprep.subr.mxu0 0.0
      %1197 = vmatpush2.xpose.msra.mxu0 0.0
      %1198 = vmatprep.subr.mxu0 0.0
      %1199 = vmatpush2.xpose.msra.mxu0 0.0
      %1200 = vmatprep.subr.mxu0 0.0
      %1201 = vmatpush2.xpose.msra.mxu0 0.0
      %1202 = vmatprep.subr.mxu0 0.0
      %1203 = vmatpush2.xpose.msra.mxu0 0.0
      %1204 = vmatprep.subr.mxu0 0.0
      %1205 = vmatpush2.xpose.msra.mxu0 0.0
      %1206 = vmatprep.subr.mxu0 0.0
      %1207 = vmatpush2.xpose.msra.mxu0 0.0
      %1208 = vmatprep.subr.mxu0 0.0
      %1209 = vmatpush2.xpose.msra.mxu0 0.0
      %1210 = vmatprep.subr.mxu0 0.0
      %1211 = vmatpush2.xpose.msra.mxu0 0.0
      %1212 = vmatprep.subr.mxu0 0.0
      %1213 = vmatpush2.xpose.msra.mxu0 0.0
      %1214 = vmatprep.subr.mxu0 0.0
      %1215 = vmatpush2.xpose.msra.mxu0 0.0
      %1216 = vmatprep.subr.mxu0 0.0
      %1217 = vmatpush2.xpose.msra.mxu0 0.0
      %1218 = vmatprep.mubr.f32.mxu0 0.0
      %1219 = vmatmul.mubr.f32.gmra.mxu0 %v1150
      %v1220 = vpop.f32.mrf.mxu0
      %v1221 = vadd.f32 0.0, %v1220
      %v1222 = vpop.f32.mrf.mxu0
      %1223 = vdwg.mxu0
      %v1224 = vsel %vm1053, %v1221, -inf
      %1225 = vmax.xlane.f32.xlu0 %v1224
      %v1226 = vpop.xlane.xlu0 %1225
      %v1227 = vsub.f32 %v1221, %v1226
      %v1228 = vmul.f32 %v1227, 1.442695
      %v1229 = vpow.pop %v1228
      %v1230 = vsel %vm1053, %v1229, 0.0
      %1231 = vadd.xlane.f32.xlu0 %v1230
      %v1232 = vpop.xlane.xlu0 %1231
      %v1233 = vrcp.pop %v1232
      %v1234 = vmul.f32 %v1229, %v1233
      %1235 = vrot.lane.b32.xlu0 %v972, 56
      %v1236 = vpop.permute.xlu0 %1235
      %v1238 = vsel %vm1068, %v1234, 0
      %v1240 = vsel %vm1072, %v1236, 0
      %1242 = vmatprep.subr.mxu0 0.0
      %1243 = vmatpush1.msra.mxu0 0.0
      %1244 = vmatprep.subr.mxu0 0.0
      %1245 = vmatpush1.msra.mxu0 0.0
      %1246 = vmatprep.subr.mxu0 0.0
      %1247 = vmatpush1.msra.mxu0 0.0
      %1248 = vmatprep.subr.mxu0 0.0
      %1249 = vmatpush1.msra.mxu0 0.0
      %1250 = vmatprep.subr.mxu0 0.0
      %1251 = vmatpush1.msra.mxu0 0.0
      %1252 = vmatprep.subr.mxu0 0.0
      %1253 = vmatpush1.msra.mxu0 0.0
      %1254 = vmatprep.subr.mxu0 0.0
      %1255 = vmatpush1.msra.mxu0 0.0
      %1256 = vmatprep.subr.mxu0 0.0
      %1257 = vmatpush1.msra.mxu0 0.0
      %1258 = vmatprep.subr.mxu0 0.0
      %1259 = vmatpush1.msra.mxu0 0.0
      %1260 = vmatprep.subr.mxu0 0.0
      %1261 = vmatpush1.msra.mxu0 0.0
      %1262 = vmatprep.subr.mxu0 0.0
      %1263 = vmatpush1.msra.mxu0 0.0
      %1264 = vmatprep.subr.mxu0 0.0
      %1265 = vmatpush1.msra.mxu0 0.0
      %1266 = vmatprep.subr.mxu0 0.0
      %1267 = vmatpush1.msra.mxu0 0.0
      %1268 = vmatprep.subr.mxu0 0.0
      %1269 = vmatpush1.msra.mxu0 0.0
      %1270 = vmatprep.subr.mxu0 0.0
      %1271 = vmatpush1.msra.mxu0 0.0
      %1272 = vmatprep.subr.mxu0 0.0
      %1273 = vmatpush1.msra.mxu0 %v1240
      %1274 = vmatprep.subr.mxu0 0.0
      %1275 = vmatpush2.msra.mxu0 0.0
      %1276 = vmatprep.subr.mxu0 0.0
      %1277 = vmatpush2.msra.mxu0 0.0
      %1278 = vmatprep.subr.mxu0 0.0
      %1279 = vmatpush2.msra.mxu0 0.0
      %1280 = vmatprep.subr.mxu0 0.0
      %1281 = vmatpush2.msra.mxu0 0.0
      %1282 = vmatprep.subr.mxu0 0.0
      %1283 = vmatpush2.msra.mxu0 0.0
      %1284 = vmatprep.subr.mxu0 0.0
      %1285 = vmatpush2.msra.mxu0 0.0
      %1286 = vmatprep.subr.mxu0 0.0
      %1287 = vmatpush2.msra.mxu0 0.0
      %1288 = vmatprep.subr.mxu0 0.0
      %1289 = vmatpush2.msra.mxu0 0.0
      %1290 = vmatprep.subr.mxu0 0.0
      %1291 = vmatpush2.msra.mxu0 0.0
      %1292 = vmatprep.subr.mxu0 0.0
      %1293 = vmatpush2.msra.mxu0 0.0
      %1294 = vmatprep.subr.mxu0 0.0
      %1295 = vmatpush2.msra.mxu0 0.0
      %1296 = vmatprep.subr.mxu0 0.0
      %1297 = vmatpush2.msra.mxu0 0.0
      %1298 = vmatprep.subr.mxu0 0.0
      %1299 = vmatpush2.msra.mxu0 0.0
      %1300 = vmatprep.subr.mxu0 0.0
      %1301 = vmatpush2.msra.mxu0 0.0
      %1302 = vmatprep.subr.mxu0 0.0
      %1303 = vmatpush2.msra.mxu0 0.0
      %1304 = vmatprep.subr.mxu0 0.0
      %1305 = vmatpush2.msra.mxu0 0.0
      %1306 = vmatprep.mubr.f32.mxu0 0.0
      %1307 = vmatmul.mubr.f32.gmra.mxu0 %v1238
      %v1308 = vpop.f32.mrf.mxu0
      %v1309 = vadd.f32 0.0, %v1308
      %v1310 = vpop.f32.mrf.mxu0
      %1311 = vdwg.mxu0
      %v1312 = vld [vmem:[%s9 + $0x8] sm:$0xff]
      %v1314 = vsel %vm977, %v1309, 0
      %1316 = vmatprep.subr.mxu0 0.0
      %1317 = vmatpush1.msra.mxu0 0.0
      %1318 = vmatprep.subr.mxu0 0.0
      %1319 = vmatpush1.msra.mxu0 0.0
      %1320 = vmatprep.subr.mxu0 0.0
      %1321 = vmatpush1.msra.mxu0 0.0
      %1322 = vmatprep.subr.mxu0 0.0
      %1323 = vmatpush1.msra.mxu0 0.0
      %1324 = vmatprep.subr.mxu0 0.0
      %1325 = vmatpush1.msra.mxu0 0.0
      %1326 = vmatprep.subr.mxu0 0.0
      %1327 = vmatpush1.msra.mxu0 0.0
      %1328 = vmatprep.subr.mxu0 0.0
      %1329 = vmatpush1.msra.mxu0 0.0
      %1330 = vmatprep.subr.mxu0 0.0
      %1331 = vmatpush1.msra.mxu0 0.0
      %1332 = vmatprep.subr.mxu0 0.0
      %1333 = vmatpush1.msra.mxu0 0.0
      %1334 = vmatprep.subr.mxu0 0.0
      %1335 = vmatpush1.msra.mxu0 0.0
      %1336 = vmatprep.subr.mxu0 0.0
      %1337 = vmatpush1.msra.mxu0 0.0
      %1338 = vmatprep.subr.mxu0 0.0
      %1339 = vmatpush1.msra.mxu0 0.0
      %1340 = vmatprep.subr.mxu0 0.0
      %1341 = vmatpush1.msra.mxu0 0.0
      %1342 = vmatprep.subr.mxu0 0.0
      %1343 = vmatpush1.msra.mxu0 0.0
      %1344 = vmatprep.subr.mxu0 0.0
      %1345 = vmatpush1.msra.mxu0 0.0
      %1346 = vmatprep.subr.mxu0 0.0
      %1347 = vmatpush1.msra.mxu0 %v1312
      %1348 = vmatprep.subr.mxu0 0.0
      %1349 = vmatpush2.msra.mxu0 0.0
      %1350 = vmatprep.subr.mxu0 0.0
      %1351 = vmatpush2.msra.mxu0 0.0
      %1352 = vmatprep.subr.mxu0 0.0
      %1353 = vmatpush2.msra.mxu0 0.0
      %1354 = vmatprep.subr.mxu0 0.0
      %1355 = vmatpush2.msra.mxu0 0.0
      %1356 = vmatprep.subr.mxu0 0.0
      %1357 = vmatpush2.msra.mxu0 0.0
      %1358 = vmatprep.subr.mxu0 0.0
      %1359 = vmatpush2.msra.mxu0 0.0
      %1360 = vmatprep.subr.mxu0 0.0
      %1361 = vmatpush2.msra.mxu0 0.0
      %1362 = vmatprep.subr.mxu0 0.0
      %1363 = vmatpush2.msra.mxu0 0.0
      %1364 = vmatprep.subr.mxu0 0.0
      %1365 = vmatpush2.msra.mxu0 0.0
      %1366 = vmatprep.subr.mxu0 0.0
      %1367 = vmatpush2.msra.mxu0 0.0
      %1368 = vmatprep.subr.mxu0 0.0
      %1369 = vmatpush2.msra.mxu0 0.0
      %1370 = vmatprep.subr.mxu0 0.0
      %1371 = vmatpush2.msra.mxu0 0.0
      %1372 = vmatprep.subr.mxu0 0.0
      %1373 = vmatpush2.msra.mxu0 0.0
      %1374 = vmatprep.subr.mxu0 0.0
      %1375 = vmatpush2.msra.mxu0 0.0
      %1376 = vmatprep.subr.mxu0 0.0
      %1377 = vmatpush2.msra.mxu0 0.0
      %1378 = vmatprep.subr.mxu0 0.0
      %1379 = vmatpush2.msra.mxu0 0.0
      %1380 = vmatprep.mubr.f32.mxu0 0.0
      %1381 = vmatmul.mubr.f32.gmra.mxu0 %v1314
      %v1382 = vpop.f32.mrf.mxu0
      %v1383 = vadd.f32 0.0, %v1382
      %v1384 = vpop.f32.mrf.mxu0
      %1385 = vdwg.mxu0
      %v1387 = vsel %vm977, %v1142, 0
      %1389 = vmatprep.subr.mxu0 0.0
      %1390 = vmatpush1.msra.mxu0 0.0
      %1391 = vmatprep.subr.mxu0 0.0
      %1392 = vmatpush1.msra.mxu0 0.0
      %1393 = vmatprep.subr.mxu0 0.0
      %1394 = vmatpush1.msra.mxu0 0.0
      %1395 = vmatprep.subr.mxu0 0.0
      %1396 = vmatpush1.msra.mxu0 0.0
      %1397 = vmatprep.subr.mxu0 0.0
      %1398 = vmatpush1.msra.mxu0 0.0
      %1399 = vmatprep.subr.mxu0 0.0
      %1400 = vmatpush1.msra.mxu0 0.0
      %1401 = vmatprep.subr.mxu0 0.0
      %1402 = vmatpush1.msra.mxu0 0.0
      %1403 = vmatprep.subr.mxu0 0.0
      %1404 = vmatpush1.msra.mxu0 0.0
      %1405 = vmatprep.subr.mxu0 0.0
      %1406 = vmatpush1.msra.mxu0 0.0
      %1407 = vmatprep.subr.mxu0 0.0
      %1408 = vmatpush1.msra.mxu0 0.0
      %1409 = vmatprep.subr.mxu0 0.0
      %1410 = vmatpush1.msra.mxu0 0.0
      %1411 = vmatprep.subr.mxu0 0.0
      %1412 = vmatpush1.msra.mxu0 0.0
      %1413 = vmatprep.subr.mxu0 0.0
      %1414 = vmatpush1.msra.mxu0 0.0
      %1415 = vmatprep.subr.mxu0 0.0
      %1416 = vmatpush1.msra.mxu0 0.0
      %1417 = vmatprep.subr.mxu0 0.0
      %1418 = vmatpush1.msra.mxu0 0.0
      %1419 = vmatprep.subr.mxu0 0.0
      %1420 = vmatpush1.msra.mxu0 %v1145
      %1421 = vmatprep.subr.mxu0 0.0
      %1422 = vmatpush2.msra.mxu0 0.0
      %1423 = vmatprep.subr.mxu0 0.0
      %1424 = vmatpush2.msra.mxu0 0.0
      %1425 = vmatprep.subr.mxu0 0.0
      %1426 = vmatpush2.msra.mxu0 0.0
      %1427 = vmatprep.subr.mxu0 0.0
      %1428 = vmatpush2.msra.mxu0 0.0
      %1429 = vmatprep.subr.mxu0 0.0
      %1430 = vmatpush2.msra.mxu0 0.0
      %1431 = vmatprep.subr.mxu0 0.0
      %1432 = vmatpush2.msra.mxu0 0.0
      %1433 = vmatprep.subr.mxu0 0.0
      %1434 = vmatpush2.msra.mxu0 0.0
      %1435 = vmatprep.subr.mxu0 0.0
      %1436 = vmatpush2.msra.mxu0 0.0
      %1437 = vmatprep.subr.mxu0 0.0
      %1438 = vmatpush2.msra.mxu0 0.0
      %1439 = vmatprep.subr.mxu0 0.0
      %1440 = vmatpush2.msra.mxu0 0.0
      %1441 = vmatprep.subr.mxu0 0.0
      %1442 = vmatpush2.msra.mxu0 0.0
      %1443 = vmatprep.subr.mxu0 0.0
      %1444 = vmatpush2.msra.mxu0 0.0
      %1445 = vmatprep.subr.mxu0 0.0
      %1446 = vmatpush2.msra.mxu0 0.0
      %1447 = vmatprep.subr.mxu0 0.0
      %1448 = vmatpush2.msra.mxu0 0.0
      %1449 = vmatprep.subr.mxu0 0.0
      %1450 = vmatpush2.msra.mxu0 0.0
      %1451 = vmatprep.subr.mxu0 0.0
      %1452 = vmatpush2.msra.mxu0 0.0
      %1453 = vmatprep.mubr.f32.mxu0 0.0
      %1454 = vmatmul.mubr.f32.gmra.mxu0 %v1387
      %v1455 = vpop.f32.mrf.mxu0
      %v1456 = vadd.f32 %v1383, %v1455
      %v1457 = vpop.f32.mrf.mxu0
      %1458 = vdwg.mxu0
      %1459 = vrot.lane.b32.xlu0 %v973, 112
      %v1460 = vpop.permute.xlu0 %1459
      %1461 = vrot.lane.b32.xlu0 %v658, 80
      %v1462 = vpop.permute.xlu0 %1461
      %v1463 = vsel %vm977, %v1460, 0
      %v1465 = vsel %vm977, %v1462, 0
      %1467 = vmatprep.subr.mxu0 0.0
      %1468 = vmatpush1.xpose.msra.mxu0 0.0
      %1469 = vmatprep.subr.mxu0 0.0
      %1470 = vmatpush1.xpose.msra.mxu0 0.0
      %1471 = vmatprep.subr.mxu0 0.0
      %1472 = vmatpush1.xpose.msra.mxu0 0.0
      %1473 = vmatprep.subr.mxu0 0.0
      %1474 = vmatpush1.xpose.msra.mxu0 0.0
      %1475 = vmatprep.subr.mxu0 0.0
      %1476 = vmatpush1.xpose.msra.mxu0 0.0
      %1477 = vmatprep.subr.mxu0 0.0
      %1478 = vmatpush1.xpose.msra.mxu0 0.0
      %1479 = vmatprep.subr.mxu0 0.0
      %1480 = vmatpush1.xpose.msra.mxu0 0.0
      %1481 = vmatprep.subr.mxu0 0.0
      %1482 = vmatpush1.xpose.msra.mxu0 0.0
      %1483 = vmatprep.subr.mxu0 0.0
      %1484 = vmatpush1.xpose.msra.mxu0 0.0
      %1485 = vmatprep.subr.mxu0 0.0
      %1486 = vmatpush1.xpose.msra.mxu0 0.0
      %1487 = vmatprep.subr.mxu0 0.0
      %1488 = vmatpush1.xpose.msra.mxu0 0.0
      %1489 = vmatprep.subr.mxu0 0.0
      %1490 = vmatpush1.xpose.msra.mxu0 0.0
      %1491 = vmatprep.subr.mxu0 0.0
      %1492 = vmatpush1.xpose.msra.mxu0 0.0
      %1493 = vmatprep.subr.mxu0 0.0
      %1494 = vmatpush1.xpose.msra.mxu0 0.0
      %1495 = vmatprep.subr.mxu0 0.0
      %1496 = vmatpush1.xpose.msra.mxu0 0.0
      %1497 = vmatprep.subr.mxu0 0.0
      %1498 = vmatpush1.xpose.msra.mxu0 %v1465
      %1499 = vmatprep.subr.mxu0 0.0
      %1500 = vmatpush2.xpose.msra.mxu0 0.0
      %1501 = vmatprep.subr.mxu0 0.0
      %1502 = vmatpush2.xpose.msra.mxu0 0.0
      %1503 = vmatprep.subr.mxu0 0.0
      %1504 = vmatpush2.xpose.msra.mxu0 0.0
      %1505 = vmatprep.subr.mxu0 0.0
      %1506 = vmatpush2.xpose.msra.mxu0 0.0
      %1507 = vmatprep.subr.mxu0 0.0
      %1508 = vmatpush2.xpose.msra.mxu0 0.0
      %1509 = vmatprep.subr.mxu0 0.0
      %1510 = vmatpush2.xpose.msra.mxu0 0.0
      %1511 = vmatprep.subr.mxu0 0.0
      %1512 = vmatpush2.xpose.msra.mxu0 0.0
      %1513 = vmatprep.subr.mxu0 0.0
      %1514 = vmatpush2.xpose.msra.mxu0 0.0
      %1515 = vmatprep.subr.mxu0 0.0
      %1516 = vmatpush2.xpose.msra.mxu0 0.0
      %1517 = vmatprep.subr.mxu0 0.0
      %1518 = vmatpush2.xpose.msra.mxu0 0.0
      %1519 = vmatprep.subr.mxu0 0.0
      %1520 = vmatpush2.xpose.msra.mxu0 0.0
      %1521 = vmatprep.subr.mxu0 0.0
      %1522 = vmatpush2.xpose.msra.mxu0 0.0
      %1523 = vmatprep.subr.mxu0 0.0
      %1524 = vmatpush2.xpose.msra.mxu0 0.0
      %1525 = vmatprep.subr.mxu0 0.0
      %1526 = vmatpush2.xpose.msra.mxu0 0.0
      %1527 = vmatprep.subr.mxu0 0.0
      %1528 = vmatpush2.xpose.msra.mxu0 0.0
      %1529 = vmatprep.subr.mxu0 0.0
      %1530 = vmatpush2.xpose.msra.mxu0 0.0
      %1531 = vmatprep.mubr.f32.mxu0 0.0
      %1532 = vmatmul.mubr.f32.gmra.mxu0 %v1463
      %v1533 = vpop.f32.mrf.mxu0
      %v1534 = vadd.f32 0.0, %v1533
      %v1535 = vpop.f32.mrf.mxu0
      %1536 = vdwg.mxu0
      %v1537 = vsel %vm1053, %v1534, -inf
      %1538 = vmax.xlane.f32.xlu0 %v1537
      %v1539 = vpop.xlane.xlu0 %1538
      %v1540 = vsub.f32 %v1534, %v1539
      %v1541 = vmul.f32 %v1540, 1.442695
      %v1542 = vpow.pop %v1541
      %v1543 = vsel %vm1053, %v1542, 0.0
      %1544 = vadd.xlane.f32.xlu0 %v1543
      %v1545 = vpop.xlane.xlu0 %1544
      %v1546 = vrcp.pop %v1545
      %v1547 = vmul.f32 %v1542, %v1546
      %1548 = vrot.lane.b32.xlu0 %v972, 48
      %v1549 = vpop.permute.xlu0 %1548
      %v1551 = vsel %vm1068, %v1547, 0
      %v1553 = vsel %vm1072, %v1549, 0
      %1555 = vmatprep.subr.mxu0 0.0
      %1556 = vmatpush1.msra.mxu0 0.0
      %1557 = vmatprep.subr.mxu0 0.0
      %1558 = vmatpush1.msra.mxu0 0.0
      %1559 = vmatprep.subr.mxu0 0.0
      %1560 = vmatpush1.msra.mxu0 0.0
      %1561 = vmatprep.subr.mxu0 0.0
      %1562 = vmatpush1.msra.mxu0 0.0
      %1563 = vmatprep.subr.mxu0 0.0
      %1564 = vmatpush1.msra.mxu0 0.0
      %1565 = vmatprep.subr.mxu0 0.0
      %1566 = vmatpush1.msra.mxu0 0.0
      %1567 = vmatprep.subr.mxu0 0.0
      %1568 = vmatpush1.msra.mxu0 0.0
      %1569 = vmatprep.subr.mxu0 0.0
      %1570 = vmatpush1.msra.mxu0 0.0
      %1571 = vmatprep.subr.mxu0 0.0
      %1572 = vmatpush1.msra.mxu0 0.0
      %1573 = vmatprep.subr.mxu0 0.0
      %1574 = vmatpush1.msra.mxu0 0.0
      %1575 = vmatprep.subr.mxu0 0.0
      %1576 = vmatpush1.msra.mxu0 0.0
      %1577 = vmatprep.subr.mxu0 0.0
      %1578 = vmatpush1.msra.mxu0 0.0
      %1579 = vmatprep.subr.mxu0 0.0
      %1580 = vmatpush1.msra.mxu0 0.0
      %1581 = vmatprep.subr.mxu0 0.0
      %1582 = vmatpush1.msra.mxu0 0.0
      %1583 = vmatprep.subr.mxu0 0.0
      %1584 = vmatpush1.msra.mxu0 0.0
      %1585 = vmatprep.subr.mxu0 0.0
      %1586 = vmatpush1.msra.mxu0 %v1553
      %1587 = vmatprep.subr.mxu0 0.0
      %1588 = vmatpush2.msra.mxu0 0.0
      %1589 = vmatprep.subr.mxu0 0.0
      %1590 = vmatpush2.msra.mxu0 0.0
      %1591 = vmatprep.subr.mxu0 0.0
      %1592 = vmatpush2.msra.mxu0 0.0
      %1593 = vmatprep.subr.mxu0 0.0
      %1594 = vmatpush2.msra.mxu0 0.0
      %1595 = vmatprep.subr.mxu0 0.0
      %1596 = vmatpush2.msra.mxu0 0.0
      %1597 = vmatprep.subr.mxu0 0.0
      %1598 = vmatpush2.msra.mxu0 0.0
      %1599 = vmatprep.subr.mxu0 0.0
      %1600 = vmatpush2.msra.mxu0 0.0
      %1601 = vmatprep.subr.mxu0 0.0
      %1602 = vmatpush2.msra.mxu0 0.0
      %1603 = vmatprep.subr.mxu0 0.0
      %1604 = vmatpush2.msra.mxu0 0.0
      %1605 = vmatprep.subr.mxu0 0.0
      %1606 = vmatpush2.msra.mxu0 0.0
      %1607 = vmatprep.subr.mxu0 0.0
      %1608 = vmatpush2.msra.mxu0 0.0
      %1609 = vmatprep.subr.mxu0 0.0
      %1610 = vmatpush2.msra.mxu0 0.0
      %1611 = vmatprep.subr.mxu0 0.0
      %1612 = vmatpush2.msra.mxu0 0.0
      %1613 = vmatprep.subr.mxu0 0.0
      %1614 = vmatpush2.msra.mxu0 0.0
      %1615 = vmatprep.subr.mxu0 0.0
      %1616 = vmatpush2.msra.mxu0 0.0
      %1617 = vmatprep.subr.mxu0 0.0
      %1618 = vmatpush2.msra.mxu0 0.0
      %1619 = vmatprep.mubr.f32.mxu0 0.0
      %1620 = vmatmul.mubr.f32.gmra.mxu0 %v1551
      %v1621 = vpop.f32.mrf.mxu0
      %v1622 = vadd.f32 0.0, %v1621
      %v1623 = vpop.f32.mrf.mxu0
      %1624 = vdwg.mxu0
      %v1625 = vld [vmem:[%s9 + $0x10] sm:$0xff]
      %v1627 = vsel %vm977, %v1622, 0
      %1629 = vmatprep.subr.mxu0 0.0
      %1630 = vmatpush1.msra.mxu0 0.0
      %1631 = vmatprep.subr.mxu0 0.0
      %1632 = vmatpush1.msra.mxu0 0.0
      %1633 = vmatprep.subr.mxu0 0.0
      %1634 = vmatpush1.msra.mxu0 0.0
      %1635 = vmatprep.subr.mxu0 0.0
      %1636 = vmatpush1.msra.mxu0 0.0
      %1637 = vmatprep.subr.mxu0 0.0
      %1638 = vmatpush1.msra.mxu0 0.0
      %1639 = vmatprep.subr.mxu0 0.0
      %1640 = vmatpush1.msra.mxu0 0.0
      %1641 = vmatprep.subr.mxu0 0.0
      %1642 = vmatpush1.msra.mxu0 0.0
      %1643 = vmatprep.subr.mxu0 0.0
      %1644 = vmatpush1.msra.mxu0 0.0
      %1645 = vmatprep.subr.mxu0 0.0
      %1646 = vmatpush1.msra.mxu0 0.0
      %1647 = vmatprep.subr.mxu0 0.0
      %1648 = vmatpush1.msra.mxu0 0.0
      %1649 = vmatprep.subr.mxu0 0.0
      %1650 = vmatpush1.msra.mxu0 0.0
      %1651 = vmatprep.subr.mxu0 0.0
      %1652 = vmatpush1.msra.mxu0 0.0
      %1653 = vmatprep.subr.mxu0 0.0
      %1654 = vmatpush1.msra.mxu0 0.0
      %1655 = vmatprep.subr.mxu0 0.0
      %1656 = vmatpush1.msra.mxu0 0.0
      %1657 = vmatprep.subr.mxu0 0.0
      %1658 = vmatpush1.msra.mxu0 0.0
      %1659 = vmatprep.subr.mxu0 0.0
      %1660 = vmatpush1.msra.mxu0 %v1625
      %1661 = vmatprep.subr.mxu0 0.0
      %1662 = vmatpush2.msra.mxu0 0.0
      %1663 = vmatprep.subr.mxu0 0.0
      %1664 = vmatpush2.msra.mxu0 0.0
      %1665 = vmatprep.subr.mxu0 0.0
      %1666 = vmatpush2.msra.mxu0 0.0
      %1667 = vmatprep.subr.mxu0 0.0
      %1668 = vmatpush2.msra.mxu0 0.0
      %1669 = vmatprep.subr.mxu0 0.0
      %1670 = vmatpush2.msra.mxu0 0.0
      %1671 = vmatprep.subr.mxu0 0.0
      %1672 = vmatpush2.msra.mxu0 0.0
      %1673 = vmatprep.subr.mxu0 0.0
      %1674 = vmatpush2.msra.mxu0 0.0
      %1675 = vmatprep.subr.mxu0 0.0
      %1676 = vmatpush2.msra.mxu0 0.0
      %1677 = vmatprep.subr.mxu0 0.0
      %1678 = vmatpush2.msra.mxu0 0.0
      %1679 = vmatprep.subr.mxu0 0.0
      %1680 = vmatpush2.msra.mxu0 0.0
      %1681 = vmatprep.subr.mxu0 0.0
      %1682 = vmatpush2.msra.mxu0 0.0
      %1683 = vmatprep.subr.mxu0 0.0
      %1684 = vmatpush2.msra.mxu0 0.0
      %1685 = vmatprep.subr.mxu0 0.0
      %1686 = vmatpush2.msra.mxu0 0.0
      %1687 = vmatprep.subr.mxu0 0.0
      %1688 = vmatpush2.msra.mxu0 0.0
      %1689 = vmatprep.subr.mxu0 0.0
      %1690 = vmatpush2.msra.mxu0 0.0
      %1691 = vmatprep.subr.mxu0 0.0
      %1692 = vmatpush2.msra.mxu0 0.0
      %1693 = vmatprep.mubr.f32.mxu0 0.0
      %1694 = vmatmul.mubr.f32.gmra.mxu0 %v1627
      %v1695 = vpop.f32.mrf.mxu0
      %v1696 = vadd.f32 0.0, %v1695
      %v1697 = vpop.f32.mrf.mxu0
      %1698 = vdwg.mxu0
      %v1699 = vadd.f32 %v1456, %v1696
      %1700 = vrot.lane.b32.xlu0 %v973, 104
      %v1701 = vpop.permute.xlu0 %1700
      %1702 = vrot.lane.b32.xlu0 %v658, 72
      %v1703 = vpop.permute.xlu0 %1702
      %v1704 = vsel %vm977, %v1701, 0
      %v1706 = vsel %vm977, %v1703, 0
      %1708 = vmatprep.subr.mxu0 0.0
      %1709 = vmatpush1.xpose.msra.mxu0 0.0
      %1710 = vmatprep.subr.mxu0 0.0
      %1711 = vmatpush1.xpose.msra.mxu0 0.0
      %1712 = vmatprep.subr.mxu0 0.0
      %1713 = vmatpush1.xpose.msra.mxu0 0.0
      %1714 = vmatprep.subr.mxu0 0.0
      %1715 = vmatpush1.xpose.msra.mxu0 0.0
      %1716 = vmatprep.subr.mxu0 0.0
      %1717 = vmatpush1.xpose.msra.mxu0 0.0
      %1718 = vmatprep.subr.mxu0 0.0
      %1719 = vmatpush1.xpose.msra.mxu0 0.0
      %1720 = vmatprep.subr.mxu0 0.0
      %1721 = vmatpush1.xpose.msra.mxu0 0.0
      %1722 = vmatprep.subr.mxu0 0.0
      %1723 = vmatpush1.xpose.msra.mxu0 0.0
      %1724 = vmatprep.subr.mxu0 0.0
      %1725 = vmatpush1.xpose.msra.mxu0 0.0
      %1726 = vmatprep.subr.mxu0 0.0
      %1727 = vmatpush1.xpose.msra.mxu0 0.0
      %1728 = vmatprep.subr.mxu0 0.0
      %1729 = vmatpush1.xpose.msra.mxu0 0.0
      %1730 = vmatprep.subr.mxu0 0.0
      %1731 = vmatpush1.xpose.msra.mxu0 0.0
      %1732 = vmatprep.subr.mxu0 0.0
      %1733 = vmatpush1.xpose.msra.mxu0 0.0
      %1734 = vmatprep.subr.mxu0 0.0
      %1735 = vmatpush1.xpose.msra.mxu0 0.0
      %1736 = vmatprep.subr.mxu0 0.0
      %1737 = vmatpush1.xpose.msra.mxu0 0.0
      %1738 = vmatprep.subr.mxu0 0.0
      %1739 = vmatpush1.xpose.msra.mxu0 %v1706
      %1740 = vmatprep.subr.mxu0 0.0
      %1741 = vmatpush2.xpose.msra.mxu0 0.0
      %1742 = vmatprep.subr.mxu0 0.0
      %1743 = vmatpush2.xpose.msra.mxu0 0.0
      %1744 = vmatprep.subr.mxu0 0.0
      %1745 = vmatpush2.xpose.msra.mxu0 0.0
      %1746 = vmatprep.subr.mxu0 0.0
      %1747 = vmatpush2.xpose.msra.mxu0 0.0
      %1748 = vmatprep.subr.mxu0 0.0
      %1749 = vmatpush2.xpose.msra.mxu0 0.0
      %1750 = vmatprep.subr.mxu0 0.0
      %1751 = vmatpush2.xpose.msra.mxu0 0.0
      %1752 = vmatprep.subr.mxu0 0.0
      %1753 = vmatpush2.xpose.msra.mxu0 0.0
      %1754 = vmatprep.subr.mxu0 0.0
      %1755 = vmatpush2.xpose.msra.mxu0 0.0
      %1756 = vmatprep.subr.mxu0 0.0
      %1757 = vmatpush2.xpose.msra.mxu0 0.0
      %1758 = vmatprep.subr.mxu0 0.0
      %1759 = vmatpush2.xpose.msra.mxu0 0.0
      %1760 = vmatprep.subr.mxu0 0.0
      %1761 = vmatpush2.xpose.msra.mxu0 0.0
      %1762 = vmatprep.subr.mxu0 0.0
      %1763 = vmatpush2.xpose.msra.mxu0 0.0
      %1764 = vmatprep.subr.mxu0 0.0
      %1765 = vmatpush2.xpose.msra.mxu0 0.0
      %1766 = vmatprep.subr.mxu0 0.0
      %1767 = vmatpush2.xpose.msra.mxu0 0.0
      %1768 = vmatprep.subr.mxu0 0.0
      %1769 = vmatpush2.xpose.msra.mxu0 0.0
      %1770 = vmatprep.subr.mxu0 0.0
      %1771 = vmatpush2.xpose.msra.mxu0 0.0
      %1772 = vmatprep.mubr.f32.mxu0 0.0
      %1773 = vmatmul.mubr.f32.gmra.mxu0 %v1704
      %v1774 = vpop.f32.mrf.mxu0
      %v1775 = vadd.f32 0.0, %v1774
      %v1776 = vpop.f32.mrf.mxu0
      %1777 = vdwg.mxu0
      %v1778 = vsel %vm1053, %v1775, -inf
      %1779 = vmax.xlane.f32.xlu0 %v1778
      %v1780 = vpop.xlane.xlu0 %1779
      %v1781 = vsub.f32 %v1775, %v1780
      %v1782 = vmul.f32 %v1781, 1.442695
      %v1783 = vpow.pop %v1782
      %v1784 = vsel %vm1053, %v1783, 0.0
      %1785 = vadd.xlane.f32.xlu0 %v1784
      %v1786 = vpop.xlane.xlu0 %1785
      %v1787 = vrcp.pop %v1786
      %v1788 = vmul.f32 %v1783, %v1787
      %1789 = vrot.lane.b32.xlu0 %v972, 40
      %v1790 = vpop.permute.xlu0 %1789
      %v1792 = vsel %vm1068, %v1788, 0
      %v1794 = vsel %vm1072, %v1790, 0
      %1796 = vmatprep.subr.mxu0 0.0
      %1797 = vmatpush1.msra.mxu0 0.0
      %1798 = vmatprep.subr.mxu0 0.0
      %1799 = vmatpush1.msra.mxu0 0.0
      %1800 = vmatprep.subr.mxu0 0.0
      %1801 = vmatpush1.msra.mxu0 0.0
      %1802 = vmatprep.subr.mxu0 0.0
      %1803 = vmatpush1.msra.mxu0 0.0
      %1804 = vmatprep.subr.mxu0 0.0
      %1805 = vmatpush1.msra.mxu0 0.0
      %1806 = vmatprep.subr.mxu0 0.0
      %1807 = vmatpush1.msra.mxu0 0.0
      %1808 = vmatprep.subr.mxu0 0.0
      %1809 = vmatpush1.msra.mxu0 0.0
      %1810 = vmatprep.subr.mxu0 0.0
      %1811 = vmatpush1.msra.mxu0 0.0
      %1812 = vmatprep.subr.mxu0 0.0
      %1813 = vmatpush1.msra.mxu0 0.0
      %1814 = vmatprep.subr.mxu0 0.0
      %1815 = vmatpush1.msra.mxu0 0.0
      %1816 = vmatprep.subr.mxu0 0.0
      %1817 = vmatpush1.msra.mxu0 0.0
      %1818 = vmatprep.subr.mxu0 0.0
      %1819 = vmatpush1.msra.mxu0 0.0
      %1820 = vmatprep.subr.mxu0 0.0
      %1821 = vmatpush1.msra.mxu0 0.0
      %1822 = vmatprep.subr.mxu0 0.0
      %1823 = vmatpush1.msra.mxu0 0.0
      %1824 = vmatprep.subr.mxu0 0.0
      %1825 = vmatpush1.msra.mxu0 0.0
      %1826 = vmatprep.subr.mxu0 0.0
      %1827 = vmatpush1.msra.mxu0 %v1794
      %1828 = vmatprep.subr.mxu0 0.0
      %1829 = vmatpush2.msra.mxu0 0.0
      %1830 = vmatprep.subr.mxu0 0.0
      %1831 = vmatpush2.msra.mxu0 0.0
      %1832 = vmatprep.subr.mxu0 0.0
      %1833 = vmatpush2.msra.mxu0 0.0
      %1834 = vmatprep.subr.mxu0 0.0
      %1835 = vmatpush2.msra.mxu0 0.0
      %1836 = vmatprep.subr.mxu0 0.0
      %1837 = vmatpush2.msra.mxu0 0.0
      %1838 = vmatprep.subr.mxu0 0.0
      %1839 = vmatpush2.msra.mxu0 0.0
      %1840 = vmatprep.subr.mxu0 0.0
      %1841 = vmatpush2.msra.mxu0 0.0
      %1842 = vmatprep.subr.mxu0 0.0
      %1843 = vmatpush2.msra.mxu0 0.0
      %1844 = vmatprep.subr.mxu0 0.0
      %1845 = vmatpush2.msra.mxu0 0.0
      %1846 = vmatprep.subr.mxu0 0.0
      %1847 = vmatpush2.msra.mxu0 0.0
      %1848 = vmatprep.subr.mxu0 0.0
      %1849 = vmatpush2.msra.mxu0 0.0
      %1850 = vmatprep.subr.mxu0 0.0
      %1851 = vmatpush2.msra.mxu0 0.0
      %1852 = vmatprep.subr.mxu0 0.0
      %1853 = vmatpush2.msra.mxu0 0.0
      %1854 = vmatprep.subr.mxu0 0.0
      %1855 = vmatpush2.msra.mxu0 0.0
      %1856 = vmatprep.subr.mxu0 0.0
      %1857 = vmatpush2.msra.mxu0 0.0
      %1858 = vmatprep.subr.mxu0 0.0
      %1859 = vmatpush2.msra.mxu0 0.0
      %1860 = vmatprep.mubr.f32.mxu0 0.0
      %1861 = vmatmul.mubr.f32.gmra.mxu0 %v1792
      %v1862 = vpop.f32.mrf.mxu0
      %v1863 = vadd.f32 0.0, %v1862
      %v1864 = vpop.f32.mrf.mxu0
      %1865 = vdwg.mxu0
      %v1866 = vld [vmem:[%s9 + $0x18] sm:$0xff]
      %v1868 = vsel %vm977, %v1863, 0
      %1870 = vmatprep.subr.mxu0 0.0
      %1871 = vmatpush1.msra.mxu0 0.0
      %1872 = vmatprep.subr.mxu0 0.0
      %1873 = vmatpush1.msra.mxu0 0.0
      %1874 = vmatprep.subr.mxu0 0.0
      %1875 = vmatpush1.msra.mxu0 0.0
      %1876 = vmatprep.subr.mxu0 0.0
      %1877 = vmatpush1.msra.mxu0 0.0
      %1878 = vmatprep.subr.mxu0 0.0
      %1879 = vmatpush1.msra.mxu0 0.0
      %1880 = vmatprep.subr.mxu0 0.0
      %1881 = vmatpush1.msra.mxu0 0.0
      %1882 = vmatprep.subr.mxu0 0.0
      %1883 = vmatpush1.msra.mxu0 0.0
      %1884 = vmatprep.subr.mxu0 0.0
      %1885 = vmatpush1.msra.mxu0 0.0
      %1886 = vmatprep.subr.mxu0 0.0
      %1887 = vmatpush1.msra.mxu0 0.0
      %1888 = vmatprep.subr.mxu0 0.0
      %1889 = vmatpush1.msra.mxu0 0.0
      %1890 = vmatprep.subr.mxu0 0.0
      %1891 = vmatpush1.msra.mxu0 0.0
      %1892 = vmatprep.subr.mxu0 0.0
      %1893 = vmatpush1.msra.mxu0 0.0
      %1894 = vmatprep.subr.mxu0 0.0
      %1895 = vmatpush1.msra.mxu0 0.0
      %1896 = vmatprep.subr.mxu0 0.0
      %1897 = vmatpush1.msra.mxu0 0.0
      %1898 = vmatprep.subr.mxu0 0.0
      %1899 = vmatpush1.msra.mxu0 0.0
      %1900 = vmatprep.subr.mxu0 0.0
      %1901 = vmatpush1.msra.mxu0 %v1866
      %1902 = vmatprep.subr.mxu0 0.0
      %1903 = vmatpush2.msra.mxu0 0.0
      %1904 = vmatprep.subr.mxu0 0.0
      %1905 = vmatpush2.msra.mxu0 0.0
      %1906 = vmatprep.subr.mxu0 0.0
      %1907 = vmatpush2.msra.mxu0 0.0
      %1908 = vmatprep.subr.mxu0 0.0
      %1909 = vmatpush2.msra.mxu0 0.0
      %1910 = vmatprep.subr.mxu0 0.0
      %1911 = vmatpush2.msra.mxu0 0.0
      %1912 = vmatprep.subr.mxu0 0.0
      %1913 = vmatpush2.msra.mxu0 0.0
      %1914 = vmatprep.subr.mxu0 0.0
      %1915 = vmatpush2.msra.mxu0 0.0
      %1916 = vmatprep.subr.mxu0 0.0
      %1917 = vmatpush2.msra.mxu0 0.0
      %1918 = vmatprep.subr.mxu0 0.0
      %1919 = vmatpush2.msra.mxu0 0.0
      %1920 = vmatprep.subr.mxu0 0.0
      %1921 = vmatpush2.msra.mxu0 0.0
      %1922 = vmatprep.subr.mxu0 0.0
      %1923 = vmatpush2.msra.mxu0 0.0
      %1924 = vmatprep.subr.mxu0 0.0
      %1925 = vmatpush2.msra.mxu0 0.0
      %1926 = vmatprep.subr.mxu0 0.0
      %1927 = vmatpush2.msra.mxu0 0.0
      %1928 = vmatprep.subr.mxu0 0.0
      %1929 = vmatpush2.msra.mxu0 0.0
      %1930 = vmatprep.subr.mxu0 0.0
      %1931 = vmatpush2.msra.mxu0 0.0
      %1932 = vmatprep.subr.mxu0 0.0
      %1933 = vmatpush2.msra.mxu0 0.0
      %1934 = vmatprep.mubr.f32.mxu0 0.0
      %1935 = vmatmul.mubr.f32.gmra.mxu0 %v1868
      %v1936 = vpop.f32.mrf.mxu0
      %v1937 = vadd.f32 0.0, %v1936
      %v1938 = vpop.f32.mrf.mxu0
      %1939 = vdwg.mxu0
      %v1940 = vadd.f32 %v1699, %v1937
      %v1941 = vadd.f32 %v544, %v1940
      %v1942 = vld [vmem:[%s10] sm:$0x1]
      %v1944 = vlaneseq
      %v1945 = vshrl.u32 %v1944, 7
      %v1946 = vsub.s32 0, %v1945
      %v1947 = vrot.slane %v1942, %v1946
      %v1949 = vadd.f32 %v1941, %v1947
      %v1950 = vld [vmem:[%s11] sm:$0x1]
      %v1951 = vld [vmem:[%s12] sm:$0x1]
      %v1952 = vsel %vm547, %v1949, 0.0
      %1953 = vadd.xlane.f32.xlu0 %v1952
      %v1954 = vpop.xlane.xlu0 %1953
      %v1955 = vmul.f32 %v1954, %v551
      %v1956 = vsub.f32 %v1949, %v1955
      %v1957 = vmul.f32 %v1956, %v1956
      %v1958 = vsel %vm547, %v1957, 0.0
      %1959 = vadd.xlane.f32.xlu0 %v1958
      %v1960 = vpop.xlane.xlu0 %1959
      %v1961 = vmul.f32 %v1960, %v551
      %v1962 = vadd.f32 %v1961, 1e-05
      %v1963 = vrsqrt.pop %v1962
      %v1964 = vmul.f32 %v1956, %v1963
      %v1966 = vlaneseq
      %v1967 = vshrl.u32 %v1966, 7
      %v1968 = vsub.s32 0, %v1967
      %v1969 = vrot.slane %v1950, %v1968
      %v1971 = vmul.f32 %v1964, %v1969
      %v1973 = vlaneseq
      %v1974 = vshrl.u32 %v1973, 7
      %v1975 = vsub.s32 0, %v1974
      %v1976 = vrot.slane %v1951, %v1975
      %v1978 = vadd.f32 %v1971, %v1976
      %v1979 = vld [vmem:[%s13] sm:$0xff]
      %v1980 = vld [vmem:[%s13 + $0x8] sm:$0xff]
      %v1981 = vld [vmem:[%s13 + $0x10] sm:$0xff]
      %v1982 = vld [vmem:[%s13 + $0x18] sm:$0xff]
      %v1983 = vld [vmem:[%s14] sm:$0x1]
      %v1985 = vlaneseq
      %v1986 = vshrl.u32 %v1985, 7
      %v1987 = vsub.s32 0, %v1986
      %v1988 = vrot.slane %v1983, %v1987
      %v1991 = vsel %vm587, %v1978, 0
      %1993 = vmatprep.subr.mxu0 0.0
      %1994 = vmatpush1.msra.mxu0 0.0
      %1995 = vmatprep.subr.mxu0 0.0
      %1996 = vmatpush1.msra.mxu0 0.0
      %1997 = vmatprep.subr.mxu0 0.0
      %1998 = vmatpush1.msra.mxu0 0.0
      %1999 = vmatprep.subr.mxu0 0.0
      %2000 = vmatpush1.msra.mxu0 0.0
      %2001 = vmatprep.subr.mxu0 0.0
      %2002 = vmatpush1.msra.mxu0 0.0
      %2003 = vmatprep.subr.mxu0 0.0
      %2004 = vmatpush1.msra.mxu0 0.0
      %2005 = vmatprep.subr.mxu0 0.0
      %2006 = vmatpush1.msra.mxu0 0.0
      %2007 = vmatprep.subr.mxu0 0.0
      %2008 = vmatpush1.msra.mxu0 0.0
      %2009 = vmatprep.subr.mxu0 0.0
      %2010 = vmatpush1.msra.mxu0 0.0
      %2011 = vmatprep.subr.mxu0 0.0
      %2012 = vmatpush1.msra.mxu0 0.0
      %2013 = vmatprep.subr.mxu0 0.0
      %2014 = vmatpush1.msra.mxu0 0.0
      %2015 = vmatprep.subr.mxu0 0.0
      %2016 = vmatpush1.msra.mxu0 0.0
      %2017 = vmatprep.subr.mxu0 0.0
      %2018 = vmatpush1.msra.mxu0 %v1982
      %2019 = vmatprep.subr.mxu0 0.0
      %2020 = vmatpush1.msra.mxu0 %v1981
      %2021 = vmatprep.subr.mxu0 0.0
      %2022 = vmatpush1.msra.mxu0 %v1980
      %2023 = vmatprep.subr.mxu0 0.0
      %2024 = vmatpush1.msra.mxu0 %v1979
      %2025 = vmatprep.subr.mxu0 0.0
      %2026 = vmatpush2.msra.mxu0 0.0
      %2027 = vmatprep.subr.mxu0 0.0
      %2028 = vmatpush2.msra.mxu0 0.0
      %2029 = vmatprep.subr.mxu0 0.0
      %2030 = vmatpush2.msra.mxu0 0.0
      %2031 = vmatprep.subr.mxu0 0.0
      %2032 = vmatpush2.msra.mxu0 0.0
      %2033 = vmatprep.subr.mxu0 0.0
      %2034 = vmatpush2.msra.mxu0 0.0
      %2035 = vmatprep.subr.mxu0 0.0
      %2036 = vmatpush2.msra.mxu0 0.0
      %2037 = vmatprep.subr.mxu0 0.0
      %2038 = vmatpush2.msra.mxu0 0.0
      %2039 = vmatprep.subr.mxu0 0.0
      %2040 = vmatpush2.msra.mxu0 0.0
      %2041 = vmatprep.subr.mxu0 0.0
      %2042 = vmatpush2.msra.mxu0 0.0
      %2043 = vmatprep.subr.mxu0 0.0
      %2044 = vmatpush2.msra.mxu0 0.0
      %2045 = vmatprep.subr.mxu0 0.0
      %2046 = vmatpush2.msra.mxu0 0.0
      %2047 = vmatprep.subr.mxu0 0.0
      %2048 = vmatpush2.msra.mxu0 0.0
      %2049 = vmatprep.subr.mxu0 0.0
      %2050 = vmatpush2.msra.mxu0 0.0
      %2051 = vmatprep.subr.mxu0 0.0
      %2052 = vmatpush2.msra.mxu0 0.0
      %2053 = vmatprep.subr.mxu0 0.0
      %2054 = vmatpush2.msra.mxu0 0.0
      %2055 = vmatprep.subr.mxu0 0.0
      %2056 = vmatpush2.msra.mxu0 0.0
      %2057 = vmatprep.mubr.f32.mxu0 0.0
      %2058 = vmatmul.mubr.f32.gmra.mxu0 %v1991
      %v2059 = vpop.f32.mrf.mxu0
      %v2060 = vadd.f32 %v1988, %v2059
      %v2061 = vpop.f32.mrf.mxu0
      %2062 = vdwg.mxu0
      %v2063 = vmul.f32 %v2060, 1.702
      %v2064 = vxor.u32 %v2063, 2147483648
      %v2065 = vmul.f32 %v2064, 1.442695
      %v2066 = vpow.pop %v2065
      %v2067 = vadd.f32 %v2066, 1.0
      %v2068 = vrcp.pop %v2067
      %v2069 = vmul.f32 1.0, %v2068
      %v2070 = vmul.f32 %v2060, %v2069
      %v2071 = vld [vmem:[%s15] sm:$0xff]
      %v2072 = vld [vmem:[%s15 + $0x8] sm:$0xff]
      %v2073 = vld [vmem:[%s15 + $0x10] sm:$0xff]
      %v2074 = vld [vmem:[%s15 + $0x18] sm:$0xff]
      %v2075 = vld [vmem:[%s15 + $0x20] sm:$0xff]
      %v2076 = vld [vmem:[%s15 + $0x28] sm:$0xff]
      %v2077 = vld [vmem:[%s15 + $0x30] sm:$0xff]
      %v2078 = vld [vmem:[%s15 + $0x38] sm:$0xff]
      %vm2079 = vcmask 523264
      %v2081 = vsel %vm2079, %v2070, 0
      %2083 = vmatprep.subr.mxu0 0.0
      %2084 = vmatpush1.msra.mxu0 0.0
      %2085 = vmatprep.subr.mxu0 0.0
      %2086 = vmatpush1.msra.mxu0 0.0
      %2087 = vmatprep.subr.mxu0 0.0
      %2088 = vmatpush1.msra.mxu0 0.0
      %2089 = vmatprep.subr.mxu0 0.0
      %2090 = vmatpush1.msra.mxu0 0.0
      %2091 = vmatprep.subr.mxu0 0.0
      %2092 = vmatpush1.msra.mxu0 0.0
      %2093 = vmatprep.subr.mxu0 0.0
      %2094 = vmatpush1.msra.mxu0 0.0
      %2095 = vmatprep.subr.mxu0 0.0
      %2096 = vmatpush1.msra.mxu0 0.0
      %2097 = vmatprep.subr.mxu0 0.0
      %2098 = vmatpush1.msra.mxu0 0.0
      %2099 = vmatprep.subr.mxu0 0.0
      %2100 = vmatpush1.msra.mxu0 %v2078
      %2101 = vmatprep.subr.mxu0 0.0
      %2102 = vmatpush1.msra.mxu0 %v2077
      %2103 = vmatprep.subr.mxu0 0.0
      %2104 = vmatpush1.msra.mxu0 %v2076
      %2105 = vmatprep.subr.mxu0 0.0
      %2106 = vmatpush1.msra.mxu0 %v2075
      %2107 = vmatprep.subr.mxu0 0.0
      %2108 = vmatpush1.msra.mxu0 %v2074
      %2109 = vmatprep.subr.mxu0 0.0
      %2110 = vmatpush1.msra.mxu0 %v2073
      %2111 = vmatprep.subr.mxu0 0.0
      %2112 = vmatpush1.msra.mxu0 %v2072
      %2113 = vmatprep.subr.mxu0 0.0
      %2114 = vmatpush1.msra.mxu0 %v2071
      %2115 = vmatprep.subr.mxu0 0.0
      %2116 = vmatpush2.msra.mxu0 0.0
      %2117 = vmatprep.subr.mxu0 0.0
      %2118 = vmatpush2.msra.mxu0 0.0
      %2119 = vmatprep.subr.mxu0 0.0
      %2120 = vmatpush2.msra.mxu0 0.0
      %2121 = vmatprep.subr.mxu0 0.0
      %2122 = vmatpush2.msra.mxu0 0.0
      %2123 = vmatprep.subr.mxu0 0.0
      %2124 = vmatpush2.msra.mxu0 0.0
      %2125 = vmatprep.subr.mxu0 0.0
      %2126 = vmatpush2.msra.mxu0 0.0
      %2127 = vmatprep.subr.mxu0 0.0
      %2128 = vmatpush2.msra.mxu0 0.0
      %2129 = vmatprep.subr.mxu0 0.0
      %2130 = vmatpush2.msra.mxu0 0.0
      %2131 = vmatprep.subr.mxu0 0.0
      %2132 = vmatpush2.msra.mxu0 0.0
      %2133 = vmatprep.subr.mxu0 0.0
      %2134 = vmatpush2.msra.mxu0 0.0
      %2135 = vmatprep.subr.mxu0 0.0
      %2136 = vmatpush2.msra.mxu0 0.0
      %2137 = vmatprep.subr.mxu0 0.0
      %2138 = vmatpush2.msra.mxu0 0.0
      %2139 = vmatprep.subr.mxu0 0.0
      %2140 = vmatpush2.msra.mxu0 0.0
      %2141 = vmatprep.subr.mxu0 0.0
      %2142 = vmatpush2.msra.mxu0 0.0
      %2143 = vmatprep.subr.mxu0 0.0
      %2144 = vmatpush2.msra.mxu0 0.0
      %2145 = vmatprep.subr.mxu0 0.0
      %2146 = vmatpush2.msra.mxu0 0.0
      %2147 = vmatprep.mubr.f32.mxu0 0.0
      %2148 = vmatmul.mubr.f32.gmra.mxu0 %v2081
      %v2149 = vpop.f32.mrf.mxu0
      %v2150 = vadd.f32 0.0, %v2149
      %v2151 = vpop.f32.mrf.mxu0
      %2152 = vdwg.mxu0
      %v2153 = vadd.f32 %v1949, %v2150
      %v2154 = vld [vmem:[%s16] sm:$0x1]
      %v2156 = vlaneseq
      %v2157 = vshrl.u32 %v2156, 7
      %v2158 = vsub.s32 0, %v2157
      %v2159 = vrot.slane %v2154, %v2158
      %v2161 = vadd.f32 %v2153, %v2159
      %2162 = vst.msk [vmem:[%s543] sm:$0x1f] %vm547, %v2161
      %p2163 = scmp.lt.s32.totalorder %s28, 1
      %s2164 = scalar_select %p2163, %s28, 1
      %s2165 = smul.addr %s2164, 8
      %s2166 = scalar_lea.vmem %s17, %s2165
      // Predicated region
      $region89: #{_lambda_.5} parent=87 // pred_check
        %p2167 = pneg %p408
      $region90: #{_lambda_.5} parent=87 // pred_check_branch
        %2169 = sbr.rel (%p2167) target = $region92
      $region91: #{_lambda_.5} parent=87 // pred_region
        _
      $region92: #{_lambda_.5} parent=87 // pred_fallthru
        _
    $region88: #{_lambda_.5} parent=5 // pred_fallthru
      _
    %p2170 = scmp.le.s32.totalorder 2, %s23
    // Predicated region
    $region93: #{_lambda_.5} parent=5 // pred_check
      %p2171 = pneg %p2170
    $region94: #{_lambda_.5} parent=5 // pred_check_branch
      %2173 = sbr.rel (%p2171) target = $region96
    $region95: #{_lambda_.5} parent=5 // pred_region
      %s2174 = ssub.s32 %s23, 2
      // Predicated region
      $region97: #{_lambda_.5} parent=95 // pred_check
        %p2175 = pneg %p414
      $region98: #{_lambda_.5} parent=95 // pred_check_branch
        %2177 = sbr.rel (%p2175) target = $region100
      $region99: #{_lambda_.5} parent=95 // pred_region
        %p2178 = scmp.lt.s32.totalorder %s29, 1
        %s2179 = scalar_select %p2178, %s29, 1
        %s2180 = smul.addr %s2179, 8
        %s2181 = scalar_lea.vmem %s17, %s2180
      $region100: #{_lambda_.5} parent=95 // pred_fallthru
        _
    $region96: #{_lambda_.5} parent=5 // pred_fallthru
      _
  $region6: #{_lambda_.5} parent=0 // loop_footer
    %s27 = sadd.s32 1, %s23
  $region7: #{_lambda_.5} parent=0 // loop_footer_branch
    %22 = sbr.rel target = $region3
  $region8: #{_lambda_.5} parent=0 // loop_exit
    _

</llo_original>
